<compile_context>
chip_gen: v7x
topology: tpu7x:2x2x1
jax: 0.10.0
libtpu: 0.0.40
codegen_flags: <defaults>
</compile_context>

<pallas_src>
import jax
import jax.numpy as jnp
from jax.experimental import pallas as pl
from jax.experimental.pallas import tpu as pltpu

NUM_ITER = 10
EPSILON = 1e-10


# ---------------------------------------------------------------------------
# Kernels
# ---------------------------------------------------------------------------

def _coil_expand_kernel(p_re, p_im, c_re, c_im, y_re, y_im):
    """y[b, c] = csm[b, c] * p[b]  (complex multiply, broadcast over coils)."""
    pr = p_re[...][:, None, :, :]            # (1, 1, H, W)
    pi = p_im[...][:, None, :, :]
    cr = c_re[...]                           # (1, C, H, W)
    ci = c_im[...]
    y_re[...] = cr * pr - ci * pi
    y_im[...] = cr * pi + ci * pr


def _apply_mask_kernel(k_re, k_im, m_ref, o_re, o_im):
    """k-space sampling: k[b, c] *= mask[b]  (real mask, broadcast over coils)."""
    m = m_ref[...][:, None, :, :]            # (1, 1, H, W)
    o_re[...] = k_re[...] * m
    o_im[...] = k_im[...] * m


def _rtr_kernel(r_re, r_im, o_ref):
    """rTr[b] = sum_{h,w} |r[b]|^2."""
    rr = r_re[...]
    ri = r_im[...]
    o_ref[...] = jnp.sum(rr * rr + ri * ri, keepdims=True)   # (1, 1, 1)


def _cg_update_kernel(c_re, c_im, g_re, g_im, p_re, p_im,
                      x_re, x_im, r_re, r_im, rtr_ref, lam_smem,
                      xo_re, xo_im, ro_re, ro_im, po_re, po_im, rtro):
    """Fused CG step (everything except the FFTs), one HBM pass per batch:
         Ap    = sum_c conj(csm) * ifft_img + lam * p
         alpha = rTr / Re<p, Ap>
         x'    = x + alpha p ;  r' = r - alpha Ap
         rTr'  = |r'|^2      ;  beta = rTr'/rTr ;  p' = r' + beta p
    """
    lam = lam_smem[0]                        # scalar from SMEM
    rtr = rtr_ref[...]                       # (1, 1, 1)

    cr = c_re[...]; ci = c_im[...]           # (1, C, H, W)
    gr = g_re[...]; gi = g_im[...]           # (1, C, H, W)
    pr = p_re[...]; pi = p_im[...]           # (1, H, W)

    # conj(csm) * img, combined over coils, plus lam * p
    ap_r = jnp.sum(cr * gr + ci * gi, axis=1) + lam * pr
    ap_i = jnp.sum(cr * gi - ci * gr, axis=1) + lam * pi

    # alpha = rTr / Re(<p, Ap>)
    pap = jnp.sum(pr * ap_r + pi * ap_i, keepdims=True)      # (1, 1, 1)
    alpha = rtr / pap

    x_new_r = x_re[...] + alpha * pr
    x_new_i = x_im[...] + alpha * pi
    r_new_r = r_re[...] - alpha * ap_r
    r_new_i = r_im[...] - alpha * ap_i

    rtr_new = jnp.sum(r_new_r * r_new_r + r_new_i * r_new_i, keepdims=True)
    beta = rtr_new / rtr

    xo_re[...] = x_new_r
    xo_im[...] = x_new_i
    ro_re[...] = r_new_r
    ro_im[...] = r_new_i
    po_re[...] = r_new_r + beta * pr
    po_im[...] = r_new_i + beta * pi
    rtro[...] = rtr_new


# ---------------------------------------------------------------------------
# pallas_call wrappers
# ---------------------------------------------------------------------------

_PARALLEL_B = pltpu.CompilerParams(dimension_semantics=("parallel",))


def _specs(B, C, H, W):
    coil = pl.BlockSpec((1, C, H, W), lambda b: (b, 0, 0, 0))
    img = pl.BlockSpec((1, H, W), lambda b: (b, 0, 0))
    scal = pl.BlockSpec((1, 1, 1), lambda b: (b, 0, 0))
    smem = pl.BlockSpec(memory_space=pltpu.MemorySpace.SMEM)
    return coil, img, scal, smem


def _coil_expand(p_re, p_im, c_re, c_im):
    B, C, H, W = c_re.shape
    coil, img, _, _ = _specs(B, C, H, W)
    return pl.pallas_call(
        _coil_expand_kernel,
        out_shape=(jax.ShapeDtypeStruct((B, C, H, W), jnp.float32),) * 2,
        grid_spec=pltpu.PrefetchScalarGridSpec(
            num_scalar_prefetch=0, grid=(B,),
            in_specs=[img, img, coil, coil],
            out_specs=(coil, coil)),
        compiler_params=_PARALLEL_B,
    )(p_re, p_im, c_re, c_im)


def _apply_mask(k_re, k_im, mask):
    B, C, H, W = k_re.shape
    coil, img, _, _ = _specs(B, C, H, W)
    return pl.pallas_call(
        _apply_mask_kernel,
        out_shape=(jax.ShapeDtypeStruct((B, C, H, W), jnp.float32),) * 2,
        grid_spec=pltpu.PrefetchScalarGridSpec(
            num_scalar_prefetch=0, grid=(B,),
            in_specs=[coil, coil, img],
            out_specs=(coil, coil)),
        compiler_params=_PARALLEL_B,
    )(k_re, k_im, mask)


def _rtr_init(r_re, r_im):
    B, H, W = r_re.shape
    img = pl.BlockSpec((1, H, W), lambda b: (b, 0, 0))
    scal = pl.BlockSpec((1, 1, 1), lambda b: (b, 0, 0))
    return pl.pallas_call(
        _rtr_kernel,
        out_shape=jax.ShapeDtypeStruct((B, 1, 1), jnp.float32),
        grid_spec=pltpu.PrefetchScalarGridSpec(
            num_scalar_prefetch=0, grid=(B,),
            in_specs=[img, img],
            out_specs=scal),
        compiler_params=_PARALLEL_B,
    )(r_re, r_im)


def _cg_update(c_re, c_im, g_re, g_im, p_re, p_im,
               x_re, x_im, r_re, r_im, rtr, lam_arr):
    B, C, H, W = c_re.shape
    coil, img, scal, smem = _specs(B, C, H, W)
    img_out = jax.ShapeDtypeStruct((B, H, W), jnp.float32)
    return pl.pallas_call(
        _cg_update_kernel,
        out_shape=(img_out,) * 6 + (jax.ShapeDtypeStruct((B, 1, 1), jnp.float32),),
        grid_spec=pltpu.PrefetchScalarGridSpec(
            num_scalar_prefetch=0, grid=(B,),
            in_specs=[coil, coil, coil, coil,
                      img, img, img, img, img, img,
                      scal, smem],
            out_specs=(img,) * 6 + (scal,)),
        compiler_params=_PARALLEL_B,
    )(c_re, c_im, g_re, g_im, p_re, p_im, x_re, x_im, r_re, r_im, rtr, lam_arr)


# ---------------------------------------------------------------------------
# Forward pass
# ---------------------------------------------------------------------------

@jax.jit
def conjugated_grad_forward(rhs, csm, mask, lam):
    """rhs: (B,2,H,W) f32; csm: (B,C,H,W) complex64; mask: (B,H,W) f32; lam: scalar.
    Returns the CG solution x as complex64 (B, H, W)."""
    rhs = rhs.astype(jnp.float32)
    r_re, r_im = rhs[:, 0], rhs[:, 1]        # view_as_complex(permute(0,2,3,1))
    c_re = jnp.real(csm).astype(jnp.float32)
    c_im = jnp.imag(csm).astype(jnp.float32)
    mask = mask.astype(jnp.float32)
    lam_arr = jnp.asarray(lam, jnp.float32).reshape(1)

    B, H, W = r_re.shape
    x_re = jnp.zeros((B, H, W), jnp.float32)
    x_im = jnp.zeros((B, H, W), jnp.float32)
    p_re, p_im = r_re, r_im
    rtr = _rtr_init(r_re, r_im)              # (B, 1, 1)
    active = jnp.asarray(True)

    for _ in range(NUM_ITER):
        # AtA(p): coil expand -> FFT2 -> k-space mask -> IFFT2 (combine fused below).
        y_re, y_im = _coil_expand(p_re, p_im, c_re, c_im)
        ksp = jnp.fft.fft2(jax.lax.complex(y_re, y_im), norm="ortho")
        km_re, km_im = _apply_mask(jnp.real(ksp), jnp.imag(ksp), mask)
        gimg = jnp.fft.ifft2(jax.lax.complex(km_re, km_im), norm="ortho")
        g_re = jnp.real(gimg)
        g_im = jnp.imag(gimg)

        (x_nr, x_ni, r_nr, r_ni, p_nr, p_ni, rtr_new) = _cg_update(
            c_re, c_im, g_re, g_im, p_re, p_im,
            x_re, x_im, r_re, r_im, rtr, lam_arr)

        # Emulate the data-dependent `break`: x/r are updated before the check
        # (as in the torch loop); p/rTr and all later iterations are frozen once
        # max(rTr_new) < epsilon.
        x_re = jnp.where(active, x_nr, x_re)
        x_im = jnp.where(active, x_ni, x_im)
        r_re = jnp.where(active, r_nr, r_re)
        r_im = jnp.where(active, r_ni, r_im)
        still = jnp.logical_and(active, jnp.max(rtr_new) >= EPSILON)
        p_re = jnp.where(still, p_nr, p_re)
        p_im = jnp.where(still, p_ni, p_im)
        rtr = jnp.where(still, rtr_new, rtr)
        active = still

    return jax.lax.complex(x_re, x_im)


# ---------------------------------------------------------------------------
# Pure-JAX reference (same AtA convention) and self-test
# ---------------------------------------------------------------------------

def _ref_forward(rhs, csm, mask, lam):
    r = rhs[:, 0] + 1j * rhs[:, 1]
    x = jnp.zeros_like(r)
    p = r
    rtr = jnp.sum(jnp.conj(r) * r, axis=(-2, -1)).real
    for _ in range(NUM_ITER):
        coil = csm * p[:, None]
        ksp = jnp.fft.fft2(coil, norm="ortho") * mask[:, None]
        img = jnp.fft.ifft2(ksp, norm="ortho")
        Ap = jnp.sum(jnp.conj(csm) * img, axis=1) + lam * p
        alpha = rtr / jnp.sum(jnp.conj(p) * Ap, axis=(-2, -1)).real
        x = x + alpha[:, None, None] * p
        r = r - alpha[:, None, None] * Ap
        rtr_new = jnp.sum(jnp.conj(r) * r, axis=(-2, -1)).real
        if float(jnp.max(rtr_new)) < EPSILON:
            break
        beta = rtr_new / rtr
        rtr = rtr_new
        p = r + beta[:, None, None] * p
    return x


if __name__ == "__main__":
    key = jax.random.PRNGKey(0)
    k1, k2, k3, k4 = jax.random.split(key, 4)

    B, C, H, W = 2, 4, 16, 16
    rhs = jax.random.normal(k1, (B, 2, H, W), dtype=jnp.float32)
    csm = (jax.random.normal(k2, (B, C, H, W), dtype=jnp.float32)
           + 1j * jax.random.normal(k3, (B, C, H, W), dtype=jnp.float32))
    csm = (csm / jnp.sqrt(2.0)).astype(jnp.complex64)
    mask = (jax.random.uniform(k4, (B, H, W)) < 0.4).astype(jnp.float32)
    lam = jnp.float32(0.05)

    out = conjugated_grad_forward(rhs, csm, mask, lam)
    out = jax.block_until_ready(out)

    ref = _ref_forward(rhs, csm, mask, lam)
    assert out.shape == (B, H, W)
    assert out.dtype == jnp.complex64
    rel_err = float(jnp.linalg.norm(out - ref) / jnp.linalg.norm(ref))
    assert rel_err < 2e-3, f"mismatch vs reference: rel_err={rel_err}"

    print("KERNEL_OK")
</pallas_src>

<mosaic_0001>
module attributes {stable_mosaic.version = 11 : i64} {
  func.func @_rtr_kernel(%arg0: i32, %arg1: memref<1x16x16xf32, #tpu.memory_space<vmem>>, %arg2: memref<1x16x16xf32, #tpu.memory_space<vmem>>, %arg3: memref<1x1x1xf32, #tpu.memory_space<vmem>>) attributes {dimension_semantics = [#tpu.dimension_semantics<parallel>], iteration_bounds = array<i64: 2>, scalar_prefetch = 0 : i64, scratch_operands = 0 : i64, tpu.core_type = #tpu.core_type<tc>, window_params = [{transform_indices = @transform_0, window_bounds = array<i64: 1, 16, 16>}, {transform_indices = @transform_1, window_bounds = array<i64: 1, 16, 16>}, {transform_indices = @transform_2, window_bounds = array<i64: 1, 1, 1>}]} {
    %c0 = arith.constant 0 : index
    %c0_0 = arith.constant 0 : index
    %c0_1 = arith.constant 0 : index
    %0 = vector.load %arg1[%c0, %c0_0, %c0_1] : memref<1x16x16xf32, #tpu.memory_space<vmem>>, vector<1x16x16xf32>
    %c0_2 = arith.constant 0 : index
    %c0_3 = arith.constant 0 : index
    %c0_4 = arith.constant 0 : index
    %1 = vector.load %arg2[%c0_2, %c0_3, %c0_4] : memref<1x16x16xf32, #tpu.memory_space<vmem>>, vector<1x16x16xf32>
    %2 = arith.mulf %0, %0 : vector<1x16x16xf32>
    %3 = arith.mulf %1, %1 : vector<1x16x16xf32>
    %4 = arith.addf %2, %3 : vector<1x16x16xf32>
    %5 = vector.shape_cast %4 : vector<1x16x16xf32> to vector<1x1x16x16xf32>
    %cst = arith.constant dense<0.000000e+00> : vector<1xf32>
    %6 = vector.multi_reduction <add>, %5, %cst [1, 2, 3] : vector<1x1x16x16xf32> to vector<1xf32>
    %7 = vector.shape_cast %6 : vector<1xf32> to vector<1x1x1x1xf32>
    %8 = vector.extract %7[0, 0, 0, 0] : f32 from vector<1x1x1x1xf32>
    %9 = vector.broadcast %8 : f32 to vector<1x1x1xf32>
    %c0_5 = arith.constant 0 : index
    %c0_6 = arith.constant 0 : index
    %c0_7 = arith.constant 0 : index
    %10 = vector.load %arg3[%c0_5, %c0_6, %c0_7] : memref<1x1x1xf32, #tpu.memory_space<vmem>>, vector<1x1x1xf32>
    tpu.vector_store %arg3[%c0_5, %c0_6, %c0_7], %9 {strides = array<i32>} : memref<1x1x1xf32, #tpu.memory_space<vmem>>, vector<1x1x1xf32>,
    return
  }
  func.func @transform_0(%arg0: i32) -> (i32, i32, i32) {
    %c0_i32 = arith.constant 0 : i32
    %c0_i32_0 = arith.constant 0 : i32
    %c0_i32_1 = arith.constant 0 : i32
    return %arg0, %c0_i32, %c0_i32_0 : i32, i32, i32
  }
  func.func @transform_1(%arg0: i32) -> (i32, i32, i32) {
    %c0_i32 = arith.constant 0 : i32
    %c0_i32_0 = arith.constant 0 : i32
    %c0_i32_1 = arith.constant 0 : i32
    return %arg0, %c0_i32, %c0_i32_0 : i32, i32, i32
  }
  func.func @transform_2(%arg0: i32) -> (i32, i32, i32) {
    %c0_i32 = arith.constant 0 : i32
    %c0_i32_0 = arith.constant 0 : i32
    %c0_i32_1 = arith.constant 0 : i32
    return %arg0, %c0_i32, %c0_i32_0 : i32, i32, i32
  }
}

module attributes {stable_mosaic.version = 11 : i64} {
  func.func @_coil_expand_kernel(%arg0: i32, %arg1: memref<1x16x16xf32, #tpu.memory_space<vmem>>, %arg2: memref<1x16x16xf32, #tpu.memory_space<vmem>>, %arg3: memref<1x4x16x16xf32, #tpu.memory_space<vmem>>, %arg4: memref<1x4x16x16xf32, #tpu.memory_space<vmem>>, %arg5: memref<1x4x16x16xf32, #tpu.memory_space<vmem>>, %arg6: memref<1x4x16x16xf32, #tpu.memory_space<vmem>>) attributes {dimension_semantics = [#tpu.dimension_semantics<parallel>], iteration_bounds = array<i64: 2>, scalar_prefetch = 0 : i64, scratch_operands = 0 : i64, tpu.core_type = #tpu.core_type<tc>, window_params = [{transform_indices = @transform_0, window_bounds = array<i64: 1, 16, 16>}, {transform_indices = @transform_1, window_bounds = array<i64: 1, 16, 16>}, {transform_indices = @transform_2, window_bounds = array<i64: 1, 4, 16, 16>}, {transform_indices = @transform_3, window_bounds = array<i64: 1, 4, 16, 16>}, {transform_indices = @transform_4, window_bounds = array<i64: 1, 4, 16, 16>}, {transform_indices = @transform_5, window_bounds = array<i64: 1, 4, 16, 16>}]} {
    %c0 = arith.constant 0 : index
    %c0_0 = arith.constant 0 : index
    %c0_1 = arith.constant 0 : index
    %0 = vector.load %arg1[%c0, %c0_0, %c0_1] : memref<1x16x16xf32, #tpu.memory_space<vmem>>, vector<1x16x16xf32>
    %1 = vector.shape_cast %0 : vector<1x16x16xf32> to vector<1x1x16x16xf32>
    %c0_2 = arith.constant 0 : index
    %c0_3 = arith.constant 0 : index
    %c0_4 = arith.constant 0 : index
    %2 = vector.load %arg2[%c0_2, %c0_3, %c0_4] : memref<1x16x16xf32, #tpu.memory_space<vmem>>, vector<1x16x16xf32>
    %3 = vector.shape_cast %2 : vector<1x16x16xf32> to vector<1x1x16x16xf32>
    %c0_5 = arith.constant 0 : index
    %c0_6 = arith.constant 0 : index
    %c0_7 = arith.constant 0 : index
    %c0_8 = arith.constant 0 : index
    %4 = vector.load %arg3[%c0_5, %c0_6, %c0_7, %c0_8] : memref<1x4x16x16xf32, #tpu.memory_space<vmem>>, vector<1x4x16x16xf32>
    %c0_9 = arith.constant 0 : index
    %c0_10 = arith.constant 0 : index
    %c0_11 = arith.constant 0 : index
    %c0_12 = arith.constant 0 : index
    %5 = vector.load %arg4[%c0_9, %c0_10, %c0_11, %c0_12] : memref<1x4x16x16xf32, #tpu.memory_space<vmem>>, vector<1x4x16x16xf32>
    %6 = vector.broadcast %1 : vector<1x1x16x16xf32> to vector<1x4x16x16xf32>
    %7 = arith.mulf %4, %6 : vector<1x4x16x16xf32>
    %8 = vector.broadcast %3 : vector<1x1x16x16xf32> to vector<1x4x16x16xf32>
    %9 = arith.mulf %5, %8 : vector<1x4x16x16xf32>
    %10 = arith.subf %7, %9 : vector<1x4x16x16xf32>
    %c0_13 = arith.constant 0 : index
    %c0_14 = arith.constant 0 : index
    %c0_15 = arith.constant 0 : index
    %c0_16 = arith.constant 0 : index
    %11 = vector.load %arg5[%c0_13, %c0_14, %c0_15, %c0_16] : memref<1x4x16x16xf32, #tpu.memory_space<vmem>>, vector<1x4x16x16xf32>
    tpu.vector_store %arg5[%c0_13, %c0_14, %c0_15, %c0_16], %10 {strides = array<i32>} : memref<1x4x16x16xf32, #tpu.memory_space<vmem>>, vector<1x4x16x16xf32>,
    %12 = vector.broadcast %3 : vector<1x1x16x16xf32> to vector<1x4x16x16xf32>
    %13 = arith.mulf %4, %12 : vector<1x4x16x16xf32>
    %14 = vector.broadcast %1 : vector<1x1x16x16xf32> to vector<1x4x16x16xf32>
    %15 = arith.mulf %5, %14 : vector<1x4x16x16xf32>
    %16 = arith.addf %13, %15 : vector<1x4x16x16xf32>
    %c0_17 = arith.constant 0 : index
    %c0_18 = arith.constant 0 : index
    %c0_19 = arith.constant 0 : index
    %c0_20 = arith.constant 0 : index
    %17 = vector.load %arg6[%c0_17, %c0_18, %c0_19, %c0_20] : memref<1x4x16x16xf32, #tpu.memory_space<vmem>>, vector<1x4x16x16xf32>
    tpu.vector_store %arg6[%c0_17, %c0_18, %c0_19, %c0_20], %16 {strides = array<i32>} : memref<1x4x16x16xf32, #tpu.memory_space<vmem>>, vector<1x4x16x16xf32>,
    return
  }
  func.func @transform_0(%arg0: i32) -> (i32, i32, i32) {
    %c0_i32 = arith.constant 0 : i32
    %c0_i32_0 = arith.constant 0 : i32
    %c0_i32_1 = arith.constant 0 : i32
    return %arg0, %c0_i32, %c0_i32_0 : i32, i32, i32
  }
  func.func @transform_1(%arg0: i32) -> (i32, i32, i32) {
    %c0_i32 = arith.constant 0 : i32
    %c0_i32_0 = arith.constant 0 : i32
    %c0_i32_1 = arith.constant 0 : i32
    return %arg0, %c0_i32, %c0_i32_0 : i32, i32, i32
  }
  func.func @transform_2(%arg0: i32) -> (i32, i32, i32, i32) {
    %c0_i32 = arith.constant 0 : i32
    %c0_i32_0 = arith.constant 0 : i32
    %c0_i32_1 = arith.constant 0 : i32
    %c0_i32_2 = arith.constant 0 : i32
    return %arg0, %c0_i32, %c0_i32_0, %c0_i32_1 : i32, i32, i32, i32
  }
  func.func @transform_3(%arg0: i32) -> (i32, i32, i32, i32) {
    %c0_i32 = arith.constant 0 : i32
    %c0_i32_0 = arith.constant 0 : i32
    %c0_i32_1 = arith.constant 0 : i32
    %c0_i32_2 = arith.constant 0 : i32
    return %arg0, %c0_i32, %c0_i32_0, %c0_i32_1 : i32, i32, i32, i32
  }
  func.func @transform_4(%arg0: i32) -> (i32, i32, i32, i32) {
    %c0_i32 = arith.constant 0 : i32
    %c0_i32_0 = arith.constant 0 : i32
    %c0_i32_1 = arith.constant 0 : i32
    %c0_i32_2 = arith.constant 0 : i32
    return %arg0, %c0_i32, %c0_i32_0, %c0_i32_1 : i32, i32, i32, i32
  }
  func.func @transform_5(%arg0: i32) -> (i32, i32, i32, i32) {
    %c0_i32 = arith.constant 0 : i32
    %c0_i32_0 = arith.constant 0 : i32
    %c0_i32_1 = arith.constant 0 : i32
    %c0_i32_2 = arith.constant 0 : i32
    return %arg0, %c0_i32, %c0_i32_0, %c0_i32_1 : i32, i32, i32, i32
  }
}

module attributes {stable_mosaic.version = 11 : i64} {
  func.func @_apply_mask_kernel(%arg0: i32, %arg1: memref<1x4x16x16xf32, #tpu.memory_space<vmem>>, %arg2: memref<1x4x16x16xf32, #tpu.memory_space<vmem>>, %arg3: memref<1x16x16xf32, #tpu.memory_space<vmem>>, %arg4: memref<1x4x16x16xf32, #tpu.memory_space<vmem>>, %arg5: memref<1x4x16x16xf32, #tpu.memory_space<vmem>>) attributes {dimension_semantics = [#tpu.dimension_semantics<parallel>], iteration_bounds = array<i64: 2>, scalar_prefetch = 0 : i64, scratch_operands = 0 : i64, tpu.core_type = #tpu.core_type<tc>, window_params = [{transform_indices = @transform_0, window_bounds = array<i64: 1, 4, 16, 16>}, {transform_indices = @transform_1, window_bounds = array<i64: 1, 4, 16, 16>}, {transform_indices = @transform_2, window_bounds = array<i64: 1, 16, 16>}, {transform_indices = @transform_3, window_bounds = array<i64: 1, 4, 16, 16>}, {transform_indices = @transform_4, window_bounds = array<i64: 1, 4, 16, 16>}]} {
    %c0 = arith.constant 0 : index
    %c0_0 = arith.constant 0 : index
    %c0_1 = arith.constant 0 : index
    %0 = vector.load %arg3[%c0, %c0_0, %c0_1] : memref<1x16x16xf32, #tpu.memory_space<vmem>>, vector<1x16x16xf32>
    %1 = vector.shape_cast %0 : vector<1x16x16xf32> to vector<1x1x16x16xf32>
    %c0_2 = arith.constant 0 : index
    %c0_3 = arith.constant 0 : index
    %c0_4 = arith.constant 0 : index
    %c0_5 = arith.constant 0 : index
    %2 = vector.load %arg1[%c0_2, %c0_3, %c0_4, %c0_5] : memref<1x4x16x16xf32, #tpu.memory_space<vmem>>, vector<1x4x16x16xf32>
    %3 = vector.broadcast %1 : vector<1x1x16x16xf32> to vector<1x4x16x16xf32>
    %4 = arith.mulf %2, %3 : vector<1x4x16x16xf32>
    %c0_6 = arith.constant 0 : index
    %c0_7 = arith.constant 0 : index
    %c0_8 = arith.constant 0 : index
    %c0_9 = arith.constant 0 : index
    %5 = vector.load %arg4[%c0_6, %c0_7, %c0_8, %c0_9] : memref<1x4x16x16xf32, #tpu.memory_space<vmem>>, vector<1x4x16x16xf32>
    tpu.vector_store %arg4[%c0_6, %c0_7, %c0_8, %c0_9], %4 {strides = array<i32>} : memref<1x4x16x16xf32, #tpu.memory_space<vmem>>, vector<1x4x16x16xf32>,
    %c0_10 = arith.constant 0 : index
    %c0_11 = arith.constant 0 : index
    %c0_12 = arith.constant 0 : index
    %c0_13 = arith.constant 0 : index
    %6 = vector.load %arg2[%c0_10, %c0_11, %c0_12, %c0_13] : memref<1x4x16x16xf32, #tpu.memory_space<vmem>>, vector<1x4x16x16xf32>
    %7 = vector.broadcast %1 : vector<1x1x16x16xf32> to vector<1x4x16x16xf32>
    %8 = arith.mulf %6, %7 : vector<1x4x16x16xf32>
    %c0_14 = arith.constant 0 : index
    %c0_15 = arith.constant 0 : index
    %c0_16 = arith.constant 0 : index
    %c0_17 = arith.constant 0 : index
    %9 = vector.load %arg5[%c0_14, %c0_15, %c0_16, %c0_17] : memref<1x4x16x16xf32, #tpu.memory_space<vmem>>, vector<1x4x16x16xf32>
    tpu.vector_store %arg5[%c0_14, %c0_15, %c0_16, %c0_17], %8 {strides = array<i32>} : memref<1x4x16x16xf32, #tpu.memory_space<vmem>>, vector<1x4x16x16xf32>,
    return
  }
  func.func @transform_0(%arg0: i32) -> (i32, i32, i32, i32) {
    %c0_i32 = arith.constant 0 : i32
    %c0_i32_0 = arith.constant 0 : i32
    %c0_i32_1 = arith.constant 0 : i32
    %c0_i32_2 = arith.constant 0 : i32
    return %arg0, %c0_i32, %c0_i32_0, %c0_i32_1 : i32, i32, i32, i32
  }
  func.func @transform_1(%arg0: i32) -> (i32, i32, i32, i32) {
    %c0_i32 = arith.constant 0 : i32
    %c0_i32_0 = arith.constant 0 : i32
    %c0_i32_1 = arith.constant 0 : i32
    %c0_i32_2 = arith.constant 0 : i32
    return %arg0, %c0_i32, %c0_i32_0, %c0_i32_1 : i32, i32, i32, i32
  }
  func.func @transform_2(%arg0: i32) -> (i32, i32, i32) {
    %c0_i32 = arith.constant 0 : i32
    %c0_i32_0 = arith.constant 0 : i32
    %c0_i32_1 = arith.constant 0 : i32
    return %arg0, %c0_i32, %c0_i32_0 : i32, i32, i32
  }
  func.func @transform_3(%arg0: i32) -> (i32, i32, i32, i32) {
    %c0_i32 = arith.constant 0 : i32
    %c0_i32_0 = arith.constant 0 : i32
    %c0_i32_1 = arith.constant 0 : i32
    %c0_i32_2 = arith.constant 0 : i32
    return %arg0, %c0_i32, %c0_i32_0, %c0_i32_1 : i32, i32, i32, i32
  }
  func.func @transform_4(%arg0: i32) -> (i32, i32, i32, i32) {
    %c0_i32 = arith.constant 0 : i32
    %c0_i32_0 = arith.constant 0 : i32
    %c0_i32_1 = arith.constant 0 : i32
    %c0_i32_2 = arith.constant 0 : i32
    return %arg0, %c0_i32, %c0_i32_0, %c0_i32_1 : i32, i32, i32, i32
  }
}

module attributes {stable_mosaic.version = 11 : i64} {
  func.func @_cg_update_kernel(%arg0: i32, %arg1: memref<1x4x16x16xf32, #tpu.memory_space<vmem>>, %arg2: memref<1x4x16x16xf32, #tpu.memory_space<vmem>>, %arg3: memref<1x4x16x16xf32, #tpu.memory_space<vmem>>, %arg4: memref<1x4x16x16xf32, #tpu.memory_space<vmem>>, %arg5: memref<1x16x16xf32, #tpu.memory_space<vmem>>, %arg6: memref<1x16x16xf32, #tpu.memory_space<vmem>>, %arg7: memref<1x16x16xf32, #tpu.memory_space<vmem>>, %arg8: memref<1x16x16xf32, #tpu.memory_space<vmem>>, %arg9: memref<1x16x16xf32, #tpu.memory_space<vmem>>, %arg10: memref<1x16x16xf32, #tpu.memory_space<vmem>>, %arg11: memref<1x1x1xf32, #tpu.memory_space<vmem>>, %arg12: memref<1xf32, #tpu.memory_space<smem>>, %arg13: memref<1x16x16xf32, #tpu.memory_space<vmem>>, %arg14: memref<1x16x16xf32, #tpu.memory_space<vmem>>, %arg15: memref<1x16x16xf32, #tpu.memory_space<vmem>>, %arg16: memref<1x16x16xf32, #tpu.memory_space<vmem>>, %arg17: memref<1x16x16xf32, #tpu.memory_space<vmem>>, %arg18: memref<1x16x16xf32, #tpu.memory_space<vmem>>, %arg19: memref<1x1x1xf32, #tpu.memory_space<vmem>>) attributes {dimension_semantics = [#tpu.dimension_semantics<parallel>], iteration_bounds = array<i64: 2>, scalar_prefetch = 0 : i64, scratch_operands = 0 : i64, tpu.core_type = #tpu.core_type<tc>, window_params = [{transform_indices = @transform_0, window_bounds = array<i64: 1, 4, 16, 16>}, {transform_indices = @transform_1, window_bounds = array<i64: 1, 4, 16, 16>}, {transform_indices = @transform_2, window_bounds = array<i64: 1, 4, 16, 16>}, {transform_indices = @transform_3, window_bounds = array<i64: 1, 4, 16, 16>}, {transform_indices = @transform_4, window_bounds = array<i64: 1, 16, 16>}, {transform_indices = @transform_5, window_bounds = array<i64: 1, 16, 16>}, {transform_indices = @transform_6, window_bounds = array<i64: 1, 16, 16>}, {transform_indices = @transform_7, window_bounds = array<i64: 1, 16, 16>}, {transform_indices = @transform_8, window_bounds = array<i64: 1, 16, 16>}, {transform_indices = @transform_9, window_bounds = array<i64: 1, 16, 16>}, {transform_indices = @transform_10, window_bounds = array<i64: 1, 1, 1>}, {transform_indices = @transform_11, window_bounds = array<i64: 1>}, {transform_indices = @transform_12, window_bounds = array<i64: 1, 16, 16>}, {transform_indices = @transform_13, window_bounds = array<i64: 1, 16, 16>}, {transform_indices = @transform_14, window_bounds = array<i64: 1, 16, 16>}, {transform_indices = @transform_15, window_bounds = array<i64: 1, 16, 16>}, {transform_indices = @transform_16, window_bounds = array<i64: 1, 16, 16>}, {transform_indices = @transform_17, window_bounds = array<i64: 1, 16, 16>}, {transform_indices = @transform_18, window_bounds = array<i64: 1, 1, 1>}]} {
    %c0 = arith.constant 0 : index
    %0 = memref.load %arg12[%c0] : memref<1xf32, #tpu.memory_space<smem>>
    %c0_0 = arith.constant 0 : index
    %c0_1 = arith.constant 0 : index
    %c0_2 = arith.constant 0 : index
    %1 = vector.load %arg11[%c0_0, %c0_1, %c0_2] : memref<1x1x1xf32, #tpu.memory_space<vmem>>, vector<1x1x1xf32>
    %c0_3 = arith.constant 0 : index
    %c0_4 = arith.constant 0 : index
    %c0_5 = arith.constant 0 : index
    %c0_6 = arith.constant 0 : index
    %2 = vector.load %arg1[%c0_3, %c0_4, %c0_5, %c0_6] : memref<1x4x16x16xf32, #tpu.memory_space<vmem>>, vector<1x4x16x16xf32>
    %c0_7 = arith.constant 0 : index
    %c0_8 = arith.constant 0 : index
    %c0_9 = arith.constant 0 : index
    %c0_10 = arith.constant 0 : index
    %3 = vector.load %arg2[%c0_7, %c0_8, %c0_9, %c0_10] : memref<1x4x16x16xf32, #tpu.memory_space<vmem>>, vector<1x4x16x16xf32>
    %c0_11 = arith.constant 0 : index
    %c0_12 = arith.constant 0 : index
    %c0_13 = arith.constant 0 : index
    %c0_14 = arith.constant 0 : index
    %4 = vector.load %arg3[%c0_11, %c0_12, %c0_13, %c0_14] : memref<1x4x16x16xf32, #tpu.memory_space<vmem>>, vector<1x4x16x16xf32>
    %c0_15 = arith.constant 0 : index
    %c0_16 = arith.constant 0 : index
    %c0_17 = arith.constant 0 : index
    %c0_18 = arith.constant 0 : index
    %5 = vector.load %arg4[%c0_15, %c0_16, %c0_17, %c0_18] : memref<1x4x16x16xf32, #tpu.memory_space<vmem>>, vector<1x4x16x16xf32>
    %c0_19 = arith.constant 0 : index
    %c0_20 = arith.constant 0 : index
    %c0_21 = arith.constant 0 : index
    %6 = vector.load %arg5[%c0_19, %c0_20, %c0_21] : memref<1x16x16xf32, #tpu.memory_space<vmem>>, vector<1x16x16xf32>
    %c0_22 = arith.constant 0 : index
    %c0_23 = arith.constant 0 : index
    %c0_24 = arith.constant 0 : index
    %7 = vector.load %arg6[%c0_22, %c0_23, %c0_24] : memref<1x16x16xf32, #tpu.memory_space<vmem>>, vector<1x16x16xf32>
    %8 = arith.mulf %2, %4 : vector<1x4x16x16xf32>
    %9 = arith.mulf %3, %5 : vector<1x4x16x16xf32>
    %10 = arith.addf %8, %9 : vector<1x4x16x16xf32>
    %cst = arith.constant dense<0.000000e+00> : vector<1x16x16xf32>
    %11 = vector.multi_reduction <add>, %10, %cst [1] : vector<1x4x16x16xf32> to vector<1x16x16xf32>
    %12 = vector.broadcast %0 : f32 to vector<1x16x16xf32>
    %13 = arith.mulf %12, %6 : vector<1x16x16xf32>
    %14 = arith.addf %11, %13 : vector<1x16x16xf32>
    %15 = arith.mulf %2, %5 : vector<1x4x16x16xf32>
    %16 = arith.mulf %3, %4 : vector<1x4x16x16xf32>
    %17 = arith.subf %15, %16 : vector<1x4x16x16xf32>
    %cst_25 = arith.constant dense<0.000000e+00> : vector<1x16x16xf32>
    %18 = vector.multi_reduction <add>, %17, %cst_25 [1] : vector<1x4x16x16xf32> to vector<1x16x16xf32>
    %19 = vector.broadcast %0 : f32 to vector<1x16x16xf32>
    %20 = arith.mulf %19, %7 : vector<1x16x16xf32>
    %21 = arith.addf %18, %20 : vector<1x16x16xf32>
    %22 = arith.mulf %6, %14 : vector<1x16x16xf32>
    %23 = arith.mulf %7, %21 : vector<1x16x16xf32>
    %24 = arith.addf %22, %23 : vector<1x16x16xf32>
    %25 = vector.shape_cast %24 : vector<1x16x16xf32> to vector<1x1x16x16xf32>
    %cst_26 = arith.constant dense<0.000000e+00> : vector<1xf32>
    %26 = vector.multi_reduction <add>, %25, %cst_26 [1, 2, 3] : vector<1x1x16x16xf32> to vector<1xf32>
    %27 = vector.shape_cast %26 : vector<1xf32> to vector<1x1x1x1xf32>
    %28 = vector.extract %27[0, 0, 0, 0] : f32 from vector<1x1x1x1xf32>
    %29 = vector.broadcast %28 : f32 to vector<1x1x1xf32>
    %30 = arith.divf %1, %29 : vector<1x1x1xf32>
    %c0_27 = arith.constant 0 : index
    %c0_28 = arith.constant 0 : index
    %c0_29 = arith.constant 0 : index
    %31 = vector.load %arg7[%c0_27, %c0_28, %c0_29] : memref<1x16x16xf32, #tpu.memory_space<vmem>>, vector<1x16x16xf32>
    %32 = vector.broadcast %30 : vector<1x1x1xf32> to vector<1x16x16xf32>
    %33 = arith.mulf %32, %6 : vector<1x16x16xf32>
    %34 = arith.addf %31, %33 : vector<1x16x16xf32>
    %c0_30 = arith.constant 0 : index
    %c0_31 = arith.constant 0 : index
    %c0_32 = arith.constant 0 : index
    %35 = vector.load %arg8[%c0_30, %c0_31, %c0_32] : memref<1x16x16xf32, #tpu.memory_space<vmem>>, vector<1x16x16xf32>
    %36 = vector.broadcast %30 : vector<1x1x1xf32> to vector<1x16x16xf32>
    %37 = arith.mulf %36, %7 : vector<1x16x16xf32>
    %38 = arith.addf %35, %37 : vector<1x16x16xf32>
    %c0_33 = arith.constant 0 : index
    %c0_34 = arith.constant 0 : index
    %c0_35 = arith.constant 0 : index
    %39 = vector.load %arg9[%c0_33, %c0_34, %c0_35] : memref<1x16x16xf32, #tpu.memory_space<vmem>>, vector<1x16x16xf32>
    %40 = vector.broadcast %30 : vector<1x1x1xf32> to vector<1x16x16xf32>
    %41 = arith.mulf %40, %14 : vector<1x16x16xf32>
    %42 = arith.subf %39, %41 : vector<1x16x16xf32>
    %c0_36 = arith.constant 0 : index
    %c0_37 = arith.constant 0 : index
    %c0_38 = arith.constant 0 : index
    %43 = vector.load %arg10[%c0_36, %c0_37, %c0_38] : memref<1x16x16xf32, #tpu.memory_space<vmem>>, vector<1x16x16xf32>
    %44 = vector.broadcast %30 : vector<1x1x1xf32> to vector<1x16x16xf32>
    %45 = arith.mulf %44, %21 : vector<1x16x16xf32>
    %46 = arith.subf %43, %45 : vector<1x16x16xf32>
    %47 = arith.mulf %42, %42 : vector<1x16x16xf32>
    %48 = arith.mulf %46, %46 : vector<1x16x16xf32>
    %49 = arith.addf %47, %48 : vector<1x16x16xf32>
    %50 = vector.shape_cast %49 : vector<1x16x16xf32> to vector<1x1x16x16xf32>
    %cst_39 = arith.constant dense<0.000000e+00> : vector<1xf32>
    %51 = vector.multi_reduction <add>, %50, %cst_39 [1, 2, 3] : vector<1x1x16x16xf32> to vector<1xf32>
    %52 = vector.shape_cast %51 : vector<1xf32> to vector<1x1x1x1xf32>
    %53 = vector.extract %52[0, 0, 0, 0] : f32 from vector<1x1x1x1xf32>
    %54 = vector.broadcast %53 : f32 to vector<1x1x1xf32>
    %55 = arith.divf %54, %1 : vector<1x1x1xf32>
    %c0_40 = arith.constant 0 : index
    %c0_41 = arith.constant 0 : index
    %c0_42 = arith.constant 0 : index
    %56 = vector.load %arg13[%c0_40, %c0_41, %c0_42] : memref<1x16x16xf32, #tpu.memory_space<vmem>>, vector<1x16x16xf32>
    tpu.vector_store %arg13[%c0_40, %c0_41, %c0_42], %34 {strides = array<i32>} : memref<1x16x16xf32, #tpu.memory_space<vmem>>, vector<1x16x16xf32>,
    %c0_43 = arith.constant 0 : index
    %c0_44 = arith.constant 0 : index
    %c0_45 = arith.constant 0 : index
    %57 = vector.load %arg14[%c0_43, %c0_44, %c0_45] : memref<1x16x16xf32, #tpu.memory_space<vmem>>, vector<1x16x16xf32>
    tpu.vector_store %arg14[%c0_43, %c0_44, %c0_45], %38 {strides = array<i32>} : memref<1x16x16xf32, #tpu.memory_space<vmem>>, vector<1x16x16xf32>,
    %c0_46 = arith.constant 0 : index
    %c0_47 = arith.constant 0 : index
    %c0_48 = arith.constant 0 : index
    %58 = vector.load %arg15[%c0_46, %c0_47, %c0_48] : memref<1x16x16xf32, #tpu.memory_space<vmem>>, vector<1x16x16xf32>
    tpu.vector_store %arg15[%c0_46, %c0_47, %c0_48], %42 {strides = array<i32>} : memref<1x16x16xf32, #tpu.memory_space<vmem>>, vector<1x16x16xf32>,
    %c0_49 = arith.constant 0 : index
    %c0_50 = arith.constant 0 : index
    %c0_51 = arith.constant 0 : index
    %59 = vector.load %arg16[%c0_49, %c0_50, %c0_51] : memref<1x16x16xf32, #tpu.memory_space<vmem>>, vector<1x16x16xf32>
    tpu.vector_store %arg16[%c0_49, %c0_50, %c0_51], %46 {strides = array<i32>} : memref<1x16x16xf32, #tpu.memory_space<vmem>>, vector<1x16x16xf32>,
    %60 = vector.broadcast %55 : vector<1x1x1xf32> to vector<1x16x16xf32>
    %61 = arith.mulf %60, %6 : vector<1x16x16xf32>
    %62 = arith.addf %42, %61 : vector<1x16x16xf32>
    %c0_52 = arith.constant 0 : index
    %c0_53 = arith.constant 0 : index
    %c0_54 = arith.constant 0 : index
    %63 = vector.load %arg17[%c0_52, %c0_53, %c0_54] : memref<1x16x16xf32, #tpu.memory_space<vmem>>, vector<1x16x16xf32>
    tpu.vector_store %arg17[%c0_52, %c0_53, %c0_54], %62 {strides = array<i32>} : memref<1x16x16xf32, #tpu.memory_space<vmem>>, vector<1x16x16xf32>,
    %64 = vector.broadcast %55 : vector<1x1x1xf32> to vector<1x16x16xf32>
    %65 = arith.mulf %64, %7 : vector<1x16x16xf32>
    %66 = arith.addf %46, %65 : vector<1x16x16xf32>
    %c0_55 = arith.constant 0 : index
    %c0_56 = arith.constant 0 : index
    %c0_57 = arith.constant 0 : index
    %67 = vector.load %arg18[%c0_55, %c0_56, %c0_57] : memref<1x16x16xf32, #tpu.memory_space<vmem>>, vector<1x16x16xf32>
    tpu.vector_store %arg18[%c0_55, %c0_56, %c0_57], %66 {strides = array<i32>} : memref<1x16x16xf32, #tpu.memory_space<vmem>>, vector<1x16x16xf32>,
    %c0_58 = arith.constant 0 : index
    %c0_59 = arith.constant 0 : index
    %c0_60 = arith.constant 0 : index
    %68 = vector.load %arg19[%c0_58, %c0_59, %c0_60] : memref<1x1x1xf32, #tpu.memory_space<vmem>>, vector<1x1x1xf32>
    tpu.vector_store %arg19[%c0_58, %c0_59, %c0_60], %54 {strides = array<i32>} : memref<1x1x1xf32, #tpu.memory_space<vmem>>, vector<1x1x1xf32>,
    return
  }
  func.func @transform_0(%arg0: i32) -> (i32, i32, i32, i32) {
    %c0_i32 = arith.constant 0 : i32
    %c0_i32_0 = arith.constant 0 : i32
    %c0_i32_1 = arith.constant 0 : i32
    %c0_i32_2 = arith.constant 0 : i32
    return %arg0, %c0_i32, %c0_i32_0, %c0_i32_1 : i32, i32, i32, i32
  }
  func.func @transform_1(%arg0: i32) -> (i32, i32, i32, i32) {
    %c0_i32 = arith.constant 0 : i32
    %c0_i32_0 = arith.constant 0 : i32
    %c0_i32_1 = arith.constant 0 : i32
    %c0_i32_2 = arith.constant 0 : i32
    return %arg0, %c0_i32, %c0_i32_0, %c0_i32_1 : i32, i32, i32, i32
  }
  func.func @transform_2(%arg0: i32) -> (i32, i32, i32, i32) {
    %c0_i32 = arith.constant 0 : i32
    %c0_i32_0 = arith.constant 0 : i32
    %c0_i32_1 = arith.constant 0 : i32
    %c0_i32_2 = arith.constant 0 : i32
    return %arg0, %c0_i32, %c0_i32_0, %c0_i32_1 : i32, i32, i32, i32
  }
  func.func @transform_3(%arg0: i32) -> (i32, i32, i32, i32) {
    %c0_i32 = arith.constant 0 : i32
    %c0_i32_0 = arith.constant 0 : i32
    %c0_i32_1 = arith.constant 0 : i32
    %c0_i32_2 = arith.constant 0 : i32
    return %arg0, %c0_i32, %c0_i32_0, %c0_i32_1 : i32, i32, i32, i32
  }
  func.func @transform_4(%arg0: i32) -> (i32, i32, i32) {
    %c0_i32 = arith.constant 0 : i32
    %c0_i32_0 = arith.constant 0 : i32
    %c0_i32_1 = arith.constant 0 : i32
    return %arg0, %c0_i32, %c0_i32_0 : i32, i32, i32
  }
  func.func @transform_5(%arg0: i32) -> (i32, i32, i32) {
    %c0_i32 = arith.constant 0 : i32
    %c0_i32_0 = arith.constant 0 : i32
    %c0_i32_1 = arith.constant 0 : i32
    return %arg0, %c0_i32, %c0_i32_0 : i32, i32, i32
  }
  func.func @transform_6(%arg0: i32) -> (i32, i32, i32) {
    %c0_i32 = arith.constant 0 : i32
    %c0_i32_0 = arith.constant 0 : i32
    %c0_i32_1 = arith.constant 0 : i32
    return %arg0, %c0_i32, %c0_i32_0 : i32, i32, i32
  }
  func.func @transform_7(%arg0: i32) -> (i32, i32, i32) {
    %c0_i32 = arith.constant 0 : i32
    %c0_i32_0 = arith.constant 0 : i32
    %c0_i32_1 = arith.constant 0 : i32
    return %arg0, %c0_i32, %c0_i32_0 : i32, i32, i32
  }
  func.func @transform_8(%arg0: i32) -> (i32, i32, i32) {
    %c0_i32 = arith.constant 0 : i32
    %c0_i32_0 = arith.constant 0 : i32
    %c0_i32_1 = arith.constant 0 : i32
    return %arg0, %c0_i32, %c0_i32_0 : i32, i32, i32
  }
  func.func @transform_9(%arg0: i32) -> (i32, i32, i32) {
    %c0_i32 = arith.constant 0 : i32
    %c0_i32_0 = arith.constant 0 : i32
    %c0_i32_1 = arith.constant 0 : i32
    return %arg0, %c0_i32, %c0_i32_0 : i32, i32, i32
  }
  func.func @transform_10(%arg0: i32) -> (i32, i32, i32) {
    %c0_i32 = arith.constant 0 : i32
    %c0_i32_0 = arith.constant 0 : i32
    %c0_i32_1 = arith.constant 0 : i32
    return %arg0, %c0_i32, %c0_i32_0 : i32, i32, i32
  }
  func.func @transform_11(%arg0: i32) -> i32 {
    %c0_i32 = arith.constant 0 : i32
    %c0_i32_0 = arith.constant 0 : i32
    return %c0_i32 : i32
  }
  func.func @transform_12(%arg0: i32) -> (i32, i32, i32) {
    %c0_i32 = arith.constant 0 : i32
    %c0_i32_0 = arith.constant 0 : i32
    %c0_i32_1 = arith.constant 0 : i32
    return %arg0, %c0_i32, %c0_i32_0 : i32, i32, i32
  }
  func.func @transform_13(%arg0: i32) -> (i32, i32, i32) {
    %c0_i32 = arith.constant 0 : i32
    %c0_i32_0 = arith.constant 0 : i32
    %c0_i32_1 = arith.constant 0 : i32
    return %arg0, %c0_i32, %c0_i32_0 : i32, i32, i32
  }
  func.func @transform_14(%arg0: i32) -> (i32, i32, i32) {
    %c0_i32 = arith.constant 0 : i32
    %c0_i32_0 = arith.constant 0 : i32
    %c0_i32_1 = arith.constant 0 : i32
    return %arg0, %c0_i32, %c0_i32_0 : i32, i32, i32
  }
  func.func @transform_15(%arg0: i32) -> (i32, i32, i32) {
    %c0_i32 = arith.constant 0 : i32
    %c0_i32_0 = arith.constant 0 : i32
    %c0_i32_1 = arith.constant 0 : i32
    return %arg0, %c0_i32, %c0_i32_0 : i32, i32, i32
  }
  func.func @transform_16(%arg0: i32) -> (i32, i32, i32) {
    %c0_i32 = arith.constant 0 : i32
    %c0_i32_0 = arith.constant 0 : i32
    %c0_i32_1 = arith.constant 0 : i32
    return %arg0, %c0_i32, %c0_i32_0 : i32, i32, i32
  }
  func.func @transform_17(%arg0: i32) -> (i32, i32, i32) {
    %c0_i32 = arith.constant 0 : i32
    %c0_i32_0 = arith.constant 0 : i32
    %c0_i32_1 = arith.constant 0 : i32
    return %arg0, %c0_i32, %c0_i32_0 : i32, i32, i32
  }
  func.func @transform_18(%arg0: i32) -> (i32, i32, i32) {
    %c0_i32 = arith.constant 0 : i32
    %c0_i32_0 = arith.constant 0 : i32
    %c0_i32_1 = arith.constant 0 : i32
    return %arg0, %c0_i32, %c0_i32_0 : i32, i32, i32
  }
}

module attributes {stable_mosaic.version = 11 : i64} {
  func.func @_cg_update_kernel(%arg0: i32, %arg1: memref<1x4x16x16xf32, #tpu.memory_space<vmem>>, %arg2: memref<1x4x16x16xf32, #tpu.memory_space<vmem>>, %arg3: memref<1x4x16x16xf32, #tpu.memory_space<vmem>>, %arg4: memref<1x4x16x16xf32, #tpu.memory_space<vmem>>, %arg5: memref<1x16x16xf32, #tpu.memory_space<vmem>>, %arg6: memref<1x16x16xf32, #tpu.memory_space<vmem>>, %arg7: memref<1x16x16xf32, #tpu.memory_space<vmem>>, %arg8: memref<1x16x16xf32, #tpu.memory_space<vmem>>, %arg9: memref<1x16x16xf32, #tpu.memory_space<vmem>>, %arg10: memref<1x16x16xf32, #tpu.memory_space<vmem>>, %arg11: memref<1x1x1xf32, #tpu.memory_space<vmem>>, %arg12: memref<1xf32, #tpu.memory_space<smem>>, %arg13: memref<1x16x16xf32, #tpu.memory_space<vmem>>, %arg14: memref<1x16x16xf32, #tpu.memory_space<vmem>>, %arg15: memref<1x16x16xf32, #tpu.memory_space<vmem>>, %arg16: memref<1x16x16xf32, #tpu.memory_space<vmem>>, %arg17: memref<1x16x16xf32, #tpu.memory_space<vmem>>, %arg18: memref<1x16x16xf32, #tpu.memory_space<vmem>>, %arg19: memref<1x1x1xf32, #tpu.memory_space<vmem>>) attributes {dimension_semantics = [#tpu.dimension_semantics<parallel>], iteration_bounds = array<i64: 2>, scalar_prefetch = 0 : i64, scratch_operands = 0 : i64, tpu.core_type = #tpu.core_type<tc>, window_params = [{transform_indices = @transform_0, window_bounds = array<i64: 1, 4, 16, 16>}, {transform_indices = @transform_1, window_bounds = array<i64: 1, 4, 16, 16>}, {transform_indices = @transform_2, window_bounds = array<i64: 1, 4, 16, 16>}, {transform_indices = @transform_3, window_bounds = array<i64: 1, 4, 16, 16>}, {transform_indices = @transform_4, window_bounds = array<i64: 1, 16, 16>}, {transform_indices = @transform_5, window_bounds = array<i64: 1, 16, 16>}, {transform_indices = @transform_6, window_bounds = array<i64: 1, 16, 16>}, {transform_indices = @transform_7, window_bounds = array<i64: 1, 16, 16>}, {transform_indices = @transform_8, window_bounds = array<i64: 1, 16, 16>}, {transform_indices = @transform_9, window_bounds = array<i64: 1, 16, 16>}, {transform_indices = @transform_10, window_bounds = array<i64: 1, 1, 1>}, {transform_indices = @transform_11, window_bounds = array<i64: 1>}, {transform_indices = @transform_12, window_bounds = array<i64: 1, 16, 16>}, {transform_indices = @transform_13, window_bounds = array<i64: 1, 16, 16>}, {transform_indices = @transform_14, window_bounds = array<i64: 1, 16, 16>}, {transform_indices = @transform_15, window_bounds = array<i64: 1, 16, 16>}, {transform_indices = @transform_16, window_bounds = array<i64: 1, 16, 16>}, {transform_indices = @transform_17, window_bounds = array<i64: 1, 16, 16>}, {transform_indices = @transform_18, window_bounds = array<i64: 1, 1, 1>}]} {
    %c0 = arith.constant 0 : index
    %0 = memref.load %arg12[%c0] : memref<1xf32, #tpu.memory_space<smem>>
    %c0_0 = arith.constant 0 : index
    %c0_1 = arith.constant 0 : index
    %c0_2 = arith.constant 0 : index
    %1 = vector.load %arg11[%c0_0, %c0_1, %c0_2] : memref<1x1x1xf32, #tpu.memory_space<vmem>>, vector<1x1x1xf32>
    %c0_3 = arith.constant 0 : index
    %c0_4 = arith.constant 0 : index
    %c0_5 = arith.constant 0 : index
    %c0_6 = arith.constant 0 : index
    %2 = vector.load %arg1[%c0_3, %c0_4, %c0_5, %c0_6] : memref<1x4x16x16xf32, #tpu.memory_space<vmem>>, vector<1x4x16x16xf32>
    %c0_7 = arith.constant 0 : index
    %c0_8 = arith.constant 0 : index
    %c0_9 = arith.constant 0 : index
    %c0_10 = arith.constant 0 : index
    %3 = vector.load %arg2[%c0_7, %c0_8, %c0_9, %c0_10] : memref<1x4x16x16xf32, #tpu.memory_space<vmem>>, vector<1x4x16x16xf32>
    %c0_11 = arith.constant 0 : index
    %c0_12 = arith.constant 0 : index
    %c0_13 = arith.constant 0 : index
    %c0_14 = arith.constant 0 : index
    %4 = vector.load %arg3[%c0_11, %c0_12, %c0_13, %c0_14] : memref<1x4x16x16xf32, #tpu.memory_space<vmem>>, vector<1x4x16x16xf32>
    %c0_15 = arith.constant 0 : index
    %c0_16 = arith.constant 0 : index
    %c0_17 = arith.constant 0 : index
    %c0_18 = arith.constant 0 : index
    %5 = vector.load %arg4[%c0_15, %c0_16, %c0_17, %c0_18] : memref<1x4x16x16xf32, #tpu.memory_space<vmem>>, vector<1x4x16x16xf32>
    %c0_19 = arith.constant 0 : index
    %c0_20 = arith.constant 0 : index
    %c0_21 = arith.constant 0 : index
    %6 = vector.load %arg5[%c0_19, %c0_20, %c0_21] : memref<1x16x16xf32, #tpu.memory_space<vmem>>, vector<1x16x16xf32>
    %c0_22 = arith.constant 0 : index
    %c0_23 = arith.constant 0 : index
    %c0_24 = arith.constant 0 : index
    %7 = vector.load %arg6[%c0_22, %c0_23, %c0_24] : memref<1x16x16xf32, #tpu.memory_space<vmem>>, vector<1x16x16xf32>
    %8 = arith.mulf %2, %4 : vector<1x4x16x16xf32>
    %9 = arith.mulf %3, %5 : vector<1x4x16x16xf32>
    %10 = arith.addf %8, %9 : vector<1x4x16x16xf32>
    %cst = arith.constant dense<0.000000e+00> : vector<1x16x16xf32>
    %11 = vector.multi_reduction <add>, %10, %cst [1] : vector<1x4x16x16xf32> to vector<1x16x16xf32>
    %12 = vector.broadcast %0 : f32 to vector<1x16x16xf32>
    %13 = arith.mulf %12, %6 : vector<1x16x16xf32>
    %14 = arith.addf %11, %13 : vector<1x16x16xf32>
    %15 = arith.mulf %2, %5 : vector<1x4x16x16xf32>
    %16 = arith.mulf %3, %4 : vector<1x4x16x16xf32>
    %17 = arith.subf %15, %16 : vector<1x4x16x16xf32>
    %cst_25 = arith.constant dense<0.000000e+00> : vector<1x16x16xf32>
    %18 = vector.multi_reduction <add>, %17, %cst_25 [1] : vector<1x4x16x16xf32> to vector<1x16x16xf32>
    %19 = vector.broadcast %0 : f32 to vector<1x16x16xf32>
    %20 = arith.mulf %19, %7 : vector<1x16x16xf32>
    %21 = arith.addf %18, %20 : vector<1x16x16xf32>
    %22 = arith.mulf %6, %14 : vector<1x16x16xf32>
    %23 = arith.mulf %7, %21 : vector<1x16x16xf32>
    %24 = arith.addf %22, %23 : vector<1x16x16xf32>
    %25 = vector.shape_cast %24 : vector<1x16x16xf32> to vector<1x1x16x16xf32>
    %cst_26 = arith.constant dense<0.000000e+00> : vector<1xf32>
    %26 = vector.multi_reduction <add>, %25, %cst_26 [1, 2, 3] : vector<1x1x16x16xf32> to vector<1xf32>
    %27 = vector.shape_cast %26 : vector<1xf32> to vector<1x1x1x1xf32>
    %28 = vector.extract %27[0, 0, 0, 0] : f32 from vector<1x1x1x1xf32>
    %29 = vector.broadcast %28 : f32 to vector<1x1x1xf32>
    %30 = arith.divf %1, %29 : vector<1x1x1xf32>
    %c0_27 = arith.constant 0 : index
    %c0_28 = arith.constant 0 : index
    %c0_29 = arith.constant 0 : index
    %31 = vector.load %arg7[%c0_27, %c0_28, %c0_29] : memref<1x16x16xf32, #tpu.memory_space<vmem>>, vector<1x16x16xf32>
    %32 = vector.broadcast %30 : vector<1x1x1xf32> to vector<1x16x16xf32>
    %33 = arith.mulf %32, %6 : vector<1x16x16xf32>
    %34 = arith.addf %31, %33 : vector<1x16x16xf32>
    %c0_30 = arith.constant 0 : index
    %c0_31 = arith.constant 0 : index
    %c0_32 = arith.constant 0 : index
    %35 = vector.load %arg8[%c0_30, %c0_31, %c0_32] : memref<1x16x16xf32, #tpu.memory_space<vmem>>, vector<1x16x16xf32>
    %36 = vector.broadcast %30 : vector<1x1x1xf32> to vector<1x16x16xf32>
    %37 = arith.mulf %36, %7 : vector<1x16x16xf32>
    %38 = arith.addf %35, %37 : vector<1x16x16xf32>
    %c0_33 = arith.constant 0 : index
    %c0_34 = arith.constant 0 : index
    %c0_35 = arith.constant 0 : index
    %39 = vector.load %arg9[%c0_33, %c0_34, %c0_35] : memref<1x16x16xf32, #tpu.memory_space<vmem>>, vector<1x16x16xf32>
    %40 = vector.broadcast %30 : vector<1x1x1xf32> to vector<1x16x16xf32>
    %41 = arith.mulf %40, %14 : vector<1x16x16xf32>
    %42 = arith.subf %39, %41 : vector<1x16x16xf32>
    %c0_36 = arith.constant 0 : index
    %c0_37 = arith.constant 0 : index
    %c0_38 = arith.constant 0 : index
    %43 = vector.load %arg10[%c0_36, %c0_37, %c0_38] : memref<1x16x16xf32, #tpu.memory_space<vmem>>, vector<1x16x16xf32>
    %44 = vector.broadcast %30 : vector<1x1x1xf32> to vector<1x16x16xf32>
    %45 = arith.mulf %44, %21 : vector<1x16x16xf32>
    %46 = arith.subf %43, %45 : vector<1x16x16xf32>
    %47 = arith.mulf %42, %42 : vector<1x16x16xf32>
    %48 = arith.mulf %46, %46 : vector<1x16x16xf32>
    %49 = arith.addf %47, %48 : vector<1x16x16xf32>
    %50 = vector.shape_cast %49 : vector<1x16x16xf32> to vector<1x1x16x16xf32>
    %cst_39 = arith.constant dense<0.000000e+00> : vector<1xf32>
    %51 = vector.multi_reduction <add>, %50, %cst_39 [1, 2, 3] : vector<1x1x16x16xf32> to vector<1xf32>
    %52 = vector.shape_cast %51 : vector<1xf32> to vector<1x1x1x1xf32>
    %53 = vector.extract %52[0, 0, 0, 0] : f32 from vector<1x1x1x1xf32>
    %54 = vector.broadcast %53 : f32 to vector<1x1x1xf32>
    %55 = arith.divf %54, %1 : vector<1x1x1xf32>
    %c0_40 = arith.constant 0 : index
    %c0_41 = arith.constant 0 : index
    %c0_42 = arith.constant 0 : index
    %56 = vector.load %arg13[%c0_40, %c0_41, %c0_42] : memref<1x16x16xf32, #tpu.memory_space<vmem>>, vector<1x16x16xf32>
    tpu.vector_store %arg13[%c0_40, %c0_41, %c0_42], %34 {strides = array<i32>} : memref<1x16x16xf32, #tpu.memory_space<vmem>>, vector<1x16x16xf32>,
    %c0_43 = arith.constant 0 : index
    %c0_44 = arith.constant 0 : index
    %c0_45 = arith.constant 0 : index
    %57 = vector.load %arg14[%c0_43, %c0_44, %c0_45] : memref<1x16x16xf32, #tpu.memory_space<vmem>>, vector<1x16x16xf32>
    tpu.vector_store %arg14[%c0_43, %c0_44, %c0_45], %38 {strides = array<i32>} : memref<1x16x16xf32, #tpu.memory_space<vmem>>, vector<1x16x16xf32>,
    %c0_46 = arith.constant 0 : index
    %c0_47 = arith.constant 0 : index
    %c0_48 = arith.constant 0 : index
    %58 = vector.load %arg15[%c0_46, %c0_47, %c0_48] : memref<1x16x16xf32, #tpu.memory_space<vmem>>, vector<1x16x16xf32>
    tpu.vector_store %arg15[%c0_46, %c0_47, %c0_48], %42 {strides = array<i32>} : memref<1x16x16xf32, #tpu.memory_space<vmem>>, vector<1x16x16xf32>,
    %c0_49 = arith.constant 0 : index
    %c0_50 = arith.constant 0 : index
    %c0_51 = arith.constant 0 : index
    %59 = vector.load %arg16[%c0_49, %c0_50, %c0_51] : memref<1x16x16xf32, #tpu.memory_space<vmem>>, vector<1x16x16xf32>
    tpu.vector_store %arg16[%c0_49, %c0_50, %c0_51], %46 {strides = array<i32>} : memref<1x16x16xf32, #tpu.memory_space<vmem>>, vector<1x16x16xf32>,
    %60 = vector.broadcast %55 : vector<1x1x1xf32> to vector<1x16x16xf32>
    %61 = arith.mulf %60, %6 : vector<1x16x16xf32>
    %62 = arith.addf %42, %61 : vector<1x16x16xf32>
    %c0_52 = arith.constant 0 : index
    %c0_53 = arith.constant 0 : index
    %c0_54 = arith.constant 0 : index
    %63 = vector.load %arg17[%c0_52, %c0_53, %c0_54] : memref<1x16x16xf32, #tpu.memory_space<vmem>>, vector<1x16x16xf32>
    tpu.vector_store %arg17[%c0_52, %c0_53, %c0_54], %62 {strides = array<i32>} : memref<1x16x16xf32, #tpu.memory_space<vmem>>, vector<1x16x16xf32>,
    %64 = vector.broadcast %55 : vector<1x1x1xf32> to vector<1x16x16xf32>
    %65 = arith.mulf %64, %7 : vector<1x16x16xf32>
    %66 = arith.addf %46, %65 : vector<1x16x16xf32>
    %c0_55 = arith.constant 0 : index
    %c0_56 = arith.constant 0 : index
    %c0_57 = arith.constant 0 : index
    %67 = vector.load %arg18[%c0_55, %c0_56, %c0_57] : memref<1x16x16xf32, #tpu.memory_space<vmem>>, vector<1x16x16xf32>
    tpu.vector_store %arg18[%c0_55, %c0_56, %c0_57], %66 {strides = array<i32>} : memref<1x16x16xf32, #tpu.memory_space<vmem>>, vector<1x16x16xf32>,
    %c0_58 = arith.constant 0 : index
    %c0_59 = arith.constant 0 : index
    %c0_60 = arith.constant 0 : index
    %68 = vector.load %arg19[%c0_58, %c0_59, %c0_60] : memref<1x1x1xf32, #tpu.memory_space<vmem>>, vector<1x1x1xf32>
    tpu.vector_store %arg19[%c0_58, %c0_59, %c0_60], %54 {strides = array<i32>} : memref<1x1x1xf32, #tpu.memory_space<vmem>>, vector<1x1x1xf32>,
    return
  }
  func.func @transform_0(%arg0: i32) -> (i32, i32, i32, i32) {
    %c0_i32 = arith.constant 0 : i32
    %c0_i32_0 = arith.constant 0 : i32
    %c0_i32_1 = arith.constant 0 : i32
    %c0_i32_2 = arith.constant 0 : i32
    return %arg0, %c0_i32, %c0_i32_0, %c0_i32_1 : i32, i32, i32, i32
  }
  func.func @transform_1(%arg0: i32) -> (i32, i32, i32, i32) {
    %c0_i32 = arith.constant 0 : i32
    %c0_i32_0 = arith.constant 0 : i32
    %c0_i32_1 = arith.constant 0 : i32
    %c0_i32_2 = arith.constant 0 : i32
    return %arg0, %c0_i32, %c0_i32_0, %c0_i32_1 : i32, i32, i32, i32
  }
  func.func @transform_2(%arg0: i32) -> (i32, i32, i32, i32) {
    %c0_i32 = arith.constant 0 : i32
    %c0_i32_0 = arith.constant 0 : i32
    %c0_i32_1 = arith.constant 0 : i32
    %c0_i32_2 = arith.constant 0 : i32
    return %arg0, %c0_i32, %c0_i32_0, %c0_i32_1 : i32, i32, i32, i32
  }
  func.func @transform_3(%arg0: i32) -> (i32, i32, i32, i32) {
    %c0_i32 = arith.constant 0 : i32
    %c0_i32_0 = arith.constant 0 : i32
    %c0_i32_1 = arith.constant 0 : i32
    %c0_i32_2 = arith.constant 0 : i32
    return %arg0, %c0_i32, %c0_i32_0, %c0_i32_1 : i32, i32, i32, i32
  }
  func.func @transform_4(%arg0: i32) -> (i32, i32, i32) {
    %c0_i32 = arith.constant 0 : i32
    %c0_i32_0 = arith.constant 0 : i32
    %c0_i32_1 = arith.constant 0 : i32
    return %arg0, %c0_i32, %c0_i32_0 : i32, i32, i32
  }
  func.func @transform_5(%arg0: i32) -> (i32, i32, i32) {
    %c0_i32 = arith.constant 0 : i32
    %c0_i32_0 = arith.constant 0 : i32
    %c0_i32_1 = arith.constant 0 : i32
    return %arg0, %c0_i32, %c0_i32_0 : i32, i32, i32
  }
  func.func @transform_6(%arg0: i32) -> (i32, i32, i32) {
    %c0_i32 = arith.constant 0 : i32
    %c0_i32_0 = arith.constant 0 : i32
    %c0_i32_1 = arith.constant 0 : i32
    return %arg0, %c0_i32, %c0_i32_0 : i32, i32, i32
  }
  func.func @transform_7(%arg0: i32) -> (i32, i32, i32) {
    %c0_i32 = arith.constant 0 : i32
    %c0_i32_0 = arith.constant 0 : i32
    %c0_i32_1 = arith.constant 0 : i32
    return %arg0, %c0_i32, %c0_i32_0 : i32, i32, i32
  }
  func.func @transform_8(%arg0: i32) -> (i32, i32, i32) {
    %c0_i32 = arith.constant 0 : i32
    %c0_i32_0 = arith.constant 0 : i32
    %c0_i32_1 = arith.constant 0 : i32
    return %arg0, %c0_i32, %c0_i32_0 : i32, i32, i32
  }
  func.func @transform_9(%arg0: i32) -> (i32, i32, i32) {
    %c0_i32 = arith.constant 0 : i32
    %c0_i32_0 = arith.constant 0 : i32
    %c0_i32_1 = arith.constant 0 : i32
    return %arg0, %c0_i32, %c0_i32_0 : i32, i32, i32
  }
  func.func @transform_10(%arg0: i32) -> (i32, i32, i32) {
    %c0_i32 = arith.constant 0 : i32
    %c0_i32_0 = arith.constant 0 : i32
    %c0_i32_1 = arith.constant 0 : i32
    return %arg0, %c0_i32, %c0_i32_0 : i32, i32, i32
  }
  func.func @transform_11(%arg0: i32) -> i32 {
    %c0_i32 = arith.constant 0 : i32
    %c0_i32_0 = arith.constant 0 : i32
    return %c0_i32 : i32
  }
  func.func @transform_12(%arg0: i32) -> (i32, i32, i32) {
    %c0_i32 = arith.constant 0 : i32
    %c0_i32_0 = arith.constant 0 : i32
    %c0_i32_1 = arith.constant 0 : i32
    return %arg0, %c0_i32, %c0_i32_0 : i32, i32, i32
  }
  func.func @transform_13(%arg0: i32) -> (i32, i32, i32) {
    %c0_i32 = arith.constant 0 : i32
    %c0_i32_0 = arith.constant 0 : i32
    %c0_i32_1 = arith.constant 0 : i32
    return %arg0, %c0_i32, %c0_i32_0 : i32, i32, i32
  }
  func.func @transform_14(%arg0: i32) -> (i32, i32, i32) {
    %c0_i32 = arith.constant 0 : i32
    %c0_i32_0 = arith.constant 0 : i32
    %c0_i32_1 = arith.constant 0 : i32
    return %arg0, %c0_i32, %c0_i32_0 : i32, i32, i32
  }
  func.func @transform_15(%arg0: i32) -> (i32, i32, i32) {
    %c0_i32 = arith.constant 0 : i32
    %c0_i32_0 = arith.constant 0 : i32
    %c0_i32_1 = arith.constant 0 : i32
    return %arg0, %c0_i32, %c0_i32_0 : i32, i32, i32
  }
  func.func @transform_16(%arg0: i32) -> (i32, i32, i32) {
    %c0_i32 = arith.constant 0 : i32
    %c0_i32_0 = arith.constant 0 : i32
    %c0_i32_1 = arith.constant 0 : i32
    return %arg0, %c0_i32, %c0_i32_0 : i32, i32, i32
  }
  func.func @transform_17(%arg0: i32) -> (i32, i32, i32) {
    %c0_i32 = arith.constant 0 : i32
    %c0_i32_0 = arith.constant 0 : i32
    %c0_i32_1 = arith.constant 0 : i32
    return %arg0, %c0_i32, %c0_i32_0 : i32, i32, i32
  }
  func.func @transform_18(%arg0: i32) -> (i32, i32, i32) {
    %c0_i32 = arith.constant 0 : i32
    %c0_i32_0 = arith.constant 0 : i32
    %c0_i32_1 = arith.constant 0 : i32
    return %arg0, %c0_i32, %c0_i32_0 : i32, i32, i32
  }
}

</mosaic_0001>

<llo_original>
// kernel: custom-call.1
$region0: #{custom-call.1}
  %s0 = inlined_call_operand.hbm [shape: c64[2,4,16,16], index: 0, kind: input, shape index: {}]
  %s1 = inlined_call_operand.vmem [shape: f32[2,4,16,16], index: 1, kind: output, shape index: {}]
  %s2 = scalar_lea.hbm %s0, 2048
  $region1: #{custom-call.1} parent=0
    #allocation0 [shape = 's32[1]{0}', space=sflag, size = 0x4, scoped, tag = 'scoped memory for custom-call.1']
    %3 = vsyncpa [#allocation0], 0
    %s4 = sshll.u32 %s1, 4
    %s5 = int_to_ptr.vmem [resolvable:$true] %s4
    %7 = dma.hbm_to_vmem [thread:$0]  %s2, 2048, %s5, [#allocation0]
    %8 = dma.done [#allocation0], 2048
    %9 = vsyncpa [#allocation0], 1

// kernel: custom-call
$region0: #{custom-call}
  %s0 = inlined_call_operand.hbm [shape: c64[2,4,16,16], index: 0, kind: input, shape index: {}]
  %s1 = inlined_call_operand.vmem [shape: f32[2,4,16,16], index: 1, kind: output, shape index: {}]
  $region1: #{custom-call} parent=0
    #allocation0 [shape = 's32[1]{0}', space=sflag, size = 0x4, scoped, tag = 'scoped memory for custom-call']
    %2 = vsyncpa [#allocation0], 0
    %s3 = sshll.u32 %s1, 4
    %s4 = int_to_ptr.vmem [resolvable:$true] %s3
    %6 = dma.hbm_to_vmem [thread:$0]  %s0, 2048, %s4, [#allocation0]
    %7 = dma.done [#allocation0], 2048
    %8 = vsyncpa [#allocation0], 1

// kernel: conjugated_grad_forward.33
$region0: #{conjugated_grad_forward.33}
  #allocation0 [shape = 'u32[]', space=smem, size = 0x4, offset = 0x4, fixed_abs, tag = 'smem constant byte address 0x4 - core index']
  #allocation1 [shape = 'u32[144,128]{1,0:T(1,128)}', space=vmem, size = 0x12000, scoped, tag = 'internal scratch']
  %s0 = inlined_call_operand.vmem [shape: f32[2,16,16], index: 0, kind: input, shape index: {}]
  %s1 = inlined_call_operand.vmem [shape: f32[2,16,16], index: 1, kind: input, shape index: {}]
  %s2 = inlined_call_operand.vmem [shape: f32[2,1,1], index: 2, kind: output, shape index: {}]
  %s3 = sld [smem:[#allocation0]]
  $region41: #{conjugated_grad_forward.33} parent=0
    _
  %s5 = ssub.s32 1, %s3
  %s6 = scalar_select 0, %s5, %s3
  loop: start=0, step=1, limit=4
  $region2: #{conjugated_grad_forward.33} parent=0 // loop_pre_header
    _
  $region3: #{conjugated_grad_forward.33} parent=0 // loop_header
    %s8 = sphi 0, %s12
    %p9 = scmp.ge.s32.totalorder %s8, 4
    %s18 = sphi 0, %s20
    %s21 = sphi 0, %s18
    %s22 = sphi 0, %s21
    %s38 = sphi 0, %s22
    %s44 = sphi 0, %s46
    %s47 = sphi 0, %s44
    %s48 = sphi 0, %s47
    %s64 = sphi 0, %s48
    %s70 = sphi 0, %s72
    %s73 = sphi 0, %s70
    %s74 = sphi 0, %s73
    %s90 = sphi 0, %s74
  $region4: #{conjugated_grad_forward.33} parent=0 // loop_header_branch
    %11 = sbr.rel (%p9) target = $region8
  $region5: #{conjugated_grad_forward.33} parent=0 // loop_body
    %s13 = ssub.s32 %s8, 1
    %s14 = ssub.s32 %s8, 2
    %s15 = sadd.s32 %s8, 1
    %s16 = ssub.s32 %s8, %s15
    %p17 = scmp.eq.s32.totalorder %s16, 0
    %s19 = sadd.s32 %s18, 1
    %s20 = scalar_select %p17, %s18, %s19
    %p23 = pneg %p17
    %p24 = scmp.eq.s32.totalorder %s8, 1
    %p25 = por %p23, %p24
    %p26 = scmp.ne.s32.totalorder %s18, %s21
    %p27 = scmp.eq.s32.totalorder %s8, 0
    %p28 = por %p26, %p27
    %p29 = scmp.ne.s32.totalorder %s18, %s21
    %p30 = scmp.eq.s32.totalorder %s13, 1
    %p31 = por %p29, %p30
    %p32 = scmp.ne.s32.totalorder %s21, %s22
    %p33 = scmp.eq.s32.totalorder %s13, 0
    %p34 = por %p32, %p33
    %p35 = scmp.ne.s32.totalorder %s21, %s22
    %p36 = scmp.eq.s32.totalorder %s14, 1
    %p37 = por %p35, %p36
    %p39 = scmp.ne.s32.totalorder %s22, %s38
    %p40 = scmp.eq.s32.totalorder %s14, 0
    %p41 = por %p39, %p40
    %s42 = ssub.s32 %s8, %s15
    %p43 = scmp.eq.s32.totalorder %s42, 0
    %s45 = sadd.s32 %s44, 1
    %s46 = scalar_select %p43, %s44, %s45
    %p49 = pneg %p43
    %p50 = scmp.eq.s32.totalorder %s8, 1
    %p51 = por %p49, %p50
    %p52 = scmp.ne.s32.totalorder %s44, %s47
    %p53 = scmp.eq.s32.totalorder %s8, 0
    %p54 = por %p52, %p53
    %p55 = scmp.ne.s32.totalorder %s44, %s47
    %p56 = scmp.eq.s32.totalorder %s13, 1
    %p57 = por %p55, %p56
    %p58 = scmp.ne.s32.totalorder %s47, %s48
    %p59 = scmp.eq.s32.totalorder %s13, 0
    %p60 = por %p58, %p59
    %p61 = scmp.ne.s32.totalorder %s47, %s48
    %p62 = scmp.eq.s32.totalorder %s14, 1
    %p63 = por %p61, %p62
    %p65 = scmp.ne.s32.totalorder %s48, %s64
    %p66 = scmp.eq.s32.totalorder %s14, 0
    %p67 = por %p65, %p66
    %s68 = ssub.s32 %s8, %s15
    %p69 = scmp.eq.s32.totalorder %s68, 0
    %s71 = sadd.s32 %s70, 1
    %s72 = scalar_select %p69, %s70, %s71
    %p75 = pneg %p69
    %p76 = scmp.eq.s32.totalorder %s8, 1
    %p77 = por %p75, %p76
    %p78 = scmp.ne.s32.totalorder %s70, %s73
    %p79 = scmp.eq.s32.totalorder %s8, 0
    %p80 = por %p78, %p79
    %p81 = scmp.ne.s32.totalorder %s70, %s73
    %p82 = scmp.eq.s32.totalorder %s13, 1
    %p83 = por %p81, %p82
    %p84 = scmp.ne.s32.totalorder %s73, %s74
    %p85 = scmp.eq.s32.totalorder %s13, 0
    %p86 = por %p84, %p85
    %p87 = scmp.ne.s32.totalorder %s73, %s74
    %p88 = scmp.eq.s32.totalorder %s14, 1
    %p89 = por %p87, %p88
    %p91 = scmp.ne.s32.totalorder %s74, %s90
    %p92 = scmp.eq.s32.totalorder %s14, 0
    %p93 = por %p91, %p92
    %p94 = scmp.le.s32.totalorder 1, %s8
    %p95 = scmp.lt.s32.totalorder %s8, 3
    %p96 = pnand %p94, %p95
    %p97 = pneg %p96
    // Predicated region
    $region9: #{conjugated_grad_forward.33} parent=5 // pred_check
      _
    $region10: #{conjugated_grad_forward.33} parent=5 // pred_check_branch
      %99 = sbr.rel (%p96) target = $region12
    $region11: #{conjugated_grad_forward.33} parent=5 // pred_region
      %s100 = ssub.s32 %s8, 1
    $region12: #{conjugated_grad_forward.33} parent=5 // pred_fallthru
      _
    %p101 = scmp.lt.s32.totalorder %s8, 2
    // Predicated region
    $region13: #{conjugated_grad_forward.33} parent=5 // pred_check
      %p102 = pneg %p101
    $region14: #{conjugated_grad_forward.33} parent=5 // pred_check_branch
      %104 = sbr.rel (%p102) target = $region16
    $region15: #{conjugated_grad_forward.33} parent=5 // pred_region
      // Predicated region
      $region17: #{conjugated_grad_forward.33} parent=15 // pred_check
        %p105 = pneg %p28
      $region18: #{conjugated_grad_forward.33} parent=15 // pred_check_branch
        %107 = sbr.rel (%p105) target = $region20
      $region19: #{conjugated_grad_forward.33} parent=15 // pred_region
        %p108 = scmp.lt.s32.totalorder %s8, 1
        %s109 = scalar_select %p108, %s8, 1
        %s110 = smul.addr %s109, 2
        %s111 = smul.addr %s110, 8
        %s112 = scalar_lea.vmem %s0, %s111
      $region20: #{conjugated_grad_forward.33} parent=15 // pred_fallthru
        _
      // Predicated region
      $region21: #{conjugated_grad_forward.33} parent=15 // pred_check
        %p113 = pneg %p54
      $region22: #{conjugated_grad_forward.33} parent=15 // pred_check_branch
        %115 = sbr.rel (%p113) target = $region24
      $region23: #{conjugated_grad_forward.33} parent=15 // pred_region
        %p116 = scmp.lt.s32.totalorder %s8, 1
        %s117 = scalar_select %p116, %s8, 1
        %s118 = smul.addr %s117, 2
        %s119 = smul.addr %s118, 8
        %s120 = scalar_lea.vmem %s1, %s119
      $region24: #{conjugated_grad_forward.33} parent=15 // pred_fallthru
        _
    $region16: #{conjugated_grad_forward.33} parent=5 // pred_fallthru
      _
    %p121 = scmp.le.s32.totalorder 1, %s8
    %p122 = scmp.lt.s32.totalorder %s8, 3
    %p123 = pnand %p121, %p122
    %p124 = pneg %p123
    // Predicated region
    $region25: #{conjugated_grad_forward.33} parent=5 // pred_check
      _
    $region26: #{conjugated_grad_forward.33} parent=5 // pred_check_branch
      %126 = sbr.rel (%p123) target = $region28
    $region27: #{conjugated_grad_forward.33} parent=5 // pred_region
      %s127 = ssub.s32 %s8, 1
      %p128 = scmp.lt.s32.totalorder %s13, 1
      %s129 = scalar_select %p128, %s13, 1
      %s130 = smul.addr %s129, 2
      %s131 = smul.addr %s130, 8
      %s132 = scalar_lea.vmem %s0, %s131
      %p133 = pneg %p34
      %p134 = pneg %p31
      %p135 = scmp.lt.s32.totalorder %s13, 1
      %s136 = scalar_select %p135, %s13, 1
      %s137 = smul.addr %s136, 2
      %s138 = smul.addr %s137, 8
      %s139 = scalar_lea.vmem %s1, %s138
      %p140 = pneg %p60
      %p141 = pneg %p57
      %p142 = pneg %p86
      %p143 = pneg %p83
      %p144 = scmp.lt.s32.totalorder %s13, 1
      %s145 = scalar_select %p144, %s13, 1
      %s146 = scalar_lea.vmem %s2, %s145
      %p147 = scmp.lt.s32.totalorder %s13, 1
      %s148 = scalar_select %p147, %s13, 1
      %s149 = smul.addr %s148, 2
      %s150 = smul.addr %s149, 8
      %s151 = scalar_lea.vmem %s0, %s150
      %p152 = scmp.lt.s32.totalorder %s13, 1
      %s153 = scalar_select %p152, %s13, 1
      %s154 = smul.addr %s153, 2
      %s155 = smul.addr %s154, 8
      %s156 = scalar_lea.vmem %s1, %s155
      %p157 = scmp.lt.s32.totalorder %s13, 1
      %s158 = scalar_select %p157, %s13, 1
      %s159 = scalar_lea.vmem %s2, %s158
      %v160 = vld [vmem:[%s151] sm:$0xff]
      %v161 = vld [vmem:[%s151 + $0x8] sm:$0xff]
      %v162 = vld [vmem:[%s156] sm:$0xff]
      %v163 = vld [vmem:[%s156 + $0x8] sm:$0xff]
      %v164 = vmul.f32 %v160, %v160
      %v165 = vmul.f32 %v161, %v161
      %v166 = vmul.f32 %v162, %v162
      %v167 = vmul.f32 %v163, %v163
      %v168 = vadd.f32 %v164, %v166
      %v169 = vadd.f32 %v165, %v167
      %vm170 = vcmask 130048
      %v171 = vsel %vm170, %v168, 0.0
      %v172 = vsel %vm170, %v169, 0.0
      %v173 = vadd.f32 %v171, %v172
      %174 = vadd.xlane.f32.xlu0 %v173
      %v175 = vpop.xlane.xlu0 %174
      %v176 = vrot.slane %v175, 4
      %v177 = vadd.f32 %v175, %v176
      %v178 = vrot.slane %v177, 2
      %v179 = vadd.f32 %v177, %v178
      %v180 = vrot.slane %v179, 1
      %v181 = vadd.f32 %v179, %v180
      %s182 = vtos %v181
      %v183 = vstv %s182
      %vm184 = vcmask 0
      %185 = vst.msk [vmem:[%s159] sm:$0x1] %vm184, %v183
      %p186 = scmp.lt.s32.totalorder %s13, 1
      %s187 = scalar_select %p186, %s13, 1
      %s188 = scalar_lea.vmem %s2, %s187
      // Predicated region
      $region29: #{conjugated_grad_forward.33} parent=27 // pred_check
        %p189 = pneg %p83
      $region30: #{conjugated_grad_forward.33} parent=27 // pred_check_branch
        %191 = sbr.rel (%p189) target = $region32
      $region31: #{conjugated_grad_forward.33} parent=27 // pred_region
        _
      $region32: #{conjugated_grad_forward.33} parent=27 // pred_fallthru
        _
    $region28: #{conjugated_grad_forward.33} parent=5 // pred_fallthru
      _
    %p192 = scmp.le.s32.totalorder 2, %s8
    // Predicated region
    $region33: #{conjugated_grad_forward.33} parent=5 // pred_check
      %p193 = pneg %p192
    $region34: #{conjugated_grad_forward.33} parent=5 // pred_check_branch
      %195 = sbr.rel (%p193) target = $region36
    $region35: #{conjugated_grad_forward.33} parent=5 // pred_region
      %s196 = ssub.s32 %s8, 2
      // Predicated region
      $region37: #{conjugated_grad_forward.33} parent=35 // pred_check
        %p197 = pneg %p89
      $region38: #{conjugated_grad_forward.33} parent=35 // pred_check_branch
        %199 = sbr.rel (%p197) target = $region40
      $region39: #{conjugated_grad_forward.33} parent=35 // pred_region
        %p200 = scmp.lt.s32.totalorder %s14, 1
        %s201 = scalar_select %p200, %s14, 1
        %s202 = scalar_lea.vmem %s2, %s201
      $region40: #{conjugated_grad_forward.33} parent=35 // pred_fallthru
        _
    $region36: #{conjugated_grad_forward.33} parent=5 // pred_fallthru
      _
  $region6: #{conjugated_grad_forward.33} parent=0 // loop_footer
    %s12 = sadd.s32 1, %s8
  $region7: #{conjugated_grad_forward.33} parent=0 // loop_footer_branch
    %7 = sbr.rel target = $region3
  $region8: #{conjugated_grad_forward.33} parent=0 // loop_exit
    _

// kernel: conjugated_grad_forward.31
$region0: #{conjugated_grad_forward.31}
  #allocation0 [shape = 'u32[]', space=smem, size = 0x4, offset = 0x4, fixed_abs, tag = 'smem constant byte address 0x4 - core index']
  #allocation1 [shape = 'u32[144,128]{1,0:T(1,128)}', space=vmem, size = 0x12000, scoped, tag = 'internal scratch']
  %s0 = inlined_call_operand.vmem [shape: f32[2,16,16], index: 0, kind: input, shape index: {}]
  %s1 = inlined_call_operand.vmem [shape: f32[2,16,16], index: 1, kind: input, shape index: {}]
  %s2 = inlined_call_operand.vmem [shape: f32[2,4,16,16], index: 2, kind: input, shape index: {}]
  %s3 = inlined_call_operand.vmem [shape: f32[2,4,16,16], index: 3, kind: input, shape index: {}]
  %s4 = inlined_call_operand.vmem [shape: f32[2,4,16,16], index: 4, kind: output, shape index: {0}]
  %s5 = inlined_call_operand.vmem [shape: f32[2,4,16,16], index: 5, kind: output, shape index: {1}]
  %6 = xla_tuple %s4, %s5
  %s7 = sld [smem:[#allocation0]]
  $region57: #{conjugated_grad_forward.31} parent=0
    _
  %s9 = ssub.s32 1, %s7
  %s10 = scalar_select 0, %s9, %s7
  loop: start=0, step=1, limit=4
  $region2: #{conjugated_grad_forward.31} parent=0 // loop_pre_header
    _
  $region3: #{conjugated_grad_forward.31} parent=0 // loop_header
    %s12 = sphi 0, %s16
    %p13 = scmp.ge.s32.totalorder %s12, 4
    %s22 = sphi 0, %s24
    %s25 = sphi 0, %s22
    %s26 = sphi 0, %s25
    %s42 = sphi 0, %s26
    %s48 = sphi 0, %s50
    %s51 = sphi 0, %s48
    %s52 = sphi 0, %s51
    %s68 = sphi 0, %s52
    %s74 = sphi 0, %s76
    %s77 = sphi 0, %s74
    %s78 = sphi 0, %s77
    %s94 = sphi 0, %s78
    %s100 = sphi 0, %s102
    %s103 = sphi 0, %s100
    %s104 = sphi 0, %s103
    %s120 = sphi 0, %s104
    %s126 = sphi 0, %s128
    %s129 = sphi 0, %s126
    %s130 = sphi 0, %s129
    %s146 = sphi 0, %s130
    %s152 = sphi 0, %s154
    %s155 = sphi 0, %s152
    %s156 = sphi 0, %s155
    %s172 = sphi 0, %s156
  $region4: #{conjugated_grad_forward.31} parent=0 // loop_header_branch
    %15 = sbr.rel (%p13) target = $region8
  $region5: #{conjugated_grad_forward.31} parent=0 // loop_body
    %s17 = ssub.s32 %s12, 1
    %s18 = ssub.s32 %s12, 2
    %s19 = sadd.s32 %s12, 1
    %s20 = ssub.s32 %s12, %s19
    %p21 = scmp.eq.s32.totalorder %s20, 0
    %s23 = sadd.s32 %s22, 1
    %s24 = scalar_select %p21, %s22, %s23
    %p27 = pneg %p21
    %p28 = scmp.eq.s32.totalorder %s12, 1
    %p29 = por %p27, %p28
    %p30 = scmp.ne.s32.totalorder %s22, %s25
    %p31 = scmp.eq.s32.totalorder %s12, 0
    %p32 = por %p30, %p31
    %p33 = scmp.ne.s32.totalorder %s22, %s25
    %p34 = scmp.eq.s32.totalorder %s17, 1
    %p35 = por %p33, %p34
    %p36 = scmp.ne.s32.totalorder %s25, %s26
    %p37 = scmp.eq.s32.totalorder %s17, 0
    %p38 = por %p36, %p37
    %p39 = scmp.ne.s32.totalorder %s25, %s26
    %p40 = scmp.eq.s32.totalorder %s18, 1
    %p41 = por %p39, %p40
    %p43 = scmp.ne.s32.totalorder %s26, %s42
    %p44 = scmp.eq.s32.totalorder %s18, 0
    %p45 = por %p43, %p44
    %s46 = ssub.s32 %s12, %s19
    %p47 = scmp.eq.s32.totalorder %s46, 0
    %s49 = sadd.s32 %s48, 1
    %s50 = scalar_select %p47, %s48, %s49
    %p53 = pneg %p47
    %p54 = scmp.eq.s32.totalorder %s12, 1
    %p55 = por %p53, %p54
    %p56 = scmp.ne.s32.totalorder %s48, %s51
    %p57 = scmp.eq.s32.totalorder %s12, 0
    %p58 = por %p56, %p57
    %p59 = scmp.ne.s32.totalorder %s48, %s51
    %p60 = scmp.eq.s32.totalorder %s17, 1
    %p61 = por %p59, %p60
    %p62 = scmp.ne.s32.totalorder %s51, %s52
    %p63 = scmp.eq.s32.totalorder %s17, 0
    %p64 = por %p62, %p63
    %p65 = scmp.ne.s32.totalorder %s51, %s52
    %p66 = scmp.eq.s32.totalorder %s18, 1
    %p67 = por %p65, %p66
    %p69 = scmp.ne.s32.totalorder %s52, %s68
    %p70 = scmp.eq.s32.totalorder %s18, 0
    %p71 = por %p69, %p70
    %s72 = ssub.s32 %s12, %s19
    %p73 = scmp.eq.s32.totalorder %s72, 0
    %s75 = sadd.s32 %s74, 1
    %s76 = scalar_select %p73, %s74, %s75
    %p79 = pneg %p73
    %p80 = scmp.eq.s32.totalorder %s12, 1
    %p81 = por %p79, %p80
    %p82 = scmp.ne.s32.totalorder %s74, %s77
    %p83 = scmp.eq.s32.totalorder %s12, 0
    %p84 = por %p82, %p83
    %p85 = scmp.ne.s32.totalorder %s74, %s77
    %p86 = scmp.eq.s32.totalorder %s17, 1
    %p87 = por %p85, %p86
    %p88 = scmp.ne.s32.totalorder %s77, %s78
    %p89 = scmp.eq.s32.totalorder %s17, 0
    %p90 = por %p88, %p89
    %p91 = scmp.ne.s32.totalorder %s77, %s78
    %p92 = scmp.eq.s32.totalorder %s18, 1
    %p93 = por %p91, %p92
    %p95 = scmp.ne.s32.totalorder %s78, %s94
    %p96 = scmp.eq.s32.totalorder %s18, 0
    %p97 = por %p95, %p96
    %s98 = ssub.s32 %s12, %s19
    %p99 = scmp.eq.s32.totalorder %s98, 0
    %s101 = sadd.s32 %s100, 1
    %s102 = scalar_select %p99, %s100, %s101
    %p105 = pneg %p99
    %p106 = scmp.eq.s32.totalorder %s12, 1
    %p107 = por %p105, %p106
    %p108 = scmp.ne.s32.totalorder %s100, %s103
    %p109 = scmp.eq.s32.totalorder %s12, 0
    %p110 = por %p108, %p109
    %p111 = scmp.ne.s32.totalorder %s100, %s103
    %p112 = scmp.eq.s32.totalorder %s17, 1
    %p113 = por %p111, %p112
    %p114 = scmp.ne.s32.totalorder %s103, %s104
    %p115 = scmp.eq.s32.totalorder %s17, 0
    %p116 = por %p114, %p115
    %p117 = scmp.ne.s32.totalorder %s103, %s104
    %p118 = scmp.eq.s32.totalorder %s18, 1
    %p119 = por %p117, %p118
    %p121 = scmp.ne.s32.totalorder %s104, %s120
    %p122 = scmp.eq.s32.totalorder %s18, 0
    %p123 = por %p121, %p122
    %s124 = ssub.s32 %s12, %s19
    %p125 = scmp.eq.s32.totalorder %s124, 0
    %s127 = sadd.s32 %s126, 1
    %s128 = scalar_select %p125, %s126, %s127
    %p131 = pneg %p125
    %p132 = scmp.eq.s32.totalorder %s12, 1
    %p133 = por %p131, %p132
    %p134 = scmp.ne.s32.totalorder %s126, %s129
    %p135 = scmp.eq.s32.totalorder %s12, 0
    %p136 = por %p134, %p135
    %p137 = scmp.ne.s32.totalorder %s126, %s129
    %p138 = scmp.eq.s32.totalorder %s17, 1
    %p139 = por %p137, %p138
    %p140 = scmp.ne.s32.totalorder %s129, %s130
    %p141 = scmp.eq.s32.totalorder %s17, 0
    %p142 = por %p140, %p141
    %p143 = scmp.ne.s32.totalorder %s129, %s130
    %p144 = scmp.eq.s32.totalorder %s18, 1
    %p145 = por %p143, %p144
    %p147 = scmp.ne.s32.totalorder %s130, %s146
    %p148 = scmp.eq.s32.totalorder %s18, 0
    %p149 = por %p147, %p148
    %s150 = ssub.s32 %s12, %s19
    %p151 = scmp.eq.s32.totalorder %s150, 0
    %s153 = sadd.s32 %s152, 1
    %s154 = scalar_select %p151, %s152, %s153
    %p157 = pneg %p151
    %p158 = scmp.eq.s32.totalorder %s12, 1
    %p159 = por %p157, %p158
    %p160 = scmp.ne.s32.totalorder %s152, %s155
    %p161 = scmp.eq.s32.totalorder %s12, 0
    %p162 = por %p160, %p161
    %p163 = scmp.ne.s32.totalorder %s152, %s155
    %p164 = scmp.eq.s32.totalorder %s17, 1
    %p165 = por %p163, %p164
    %p166 = scmp.ne.s32.totalorder %s155, %s156
    %p167 = scmp.eq.s32.totalorder %s17, 0
    %p168 = por %p166, %p167
    %p169 = scmp.ne.s32.totalorder %s155, %s156
    %p170 = scmp.eq.s32.totalorder %s18, 1
    %p171 = por %p169, %p170
    %p173 = scmp.ne.s32.totalorder %s156, %s172
    %p174 = scmp.eq.s32.totalorder %s18, 0
    %p175 = por %p173, %p174
    %p176 = scmp.le.s32.totalorder 1, %s12
    %p177 = scmp.lt.s32.totalorder %s12, 3
    %p178 = pnand %p176, %p177
    %p179 = pneg %p178
    // Predicated region
    $region9: #{conjugated_grad_forward.31} parent=5 // pred_check
      _
    $region10: #{conjugated_grad_forward.31} parent=5 // pred_check_branch
      %181 = sbr.rel (%p178) target = $region12
    $region11: #{conjugated_grad_forward.31} parent=5 // pred_region
      %s182 = ssub.s32 %s12, 1
    $region12: #{conjugated_grad_forward.31} parent=5 // pred_fallthru
      _
    %p183 = scmp.lt.s32.totalorder %s12, 2
    // Predicated region
    $region13: #{conjugated_grad_forward.31} parent=5 // pred_check
      %p184 = pneg %p183
    $region14: #{conjugated_grad_forward.31} parent=5 // pred_check_branch
      %186 = sbr.rel (%p184) target = $region16
    $region15: #{conjugated_grad_forward.31} parent=5 // pred_region
      // Predicated region
      $region17: #{conjugated_grad_forward.31} parent=15 // pred_check
        %p187 = pneg %p32
      $region18: #{conjugated_grad_forward.31} parent=15 // pred_check_branch
        %189 = sbr.rel (%p187) target = $region20
      $region19: #{conjugated_grad_forward.31} parent=15 // pred_region
        %p190 = scmp.lt.s32.totalorder %s12, 1
        %s191 = scalar_select %p190, %s12, 1
        %s192 = smul.addr %s191, 2
        %s193 = smul.addr %s192, 8
        %s194 = scalar_lea.vmem %s0, %s193
      $region20: #{conjugated_grad_forward.31} parent=15 // pred_fallthru
        _
      // Predicated region
      $region21: #{conjugated_grad_forward.31} parent=15 // pred_check
        %p195 = pneg %p58
      $region22: #{conjugated_grad_forward.31} parent=15 // pred_check_branch
        %197 = sbr.rel (%p195) target = $region24
      $region23: #{conjugated_grad_forward.31} parent=15 // pred_region
        %p198 = scmp.lt.s32.totalorder %s12, 1
        %s199 = scalar_select %p198, %s12, 1
        %s200 = smul.addr %s199, 2
        %s201 = smul.addr %s200, 8
        %s202 = scalar_lea.vmem %s1, %s201
      $region24: #{conjugated_grad_forward.31} parent=15 // pred_fallthru
        _
      // Predicated region
      $region25: #{conjugated_grad_forward.31} parent=15 // pred_check
        %p203 = pneg %p84
      $region26: #{conjugated_grad_forward.31} parent=15 // pred_check_branch
        %205 = sbr.rel (%p203) target = $region28
      $region27: #{conjugated_grad_forward.31} parent=15 // pred_region
        %p206 = scmp.lt.s32.totalorder %s12, 1
        %s207 = scalar_select %p206, %s12, 1
        %s208 = smul.addr %s207, 8
        %s209 = smul.addr %s208, 8
        %s210 = scalar_lea.vmem %s2, %s209
      $region28: #{conjugated_grad_forward.31} parent=15 // pred_fallthru
        _
      // Predicated region
      $region29: #{conjugated_grad_forward.31} parent=15 // pred_check
        %p211 = pneg %p110
      $region30: #{conjugated_grad_forward.31} parent=15 // pred_check_branch
        %213 = sbr.rel (%p211) target = $region32
      $region31: #{conjugated_grad_forward.31} parent=15 // pred_region
        %p214 = scmp.lt.s32.totalorder %s12, 1
        %s215 = scalar_select %p214, %s12, 1
        %s216 = smul.addr %s215, 8
        %s217 = smul.addr %s216, 8
        %s218 = scalar_lea.vmem %s3, %s217
      $region32: #{conjugated_grad_forward.31} parent=15 // pred_fallthru
        _
    $region16: #{conjugated_grad_forward.31} parent=5 // pred_fallthru
      _
    %p219 = scmp.le.s32.totalorder 1, %s12
    %p220 = scmp.lt.s32.totalorder %s12, 3
    %p221 = pnand %p219, %p220
    %p222 = pneg %p221
    // Predicated region
    $region33: #{conjugated_grad_forward.31} parent=5 // pred_check
      _
    $region34: #{conjugated_grad_forward.31} parent=5 // pred_check_branch
      %224 = sbr.rel (%p221) target = $region36
    $region35: #{conjugated_grad_forward.31} parent=5 // pred_region
      %s225 = ssub.s32 %s12, 1
      %p226 = scmp.lt.s32.totalorder %s17, 1
      %s227 = scalar_select %p226, %s17, 1
      %s228 = smul.addr %s227, 2
      %s229 = smul.addr %s228, 8
      %s230 = scalar_lea.vmem %s0, %s229
      %p231 = pneg %p38
      %p232 = pneg %p35
      %p233 = scmp.lt.s32.totalorder %s17, 1
      %s234 = scalar_select %p233, %s17, 1
      %s235 = smul.addr %s234, 2
      %s236 = smul.addr %s235, 8
      %s237 = scalar_lea.vmem %s1, %s236
      %p238 = pneg %p64
      %p239 = pneg %p61
      %p240 = scmp.lt.s32.totalorder %s17, 1
      %s241 = scalar_select %p240, %s17, 1
      %s242 = smul.addr %s241, 8
      %s243 = smul.addr %s242, 8
      %s244 = scalar_lea.vmem %s2, %s243
      %p245 = pneg %p90
      %p246 = pneg %p87
      %p247 = scmp.lt.s32.totalorder %s17, 1
      %s248 = scalar_select %p247, %s17, 1
      %s249 = smul.addr %s248, 8
      %s250 = smul.addr %s249, 8
      %s251 = scalar_lea.vmem %s3, %s250
      %p252 = pneg %p116
      %p253 = pneg %p113
      %p254 = pneg %p142
      %p255 = pneg %p139
      %p256 = scmp.lt.s32.totalorder %s17, 1
      %s257 = scalar_select %p256, %s17, 1
      %s258 = smul.addr %s257, 8
      %s259 = smul.addr %s258, 8
      %s260 = scalar_lea.vmem %s4, %s259
      %p261 = pneg %p168
      %p262 = pneg %p165
      %p263 = scmp.lt.s32.totalorder %s17, 1
      %s264 = scalar_select %p263, %s17, 1
      %s265 = smul.addr %s264, 8
      %s266 = smul.addr %s265, 8
      %s267 = scalar_lea.vmem %s5, %s266
      %p268 = scmp.lt.s32.totalorder %s17, 1
      %s269 = scalar_select %p268, %s17, 1
      %s270 = smul.addr %s269, 2
      %s271 = smul.addr %s270, 8
      %s272 = scalar_lea.vmem %s0, %s271
      %p273 = scmp.lt.s32.totalorder %s17, 1
      %s274 = scalar_select %p273, %s17, 1
      %s275 = smul.addr %s274, 2
      %s276 = smul.addr %s275, 8
      %s277 = scalar_lea.vmem %s1, %s276
      %p278 = scmp.lt.s32.totalorder %s17, 1
      %s279 = scalar_select %p278, %s17, 1
      %s280 = smul.addr %s279, 8
      %s281 = smul.addr %s280, 8
      %s282 = scalar_lea.vmem %s2, %s281
      %p283 = scmp.lt.s32.totalorder %s17, 1
      %s284 = scalar_select %p283, %s17, 1
      %s285 = smul.addr %s284, 8
      %s286 = smul.addr %s285, 8
      %s287 = scalar_lea.vmem %s3, %s286
      %p288 = scmp.lt.s32.totalorder %s17, 1
      %s289 = scalar_select %p288, %s17, 1
      %s290 = smul.addr %s289, 8
      %s291 = smul.addr %s290, 8
      %s292 = scalar_lea.vmem %s4, %s291
      %p293 = scmp.lt.s32.totalorder %s17, 1
      %s294 = scalar_select %p293, %s17, 1
      %s295 = smul.addr %s294, 8
      %s296 = smul.addr %s295, 8
      %s297 = scalar_lea.vmem %s5, %s296
      %v298 = vld [vmem:[%s272] sm:$0xff]
      %v299 = vld [vmem:[%s272 + $0x8] sm:$0xff]
      %v300 = vld [vmem:[%s277] sm:$0xff]
      %v301 = vld [vmem:[%s277 + $0x8] sm:$0xff]
      %v302 = vld [vmem:[%s282] sm:$0xff]
      %v303 = vld [vmem:[%s282 + $0x8] sm:$0xff]
      %v304 = vld [vmem:[%s282 + $0x10] sm:$0xff]
      %v305 = vld [vmem:[%s282 + $0x18] sm:$0xff]
      %v306 = vld [vmem:[%s282 + $0x20] sm:$0xff]
      %v307 = vld [vmem:[%s282 + $0x28] sm:$0xff]
      %v308 = vld [vmem:[%s282 + $0x30] sm:$0xff]
      %v309 = vld [vmem:[%s282 + $0x38] sm:$0xff]
      %v310 = vld [vmem:[%s287] sm:$0xff]
      %v311 = vld [vmem:[%s287 + $0x8] sm:$0xff]
      %v312 = vld [vmem:[%s287 + $0x10] sm:$0xff]
      %v313 = vld [vmem:[%s287 + $0x18] sm:$0xff]
      %v314 = vld [vmem:[%s287 + $0x20] sm:$0xff]
      %v315 = vld [vmem:[%s287 + $0x28] sm:$0xff]
      %v316 = vld [vmem:[%s287 + $0x30] sm:$0xff]
      %v317 = vld [vmem:[%s287 + $0x38] sm:$0xff]
      %v318 = vmul.f32 %v302, %v298
      %v319 = vmul.f32 %v303, %v299
      %v320 = vmul.f32 %v304, %v298
      %v321 = vmul.f32 %v305, %v299
      %v322 = vmul.f32 %v306, %v298
      %v323 = vmul.f32 %v307, %v299
      %v324 = vmul.f32 %v308, %v298
      %v325 = vmul.f32 %v309, %v299
      %v326 = vmul.f32 %v310, %v300
      %v327 = vmul.f32 %v311, %v301
      %v328 = vmul.f32 %v312, %v300
      %v329 = vmul.f32 %v313, %v301
      %v330 = vmul.f32 %v314, %v300
      %v331 = vmul.f32 %v315, %v301
      %v332 = vmul.f32 %v316, %v300
      %v333 = vmul.f32 %v317, %v301
      %v334 = vsub.f32 %v318, %v326
      %v335 = vsub.f32 %v319, %v327
      %v336 = vsub.f32 %v320, %v328
      %v337 = vsub.f32 %v321, %v329
      %v338 = vsub.f32 %v322, %v330
      %v339 = vsub.f32 %v323, %v331
      %v340 = vsub.f32 %v324, %v332
      %v341 = vsub.f32 %v325, %v333
      %vm342 = vcmask 130048
      %343 = vst.msk [vmem:[%s292] sm:$0xff] %vm342, %v334
      %344 = vst.msk [vmem:[%s292 + $0x8] sm:$0xff] %vm342, %v335
      %345 = vst.msk [vmem:[%s292 + $0x10] sm:$0xff] %vm342, %v336
      %346 = vst.msk [vmem:[%s292 + $0x18] sm:$0xff] %vm342, %v337
      %347 = vst.msk [vmem:[%s292 + $0x20] sm:$0xff] %vm342, %v338
      %348 = vst.msk [vmem:[%s292 + $0x28] sm:$0xff] %vm342, %v339
      %349 = vst.msk [vmem:[%s292 + $0x30] sm:$0xff] %vm342, %v340
      %350 = vst.msk [vmem:[%s292 + $0x38] sm:$0xff] %vm342, %v341
      %v351 = vmul.f32 %v302, %v300
      %v352 = vmul.f32 %v303, %v301
      %v353 = vmul.f32 %v304, %v300
      %v354 = vmul.f32 %v305, %v301
      %v355 = vmul.f32 %v306, %v300
      %v356 = vmul.f32 %v307, %v301
      %v357 = vmul.f32 %v308, %v300
      %v358 = vmul.f32 %v309, %v301
      %v359 = vmul.f32 %v310, %v298
      %v360 = vmul.f32 %v311, %v299
      %v361 = vmul.f32 %v312, %v298
      %v362 = vmul.f32 %v313, %v299
      %v363 = vmul.f32 %v314, %v298
      %v364 = vmul.f32 %v315, %v299
      %v365 = vmul.f32 %v316, %v298
      %v366 = vmul.f32 %v317, %v299
      %v367 = vadd.f32 %v351, %v359
      %v368 = vadd.f32 %v352, %v360
      %v369 = vadd.f32 %v353, %v361
      %v370 = vadd.f32 %v354, %v362
      %v371 = vadd.f32 %v355, %v363
      %v372 = vadd.f32 %v356, %v364
      %v373 = vadd.f32 %v357, %v365
      %v374 = vadd.f32 %v358, %v366
      %375 = vst.msk [vmem:[%s297] sm:$0xff] %vm342, %v367
      %376 = vst.msk [vmem:[%s297 + $0x8] sm:$0xff] %vm342, %v368
      %377 = vst.msk [vmem:[%s297 + $0x10] sm:$0xff] %vm342, %v369
      %378 = vst.msk [vmem:[%s297 + $0x18] sm:$0xff] %vm342, %v370
      %379 = vst.msk [vmem:[%s297 + $0x20] sm:$0xff] %vm342, %v371
      %380 = vst.msk [vmem:[%s297 + $0x28] sm:$0xff] %vm342, %v372
      %381 = vst.msk [vmem:[%s297 + $0x30] sm:$0xff] %vm342, %v373
      %382 = vst.msk [vmem:[%s297 + $0x38] sm:$0xff] %vm342, %v374
      %p383 = scmp.lt.s32.totalorder %s17, 1
      %s384 = scalar_select %p383, %s17, 1
      %s385 = smul.addr %s384, 8
      %s386 = smul.addr %s385, 8
      %s387 = scalar_lea.vmem %s4, %s386
      %p388 = scmp.lt.s32.totalorder %s17, 1
      %s389 = scalar_select %p388, %s17, 1
      %s390 = smul.addr %s389, 8
      %s391 = smul.addr %s390, 8
      %s392 = scalar_lea.vmem %s5, %s391
      // Predicated region
      $region37: #{conjugated_grad_forward.31} parent=35 // pred_check
        %p393 = pneg %p139
      $region38: #{conjugated_grad_forward.31} parent=35 // pred_check_branch
        %395 = sbr.rel (%p393) target = $region40
      $region39: #{conjugated_grad_forward.31} parent=35 // pred_region
        _
      $region40: #{conjugated_grad_forward.31} parent=35 // pred_fallthru
        _
      // Predicated region
      $region41: #{conjugated_grad_forward.31} parent=35 // pred_check
        %p396 = pneg %p165
      $region42: #{conjugated_grad_forward.31} parent=35 // pred_check_branch
        %398 = sbr.rel (%p396) target = $region44
      $region43: #{conjugated_grad_forward.31} parent=35 // pred_region
        _
      $region44: #{conjugated_grad_forward.31} parent=35 // pred_fallthru
        _
    $region36: #{conjugated_grad_forward.31} parent=5 // pred_fallthru
      _
    %p399 = scmp.le.s32.totalorder 2, %s12
    // Predicated region
    $region45: #{conjugated_grad_forward.31} parent=5 // pred_check
      %p400 = pneg %p399
    $region46: #{conjugated_grad_forward.31} parent=5 // pred_check_branch
      %402 = sbr.rel (%p400) target = $region48
    $region47: #{conjugated_grad_forward.31} parent=5 // pred_region
      %s403 = ssub.s32 %s12, 2
      // Predicated region
      $region49: #{conjugated_grad_forward.31} parent=47 // pred_check
        %p404 = pneg %p145
      $region50: #{conjugated_grad_forward.31} parent=47 // pred_check_branch
        %406 = sbr.rel (%p404) target = $region52
      $region51: #{conjugated_grad_forward.31} parent=47 // pred_region
        %p407 = scmp.lt.s32.totalorder %s18, 1
        %s408 = scalar_select %p407, %s18, 1
        %s409 = smul.addr %s408, 8
        %s410 = smul.addr %s409, 8
        %s411 = scalar_lea.vmem %s4, %s410
      $region52: #{conjugated_grad_forward.31} parent=47 // pred_fallthru
        _
      // Predicated region
      $region53: #{conjugated_grad_forward.31} parent=47 // pred_check
        %p412 = pneg %p171
      $region54: #{conjugated_grad_forward.31} parent=47 // pred_check_branch
        %414 = sbr.rel (%p412) target = $region56
      $region55: #{conjugated_grad_forward.31} parent=47 // pred_region
        %p415 = scmp.lt.s32.totalorder %s18, 1
        %s416 = scalar_select %p415, %s18, 1
        %s417 = smul.addr %s416, 8
        %s418 = smul.addr %s417, 8
        %s419 = scalar_lea.vmem %s5, %s418
      $region56: #{conjugated_grad_forward.31} parent=47 // pred_fallthru
        _
    $region48: #{conjugated_grad_forward.31} parent=5 // pred_fallthru
      _
  $region6: #{conjugated_grad_forward.31} parent=0 // loop_footer
    %s16 = sadd.s32 1, %s12
  $region7: #{conjugated_grad_forward.31} parent=0 // loop_footer_branch
    %11 = sbr.rel target = $region3
  $region8: #{conjugated_grad_forward.31} parent=0 // loop_exit
    _

// kernel: conjugated_grad_forward.32
$region0: #{conjugated_grad_forward.32}
  #allocation0 [shape = 'u32[]', space=smem, size = 0x4, offset = 0x4, fixed_abs, tag = 'smem constant byte address 0x4 - core index']
  #allocation1 [shape = 'u32[144,128]{1,0:T(1,128)}', space=vmem, size = 0x12000, scoped, tag = 'internal scratch']
  %s0 = inlined_call_operand.vmem [shape: f32[2,4,16,16], index: 0, kind: input, shape index: {}]
  %s1 = inlined_call_operand.vmem [shape: f32[2,4,16,16], index: 1, kind: input, shape index: {}]
  %s2 = inlined_call_operand.vmem [shape: f32[2,16,16], index: 2, kind: input, shape index: {}]
  %s3 = inlined_call_operand.vmem [shape: f32[2,4,16,16], index: 3, kind: output, shape index: {0}]
  %s4 = inlined_call_operand.vmem [shape: f32[2,4,16,16], index: 4, kind: output, shape index: {1}]
  %5 = xla_tuple %s3, %s4
  %s6 = sld [smem:[#allocation0]]
  $region53: #{conjugated_grad_forward.32} parent=0
    _
  %s8 = ssub.s32 1, %s6
  %s9 = scalar_select 0, %s8, %s6
  loop: start=0, step=1, limit=4
  $region2: #{conjugated_grad_forward.32} parent=0 // loop_pre_header
    _
  $region3: #{conjugated_grad_forward.32} parent=0 // loop_header
    %s11 = sphi 0, %s15
    %p12 = scmp.ge.s32.totalorder %s11, 4
    %s21 = sphi 0, %s23
    %s24 = sphi 0, %s21
    %s25 = sphi 0, %s24
    %s41 = sphi 0, %s25
    %s47 = sphi 0, %s49
    %s50 = sphi 0, %s47
    %s51 = sphi 0, %s50
    %s67 = sphi 0, %s51
    %s73 = sphi 0, %s75
    %s76 = sphi 0, %s73
    %s77 = sphi 0, %s76
    %s93 = sphi 0, %s77
    %s99 = sphi 0, %s101
    %s102 = sphi 0, %s99
    %s103 = sphi 0, %s102
    %s119 = sphi 0, %s103
    %s125 = sphi 0, %s127
    %s128 = sphi 0, %s125
    %s129 = sphi 0, %s128
    %s145 = sphi 0, %s129
  $region4: #{conjugated_grad_forward.32} parent=0 // loop_header_branch
    %14 = sbr.rel (%p12) target = $region8
  $region5: #{conjugated_grad_forward.32} parent=0 // loop_body
    %s16 = ssub.s32 %s11, 1
    %s17 = ssub.s32 %s11, 2
    %s18 = sadd.s32 %s11, 1
    %s19 = ssub.s32 %s11, %s18
    %p20 = scmp.eq.s32.totalorder %s19, 0
    %s22 = sadd.s32 %s21, 1
    %s23 = scalar_select %p20, %s21, %s22
    %p26 = pneg %p20
    %p27 = scmp.eq.s32.totalorder %s11, 1
    %p28 = por %p26, %p27
    %p29 = scmp.ne.s32.totalorder %s21, %s24
    %p30 = scmp.eq.s32.totalorder %s11, 0
    %p31 = por %p29, %p30
    %p32 = scmp.ne.s32.totalorder %s21, %s24
    %p33 = scmp.eq.s32.totalorder %s16, 1
    %p34 = por %p32, %p33
    %p35 = scmp.ne.s32.totalorder %s24, %s25
    %p36 = scmp.eq.s32.totalorder %s16, 0
    %p37 = por %p35, %p36
    %p38 = scmp.ne.s32.totalorder %s24, %s25
    %p39 = scmp.eq.s32.totalorder %s17, 1
    %p40 = por %p38, %p39
    %p42 = scmp.ne.s32.totalorder %s25, %s41
    %p43 = scmp.eq.s32.totalorder %s17, 0
    %p44 = por %p42, %p43
    %s45 = ssub.s32 %s11, %s18
    %p46 = scmp.eq.s32.totalorder %s45, 0
    %s48 = sadd.s32 %s47, 1
    %s49 = scalar_select %p46, %s47, %s48
    %p52 = pneg %p46
    %p53 = scmp.eq.s32.totalorder %s11, 1
    %p54 = por %p52, %p53
    %p55 = scmp.ne.s32.totalorder %s47, %s50
    %p56 = scmp.eq.s32.totalorder %s11, 0
    %p57 = por %p55, %p56
    %p58 = scmp.ne.s32.totalorder %s47, %s50
    %p59 = scmp.eq.s32.totalorder %s16, 1
    %p60 = por %p58, %p59
    %p61 = scmp.ne.s32.totalorder %s50, %s51
    %p62 = scmp.eq.s32.totalorder %s16, 0
    %p63 = por %p61, %p62
    %p64 = scmp.ne.s32.totalorder %s50, %s51
    %p65 = scmp.eq.s32.totalorder %s17, 1
    %p66 = por %p64, %p65
    %p68 = scmp.ne.s32.totalorder %s51, %s67
    %p69 = scmp.eq.s32.totalorder %s17, 0
    %p70 = por %p68, %p69
    %s71 = ssub.s32 %s11, %s18
    %p72 = scmp.eq.s32.totalorder %s71, 0
    %s74 = sadd.s32 %s73, 1
    %s75 = scalar_select %p72, %s73, %s74
    %p78 = pneg %p72
    %p79 = scmp.eq.s32.totalorder %s11, 1
    %p80 = por %p78, %p79
    %p81 = scmp.ne.s32.totalorder %s73, %s76
    %p82 = scmp.eq.s32.totalorder %s11, 0
    %p83 = por %p81, %p82
    %p84 = scmp.ne.s32.totalorder %s73, %s76
    %p85 = scmp.eq.s32.totalorder %s16, 1
    %p86 = por %p84, %p85
    %p87 = scmp.ne.s32.totalorder %s76, %s77
    %p88 = scmp.eq.s32.totalorder %s16, 0
    %p89 = por %p87, %p88
    %p90 = scmp.ne.s32.totalorder %s76, %s77
    %p91 = scmp.eq.s32.totalorder %s17, 1
    %p92 = por %p90, %p91
    %p94 = scmp.ne.s32.totalorder %s77, %s93
    %p95 = scmp.eq.s32.totalorder %s17, 0
    %p96 = por %p94, %p95
    %s97 = ssub.s32 %s11, %s18
    %p98 = scmp.eq.s32.totalorder %s97, 0
    %s100 = sadd.s32 %s99, 1
    %s101 = scalar_select %p98, %s99, %s100
    %p104 = pneg %p98
    %p105 = scmp.eq.s32.totalorder %s11, 1
    %p106 = por %p104, %p105
    %p107 = scmp.ne.s32.totalorder %s99, %s102
    %p108 = scmp.eq.s32.totalorder %s11, 0
    %p109 = por %p107, %p108
    %p110 = scmp.ne.s32.totalorder %s99, %s102
    %p111 = scmp.eq.s32.totalorder %s16, 1
    %p112 = por %p110, %p111
    %p113 = scmp.ne.s32.totalorder %s102, %s103
    %p114 = scmp.eq.s32.totalorder %s16, 0
    %p115 = por %p113, %p114
    %p116 = scmp.ne.s32.totalorder %s102, %s103
    %p117 = scmp.eq.s32.totalorder %s17, 1
    %p118 = por %p116, %p117
    %p120 = scmp.ne.s32.totalorder %s103, %s119
    %p121 = scmp.eq.s32.totalorder %s17, 0
    %p122 = por %p120, %p121
    %s123 = ssub.s32 %s11, %s18
    %p124 = scmp.eq.s32.totalorder %s123, 0
    %s126 = sadd.s32 %s125, 1
    %s127 = scalar_select %p124, %s125, %s126
    %p130 = pneg %p124
    %p131 = scmp.eq.s32.totalorder %s11, 1
    %p132 = por %p130, %p131
    %p133 = scmp.ne.s32.totalorder %s125, %s128
    %p134 = scmp.eq.s32.totalorder %s11, 0
    %p135 = por %p133, %p134
    %p136 = scmp.ne.s32.totalorder %s125, %s128
    %p137 = scmp.eq.s32.totalorder %s16, 1
    %p138 = por %p136, %p137
    %p139 = scmp.ne.s32.totalorder %s128, %s129
    %p140 = scmp.eq.s32.totalorder %s16, 0
    %p141 = por %p139, %p140
    %p142 = scmp.ne.s32.totalorder %s128, %s129
    %p143 = scmp.eq.s32.totalorder %s17, 1
    %p144 = por %p142, %p143
    %p146 = scmp.ne.s32.totalorder %s129, %s145
    %p147 = scmp.eq.s32.totalorder %s17, 0
    %p148 = por %p146, %p147
    %p149 = scmp.le.s32.totalorder 1, %s11
    %p150 = scmp.lt.s32.totalorder %s11, 3
    %p151 = pnand %p149, %p150
    %p152 = pneg %p151
    // Predicated region
    $region9: #{conjugated_grad_forward.32} parent=5 // pred_check
      _
    $region10: #{conjugated_grad_forward.32} parent=5 // pred_check_branch
      %154 = sbr.rel (%p151) target = $region12
    $region11: #{conjugated_grad_forward.32} parent=5 // pred_region
      %s155 = ssub.s32 %s11, 1
    $region12: #{conjugated_grad_forward.32} parent=5 // pred_fallthru
      _
    %p156 = scmp.lt.s32.totalorder %s11, 2
    // Predicated region
    $region13: #{conjugated_grad_forward.32} parent=5 // pred_check
      %p157 = pneg %p156
    $region14: #{conjugated_grad_forward.32} parent=5 // pred_check_branch
      %159 = sbr.rel (%p157) target = $region16
    $region15: #{conjugated_grad_forward.32} parent=5 // pred_region
      // Predicated region
      $region17: #{conjugated_grad_forward.32} parent=15 // pred_check
        %p160 = pneg %p31
      $region18: #{conjugated_grad_forward.32} parent=15 // pred_check_branch
        %162 = sbr.rel (%p160) target = $region20
      $region19: #{conjugated_grad_forward.32} parent=15 // pred_region
        %p163 = scmp.lt.s32.totalorder %s11, 1
        %s164 = scalar_select %p163, %s11, 1
        %s165 = smul.addr %s164, 8
        %s166 = smul.addr %s165, 8
        %s167 = scalar_lea.vmem %s0, %s166
      $region20: #{conjugated_grad_forward.32} parent=15 // pred_fallthru
        _
      // Predicated region
      $region21: #{conjugated_grad_forward.32} parent=15 // pred_check
        %p168 = pneg %p57
      $region22: #{conjugated_grad_forward.32} parent=15 // pred_check_branch
        %170 = sbr.rel (%p168) target = $region24
      $region23: #{conjugated_grad_forward.32} parent=15 // pred_region
        %p171 = scmp.lt.s32.totalorder %s11, 1
        %s172 = scalar_select %p171, %s11, 1
        %s173 = smul.addr %s172, 8
        %s174 = smul.addr %s173, 8
        %s175 = scalar_lea.vmem %s1, %s174
      $region24: #{conjugated_grad_forward.32} parent=15 // pred_fallthru
        _
      // Predicated region
      $region25: #{conjugated_grad_forward.32} parent=15 // pred_check
        %p176 = pneg %p83
      $region26: #{conjugated_grad_forward.32} parent=15 // pred_check_branch
        %178 = sbr.rel (%p176) target = $region28
      $region27: #{conjugated_grad_forward.32} parent=15 // pred_region
        %p179 = scmp.lt.s32.totalorder %s11, 1
        %s180 = scalar_select %p179, %s11, 1
        %s181 = smul.addr %s180, 2
        %s182 = smul.addr %s181, 8
        %s183 = scalar_lea.vmem %s2, %s182
      $region28: #{conjugated_grad_forward.32} parent=15 // pred_fallthru
        _
    $region16: #{conjugated_grad_forward.32} parent=5 // pred_fallthru
      _
    %p184 = scmp.le.s32.totalorder 1, %s11
    %p185 = scmp.lt.s32.totalorder %s11, 3
    %p186 = pnand %p184, %p185
    %p187 = pneg %p186
    // Predicated region
    $region29: #{conjugated_grad_forward.32} parent=5 // pred_check
      _
    $region30: #{conjugated_grad_forward.32} parent=5 // pred_check_branch
      %189 = sbr.rel (%p186) target = $region32
    $region31: #{conjugated_grad_forward.32} parent=5 // pred_region
      %s190 = ssub.s32 %s11, 1
      %p191 = scmp.lt.s32.totalorder %s16, 1
      %s192 = scalar_select %p191, %s16, 1
      %s193 = smul.addr %s192, 8
      %s194 = smul.addr %s193, 8
      %s195 = scalar_lea.vmem %s0, %s194
      %p196 = pneg %p37
      %p197 = pneg %p34
      %p198 = scmp.lt.s32.totalorder %s16, 1
      %s199 = scalar_select %p198, %s16, 1
      %s200 = smul.addr %s199, 8
      %s201 = smul.addr %s200, 8
      %s202 = scalar_lea.vmem %s1, %s201
      %p203 = pneg %p63
      %p204 = pneg %p60
      %p205 = scmp.lt.s32.totalorder %s16, 1
      %s206 = scalar_select %p205, %s16, 1
      %s207 = smul.addr %s206, 2
      %s208 = smul.addr %s207, 8
      %s209 = scalar_lea.vmem %s2, %s208
      %p210 = pneg %p89
      %p211 = pneg %p86
      %p212 = pneg %p115
      %p213 = pneg %p112
      %p214 = scmp.lt.s32.totalorder %s16, 1
      %s215 = scalar_select %p214, %s16, 1
      %s216 = smul.addr %s215, 8
      %s217 = smul.addr %s216, 8
      %s218 = scalar_lea.vmem %s3, %s217
      %p219 = pneg %p141
      %p220 = pneg %p138
      %p221 = scmp.lt.s32.totalorder %s16, 1
      %s222 = scalar_select %p221, %s16, 1
      %s223 = smul.addr %s222, 8
      %s224 = smul.addr %s223, 8
      %s225 = scalar_lea.vmem %s4, %s224
      %p226 = scmp.lt.s32.totalorder %s16, 1
      %s227 = scalar_select %p226, %s16, 1
      %s228 = smul.addr %s227, 8
      %s229 = smul.addr %s228, 8
      %s230 = scalar_lea.vmem %s0, %s229
      %p231 = scmp.lt.s32.totalorder %s16, 1
      %s232 = scalar_select %p231, %s16, 1
      %s233 = smul.addr %s232, 8
      %s234 = smul.addr %s233, 8
      %s235 = scalar_lea.vmem %s1, %s234
      %p236 = scmp.lt.s32.totalorder %s16, 1
      %s237 = scalar_select %p236, %s16, 1
      %s238 = smul.addr %s237, 2
      %s239 = smul.addr %s238, 8
      %s240 = scalar_lea.vmem %s2, %s239
      %p241 = scmp.lt.s32.totalorder %s16, 1
      %s242 = scalar_select %p241, %s16, 1
      %s243 = smul.addr %s242, 8
      %s244 = smul.addr %s243, 8
      %s245 = scalar_lea.vmem %s3, %s244
      %p246 = scmp.lt.s32.totalorder %s16, 1
      %s247 = scalar_select %p246, %s16, 1
      %s248 = smul.addr %s247, 8
      %s249 = smul.addr %s248, 8
      %s250 = scalar_lea.vmem %s4, %s249
      %v251 = vld [vmem:[%s240] sm:$0xff]
      %v252 = vld [vmem:[%s240 + $0x8] sm:$0xff]
      %v253 = vld [vmem:[%s230] sm:$0xff]
      %v254 = vld [vmem:[%s230 + $0x8] sm:$0xff]
      %v255 = vld [vmem:[%s230 + $0x10] sm:$0xff]
      %v256 = vld [vmem:[%s230 + $0x18] sm:$0xff]
      %v257 = vld [vmem:[%s230 + $0x20] sm:$0xff]
      %v258 = vld [vmem:[%s230 + $0x28] sm:$0xff]
      %v259 = vld [vmem:[%s230 + $0x30] sm:$0xff]
      %v260 = vld [vmem:[%s230 + $0x38] sm:$0xff]
      %v261 = vmul.f32 %v253, %v251
      %v262 = vmul.f32 %v254, %v252
      %v263 = vmul.f32 %v255, %v251
      %v264 = vmul.f32 %v256, %v252
      %v265 = vmul.f32 %v257, %v251
      %v266 = vmul.f32 %v258, %v252
      %v267 = vmul.f32 %v259, %v251
      %v268 = vmul.f32 %v260, %v252
      %vm269 = vcmask 130048
      %270 = vst.msk [vmem:[%s245] sm:$0xff] %vm269, %v261
      %271 = vst.msk [vmem:[%s245 + $0x8] sm:$0xff] %vm269, %v262
      %272 = vst.msk [vmem:[%s245 + $0x10] sm:$0xff] %vm269, %v263
      %273 = vst.msk [vmem:[%s245 + $0x18] sm:$0xff] %vm269, %v264
      %274 = vst.msk [vmem:[%s245 + $0x20] sm:$0xff] %vm269, %v265
      %275 = vst.msk [vmem:[%s245 + $0x28] sm:$0xff] %vm269, %v266
      %276 = vst.msk [vmem:[%s245 + $0x30] sm:$0xff] %vm269, %v267
      %277 = vst.msk [vmem:[%s245 + $0x38] sm:$0xff] %vm269, %v268
      %v278 = vld [vmem:[%s235] sm:$0xff]
      %v279 = vld [vmem:[%s235 + $0x8] sm:$0xff]
      %v280 = vld [vmem:[%s235 + $0x10] sm:$0xff]
      %v281 = vld [vmem:[%s235 + $0x18] sm:$0xff]
      %v282 = vld [vmem:[%s235 + $0x20] sm:$0xff]
      %v283 = vld [vmem:[%s235 + $0x28] sm:$0xff]
      %v284 = vld [vmem:[%s235 + $0x30] sm:$0xff]
      %v285 = vld [vmem:[%s235 + $0x38] sm:$0xff]
      %v286 = vmul.f32 %v278, %v251
      %v287 = vmul.f32 %v279, %v252
      %v288 = vmul.f32 %v280, %v251
      %v289 = vmul.f32 %v281, %v252
      %v290 = vmul.f32 %v282, %v251
      %v291 = vmul.f32 %v283, %v252
      %v292 = vmul.f32 %v284, %v251
      %v293 = vmul.f32 %v285, %v252
      %294 = vst.msk [vmem:[%s250] sm:$0xff] %vm269, %v286
      %295 = vst.msk [vmem:[%s250 + $0x8] sm:$0xff] %vm269, %v287
      %296 = vst.msk [vmem:[%s250 + $0x10] sm:$0xff] %vm269, %v288
      %297 = vst.msk [vmem:[%s250 + $0x18] sm:$0xff] %vm269, %v289
      %298 = vst.msk [vmem:[%s250 + $0x20] sm:$0xff] %vm269, %v290
      %299 = vst.msk [vmem:[%s250 + $0x28] sm:$0xff] %vm269, %v291
      %300 = vst.msk [vmem:[%s250 + $0x30] sm:$0xff] %vm269, %v292
      %301 = vst.msk [vmem:[%s250 + $0x38] sm:$0xff] %vm269, %v293
      %p302 = scmp.lt.s32.totalorder %s16, 1
      %s303 = scalar_select %p302, %s16, 1
      %s304 = smul.addr %s303, 8
      %s305 = smul.addr %s304, 8
      %s306 = scalar_lea.vmem %s3, %s305
      %p307 = scmp.lt.s32.totalorder %s16, 1
      %s308 = scalar_select %p307, %s16, 1
      %s309 = smul.addr %s308, 8
      %s310 = smul.addr %s309, 8
      %s311 = scalar_lea.vmem %s4, %s310
      // Predicated region
      $region33: #{conjugated_grad_forward.32} parent=31 // pred_check
        %p312 = pneg %p112
      $region34: #{conjugated_grad_forward.32} parent=31 // pred_check_branch
        %314 = sbr.rel (%p312) target = $region36
      $region35: #{conjugated_grad_forward.32} parent=31 // pred_region
        _
      $region36: #{conjugated_grad_forward.32} parent=31 // pred_fallthru
        _
      // Predicated region
      $region37: #{conjugated_grad_forward.32} parent=31 // pred_check
        %p315 = pneg %p138
      $region38: #{conjugated_grad_forward.32} parent=31 // pred_check_branch
        %317 = sbr.rel (%p315) target = $region40
      $region39: #{conjugated_grad_forward.32} parent=31 // pred_region
        _
      $region40: #{conjugated_grad_forward.32} parent=31 // pred_fallthru
        _
    $region32: #{conjugated_grad_forward.32} parent=5 // pred_fallthru
      _
    %p318 = scmp.le.s32.totalorder 2, %s11
    // Predicated region
    $region41: #{conjugated_grad_forward.32} parent=5 // pred_check
      %p319 = pneg %p318
    $region42: #{conjugated_grad_forward.32} parent=5 // pred_check_branch
      %321 = sbr.rel (%p319) target = $region44
    $region43: #{conjugated_grad_forward.32} parent=5 // pred_region
      %s322 = ssub.s32 %s11, 2
      // Predicated region
      $region45: #{conjugated_grad_forward.32} parent=43 // pred_check
        %p323 = pneg %p118
      $region46: #{conjugated_grad_forward.32} parent=43 // pred_check_branch
        %325 = sbr.rel (%p323) target = $region48
      $region47: #{conjugated_grad_forward.32} parent=43 // pred_region
        %p326 = scmp.lt.s32.totalorder %s17, 1
        %s327 = scalar_select %p326, %s17, 1
        %s328 = smul.addr %s327, 8
        %s329 = smul.addr %s328, 8
        %s330 = scalar_lea.vmem %s3, %s329
      $region48: #{conjugated_grad_forward.32} parent=43 // pred_fallthru
        _
      // Predicated region
      $region49: #{conjugated_grad_forward.32} parent=43 // pred_check
        %p331 = pneg %p144
      $region50: #{conjugated_grad_forward.32} parent=43 // pred_check_branch
        %333 = sbr.rel (%p331) target = $region52
      $region51: #{conjugated_grad_forward.32} parent=43 // pred_region
        %p334 = scmp.lt.s32.totalorder %s17, 1
        %s335 = scalar_select %p334, %s17, 1
        %s336 = smul.addr %s335, 8
        %s337 = smul.addr %s336, 8
        %s338 = scalar_lea.vmem %s4, %s337
      $region52: #{conjugated_grad_forward.32} parent=43 // pred_fallthru
        _
    $region44: #{conjugated_grad_forward.32} parent=5 // pred_fallthru
      _
  $region6: #{conjugated_grad_forward.32} parent=0 // loop_footer
    %s15 = sadd.s32 1, %s11
  $region7: #{conjugated_grad_forward.32} parent=0 // loop_footer_branch
    %10 = sbr.rel target = $region3
  $region8: #{conjugated_grad_forward.32} parent=0 // loop_exit
    _

// kernel: custom-call.2
$region0: #{custom-call.2}
  %s0 = inlined_call_operand.vmem [shape: f32[2,16,16], index: 0, kind: input, shape index: {}]
  %s1 = inlined_call_operand.vmem [shape: f32[2,16,16], index: 1, kind: input, shape index: {}]
  %s2 = inlined_call_operand.hbm [shape: c64[2,16,16], index: 2, kind: output, shape index: {}]
  %s3 = scalar_lea.hbm %s2, 512
  $region1: #{custom-call.2} parent=0
    #allocation0 [shape = 's32[1]{0}', space=sflag, size = 0x4, scoped, tag = 'scoped memory for custom-call.2']
    %4 = vsyncpa [#allocation0], 0
    %s5 = sshll.u32 %s0, 4
    %s6 = int_to_ptr.vmem [resolvable:$true] %s5
    %8 = dma.vmem_to_hbm [thread:$0]  %s6, 512, %s2, [#allocation0]
    %9 = dma.done [#allocation0], 512
    %10 = vsyncpa [#allocation0], 1
  $region2: #{custom-call.2} parent=0
    #allocation1 [shape = 's32[1]{0}', space=sflag, size = 0x4, scoped, tag = 'scoped memory for custom-call.2']
    %11 = vsyncpa [#allocation1], 0
    %s12 = sshll.u32 %s1, 4
    %s13 = int_to_ptr.vmem [resolvable:$true] %s12
    %15 = dma.vmem_to_hbm [thread:$0]  %s13, 512, %s3, [#allocation1]
    %16 = dma.done [#allocation1], 512
    %17 = vsyncpa [#allocation1], 1

// kernel: conjugated_grad_forward.34
$region0: #{conjugated_grad_forward.34}
  #allocation0 [shape = 'u32[]', space=smem, size = 0x4, offset = 0x4, fixed_abs, tag = 'smem constant byte address 0x4 - core index']
  #allocation1 [shape = 'u32[144,128]{1,0:T(1,128)}', space=vmem, size = 0x12000, scoped, tag = 'internal scratch']
  #allocation2 [shape = 'f32[1]{0:T(128)S(6)}', space=smem, size = 0x200, scoped, tag = 'scoped memory for conjugated_grad_forward.34']
  %s0 = inlined_call_operand.vmem [shape: f32[2,4,16,16], index: 0, kind: input, shape index: {}]
  %s1 = inlined_call_operand.vmem [shape: f32[2,4,16,16], index: 1, kind: input, shape index: {}]
  %s2 = inlined_call_operand.vmem [shape: f32[2,4,16,16], index: 2, kind: input, shape index: {}]
  %s3 = inlined_call_operand.vmem [shape: f32[2,4,16,16], index: 3, kind: input, shape index: {}]
  %s4 = inlined_call_operand.vmem [shape: f32[2,16,16], index: 4, kind: input, shape index: {}, may-alias: {4,8}]
  %s5 = inlined_call_operand.vmem [shape: f32[2,16,16], index: 5, kind: input, shape index: {}, may-alias: {5,9}]
  %s6 = inlined_call_operand.vmem [shape: f32[2,16,16], index: 6, kind: input, shape index: {}, may-alias: {6,7}]
  %s7 = inlined_call_operand.vmem [shape: f32[2,16,16], index: 7, kind: input, shape index: {}, may-alias: {6,7}]
  %s8 = inlined_call_operand.vmem [shape: f32[2,16,16], index: 8, kind: input, shape index: {}, may-alias: {4,8}]
  %s9 = inlined_call_operand.vmem [shape: f32[2,16,16], index: 9, kind: input, shape index: {}, may-alias: {5,9}]
  %s10 = inlined_call_operand.vmem [shape: f32[2,1,1], index: 10, kind: input, shape index: {}]
  %s11 = inlined_call_operand.<no memory space> [shape: f32[1], index: 11, kind: input, shape index: {}]
  %s12 = inlined_call_operand.vmem [shape: f32[2,16,16], index: 12, kind: output, shape index: {0}]
  %s13 = inlined_call_operand.vmem [shape: f32[2,16,16], index: 13, kind: output, shape index: {1}]
  %s14 = inlined_call_operand.vmem [shape: f32[2,16,16], index: 14, kind: output, shape index: {2}]
  %s15 = inlined_call_operand.vmem [shape: f32[2,16,16], index: 15, kind: output, shape index: {3}]
  %s16 = inlined_call_operand.vmem [shape: f32[2,16,16], index: 16, kind: output, shape index: {4}]
  %s17 = inlined_call_operand.vmem [shape: f32[2,16,16], index: 17, kind: output, shape index: {5}]
  %s18 = inlined_call_operand.vmem [shape: f32[2,1,1], index: 18, kind: output, shape index: {6}]
  %19 = xla_tuple %s12, %s13, %s14, %s15, %s16, %s17, %s18
  %s20 = sld [smem:[#allocation0]]
  $region129: #{conjugated_grad_forward.34} parent=0
    _
  %s22 = ssub.s32 1, %s20
  %s23 = scalar_select 0, %s22, %s20
  %24 = sst [smem:[#allocation2]] %s11
  loop: start=0, step=1, limit=4
  $region2: #{conjugated_grad_forward.34} parent=0 // loop_pre_header
    _
  $region3: #{conjugated_grad_forward.34} parent=0 // loop_header
    %s26 = sphi 0, %s30
    %p27 = scmp.ge.s32.totalorder %s26, 4
    %s36 = sphi 0, %s38
    %s39 = sphi 0, %s36
    %s40 = sphi 0, %s39
    %s56 = sphi 0, %s40
    %s62 = sphi 0, %s64
    %s65 = sphi 0, %s62
    %s66 = sphi 0, %s65
    %s82 = sphi 0, %s66
    %s88 = sphi 0, %s90
    %s91 = sphi 0, %s88
    %s92 = sphi 0, %s91
    %s108 = sphi 0, %s92
    %s114 = sphi 0, %s116
    %s117 = sphi 0, %s114
    %s118 = sphi 0, %s117
    %s134 = sphi 0, %s118
    %s140 = sphi 0, %s142
    %s143 = sphi 0, %s140
    %s144 = sphi 0, %s143
    %s160 = sphi 0, %s144
    %s166 = sphi 0, %s168
    %s169 = sphi 0, %s166
    %s170 = sphi 0, %s169
    %s186 = sphi 0, %s170
    %s192 = sphi 0, %s194
    %s195 = sphi 0, %s192
    %s196 = sphi 0, %s195
    %s212 = sphi 0, %s196
    %s218 = sphi 0, %s220
    %s221 = sphi 0, %s218
    %s222 = sphi 0, %s221
    %s238 = sphi 0, %s222
    %s244 = sphi 0, %s246
    %s247 = sphi 0, %s244
    %s248 = sphi 0, %s247
    %s264 = sphi 0, %s248
    %s270 = sphi 0, %s272
    %s273 = sphi 0, %s270
    %s274 = sphi 0, %s273
    %s290 = sphi 0, %s274
    %s296 = sphi 0, %s298
    %s299 = sphi 0, %s296
    %s300 = sphi 0, %s299
    %s316 = sphi 0, %s300
    %s320 = sphi 0, %s320
    %s322 = sphi 0, %s320
    %s323 = sphi 0, %s322
    %s337 = sphi 0, %s323
    %s343 = sphi 0, %s345
    %s346 = sphi 0, %s343
    %s347 = sphi 0, %s346
    %s363 = sphi 0, %s347
    %s369 = sphi 0, %s371
    %s372 = sphi 0, %s369
    %s373 = sphi 0, %s372
    %s389 = sphi 0, %s373
    %s395 = sphi 0, %s397
    %s398 = sphi 0, %s395
    %s399 = sphi 0, %s398
    %s415 = sphi 0, %s399
    %s421 = sphi 0, %s423
    %s424 = sphi 0, %s421
    %s425 = sphi 0, %s424
    %s441 = sphi 0, %s425
    %s447 = sphi 0, %s449
    %s450 = sphi 0, %s447
    %s451 = sphi 0, %s450
    %s467 = sphi 0, %s451
    %s473 = sphi 0, %s475
    %s476 = sphi 0, %s473
    %s477 = sphi 0, %s476
    %s493 = sphi 0, %s477
    %s499 = sphi 0, %s501
    %s502 = sphi 0, %s499
    %s503 = sphi 0, %s502
    %s519 = sphi 0, %s503
  $region4: #{conjugated_grad_forward.34} parent=0 // loop_header_branch
    %29 = sbr.rel (%p27) target = $region8
  $region5: #{conjugated_grad_forward.34} parent=0 // loop_body
    %s31 = ssub.s32 %s26, 1
    %s32 = ssub.s32 %s26, 2
    %s33 = sadd.s32 %s26, 1
    %s34 = ssub.s32 %s26, %s33
    %p35 = scmp.eq.s32.totalorder %s34, 0
    %s37 = sadd.s32 %s36, 1
    %s38 = scalar_select %p35, %s36, %s37
    %p41 = pneg %p35
    %p42 = scmp.eq.s32.totalorder %s26, 1
    %p43 = por %p41, %p42
    %p44 = scmp.ne.s32.totalorder %s36, %s39
    %p45 = scmp.eq.s32.totalorder %s26, 0
    %p46 = por %p44, %p45
    %p47 = scmp.ne.s32.totalorder %s36, %s39
    %p48 = scmp.eq.s32.totalorder %s31, 1
    %p49 = por %p47, %p48
    %p50 = scmp.ne.s32.totalorder %s39, %s40
    %p51 = scmp.eq.s32.totalorder %s31, 0
    %p52 = por %p50, %p51
    %p53 = scmp.ne.s32.totalorder %s39, %s40
    %p54 = scmp.eq.s32.totalorder %s32, 1
    %p55 = por %p53, %p54
    %p57 = scmp.ne.s32.totalorder %s40, %s56
    %p58 = scmp.eq.s32.totalorder %s32, 0
    %p59 = por %p57, %p58
    %s60 = ssub.s32 %s26, %s33
    %p61 = scmp.eq.s32.totalorder %s60, 0
    %s63 = sadd.s32 %s62, 1
    %s64 = scalar_select %p61, %s62, %s63
    %p67 = pneg %p61
    %p68 = scmp.eq.s32.totalorder %s26, 1
    %p69 = por %p67, %p68
    %p70 = scmp.ne.s32.totalorder %s62, %s65
    %p71 = scmp.eq.s32.totalorder %s26, 0
    %p72 = por %p70, %p71
    %p73 = scmp.ne.s32.totalorder %s62, %s65
    %p74 = scmp.eq.s32.totalorder %s31, 1
    %p75 = por %p73, %p74
    %p76 = scmp.ne.s32.totalorder %s65, %s66
    %p77 = scmp.eq.s32.totalorder %s31, 0
    %p78 = por %p76, %p77
    %p79 = scmp.ne.s32.totalorder %s65, %s66
    %p80 = scmp.eq.s32.totalorder %s32, 1
    %p81 = por %p79, %p80
    %p83 = scmp.ne.s32.totalorder %s66, %s82
    %p84 = scmp.eq.s32.totalorder %s32, 0
    %p85 = por %p83, %p84
    %s86 = ssub.s32 %s26, %s33
    %p87 = scmp.eq.s32.totalorder %s86, 0
    %s89 = sadd.s32 %s88, 1
    %s90 = scalar_select %p87, %s88, %s89
    %p93 = pneg %p87
    %p94 = scmp.eq.s32.totalorder %s26, 1
    %p95 = por %p93, %p94
    %p96 = scmp.ne.s32.totalorder %s88, %s91
    %p97 = scmp.eq.s32.totalorder %s26, 0
    %p98 = por %p96, %p97
    %p99 = scmp.ne.s32.totalorder %s88, %s91
    %p100 = scmp.eq.s32.totalorder %s31, 1
    %p101 = por %p99, %p100
    %p102 = scmp.ne.s32.totalorder %s91, %s92
    %p103 = scmp.eq.s32.totalorder %s31, 0
    %p104 = por %p102, %p103
    %p105 = scmp.ne.s32.totalorder %s91, %s92
    %p106 = scmp.eq.s32.totalorder %s32, 1
    %p107 = por %p105, %p106
    %p109 = scmp.ne.s32.totalorder %s92, %s108
    %p110 = scmp.eq.s32.totalorder %s32, 0
    %p111 = por %p109, %p110
    %s112 = ssub.s32 %s26, %s33
    %p113 = scmp.eq.s32.totalorder %s112, 0
    %s115 = sadd.s32 %s114, 1
    %s116 = scalar_select %p113, %s114, %s115
    %p119 = pneg %p113
    %p120 = scmp.eq.s32.totalorder %s26, 1
    %p121 = por %p119, %p120
    %p122 = scmp.ne.s32.totalorder %s114, %s117
    %p123 = scmp.eq.s32.totalorder %s26, 0
    %p124 = por %p122, %p123
    %p125 = scmp.ne.s32.totalorder %s114, %s117
    %p126 = scmp.eq.s32.totalorder %s31, 1
    %p127 = por %p125, %p126
    %p128 = scmp.ne.s32.totalorder %s117, %s118
    %p129 = scmp.eq.s32.totalorder %s31, 0
    %p130 = por %p128, %p129
    %p131 = scmp.ne.s32.totalorder %s117, %s118
    %p132 = scmp.eq.s32.totalorder %s32, 1
    %p133 = por %p131, %p132
    %p135 = scmp.ne.s32.totalorder %s118, %s134
    %p136 = scmp.eq.s32.totalorder %s32, 0
    %p137 = por %p135, %p136
    %s138 = ssub.s32 %s26, %s33
    %p139 = scmp.eq.s32.totalorder %s138, 0
    %s141 = sadd.s32 %s140, 1
    %s142 = scalar_select %p139, %s140, %s141
    %p145 = pneg %p139
    %p146 = scmp.eq.s32.totalorder %s26, 1
    %p147 = por %p145, %p146
    %p148 = scmp.ne.s32.totalorder %s140, %s143
    %p149 = scmp.eq.s32.totalorder %s26, 0
    %p150 = por %p148, %p149
    %p151 = scmp.ne.s32.totalorder %s140, %s143
    %p152 = scmp.eq.s32.totalorder %s31, 1
    %p153 = por %p151, %p152
    %p154 = scmp.ne.s32.totalorder %s143, %s144
    %p155 = scmp.eq.s32.totalorder %s31, 0
    %p156 = por %p154, %p155
    %p157 = scmp.ne.s32.totalorder %s143, %s144
    %p158 = scmp.eq.s32.totalorder %s32, 1
    %p159 = por %p157, %p158
    %p161 = scmp.ne.s32.totalorder %s144, %s160
    %p162 = scmp.eq.s32.totalorder %s32, 0
    %p163 = por %p161, %p162
    %s164 = ssub.s32 %s26, %s33
    %p165 = scmp.eq.s32.totalorder %s164, 0
    %s167 = sadd.s32 %s166, 1
    %s168 = scalar_select %p165, %s166, %s167
    %p171 = pneg %p165
    %p172 = scmp.eq.s32.totalorder %s26, 1
    %p173 = por %p171, %p172
    %p174 = scmp.ne.s32.totalorder %s166, %s169
    %p175 = scmp.eq.s32.totalorder %s26, 0
    %p176 = por %p174, %p175
    %p177 = scmp.ne.s32.totalorder %s166, %s169
    %p178 = scmp.eq.s32.totalorder %s31, 1
    %p179 = por %p177, %p178
    %p180 = scmp.ne.s32.totalorder %s169, %s170
    %p181 = scmp.eq.s32.totalorder %s31, 0
    %p182 = por %p180, %p181
    %p183 = scmp.ne.s32.totalorder %s169, %s170
    %p184 = scmp.eq.s32.totalorder %s32, 1
    %p185 = por %p183, %p184
    %p187 = scmp.ne.s32.totalorder %s170, %s186
    %p188 = scmp.eq.s32.totalorder %s32, 0
    %p189 = por %p187, %p188
    %s190 = ssub.s32 %s26, %s33
    %p191 = scmp.eq.s32.totalorder %s190, 0
    %s193 = sadd.s32 %s192, 1
    %s194 = scalar_select %p191, %s192, %s193
    %p197 = pneg %p191
    %p198 = scmp.eq.s32.totalorder %s26, 1
    %p199 = por %p197, %p198
    %p200 = scmp.ne.s32.totalorder %s192, %s195
    %p201 = scmp.eq.s32.totalorder %s26, 0
    %p202 = por %p200, %p201
    %p203 = scmp.ne.s32.totalorder %s192, %s195
    %p204 = scmp.eq.s32.totalorder %s31, 1
    %p205 = por %p203, %p204
    %p206 = scmp.ne.s32.totalorder %s195, %s196
    %p207 = scmp.eq.s32.totalorder %s31, 0
    %p208 = por %p206, %p207
    %p209 = scmp.ne.s32.totalorder %s195, %s196
    %p210 = scmp.eq.s32.totalorder %s32, 1
    %p211 = por %p209, %p210
    %p213 = scmp.ne.s32.totalorder %s196, %s212
    %p214 = scmp.eq.s32.totalorder %s32, 0
    %p215 = por %p213, %p214
    %s216 = ssub.s32 %s26, %s33
    %p217 = scmp.eq.s32.totalorder %s216, 0
    %s219 = sadd.s32 %s218, 1
    %s220 = scalar_select %p217, %s218, %s219
    %p223 = pneg %p217
    %p224 = scmp.eq.s32.totalorder %s26, 1
    %p225 = por %p223, %p224
    %p226 = scmp.ne.s32.totalorder %s218, %s221
    %p227 = scmp.eq.s32.totalorder %s26, 0
    %p228 = por %p226, %p227
    %p229 = scmp.ne.s32.totalorder %s218, %s221
    %p230 = scmp.eq.s32.totalorder %s31, 1
    %p231 = por %p229, %p230
    %p232 = scmp.ne.s32.totalorder %s221, %s222
    %p233 = scmp.eq.s32.totalorder %s31, 0
    %p234 = por %p232, %p233
    %p235 = scmp.ne.s32.totalorder %s221, %s222
    %p236 = scmp.eq.s32.totalorder %s32, 1
    %p237 = por %p235, %p236
    %p239 = scmp.ne.s32.totalorder %s222, %s238
    %p240 = scmp.eq.s32.totalorder %s32, 0
    %p241 = por %p239, %p240
    %s242 = ssub.s32 %s26, %s33
    %p243 = scmp.eq.s32.totalorder %s242, 0
    %s245 = sadd.s32 %s244, 1
    %s246 = scalar_select %p243, %s244, %s245
    %p249 = pneg %p243
    %p250 = scmp.eq.s32.totalorder %s26, 1
    %p251 = por %p249, %p250
    %p252 = scmp.ne.s32.totalorder %s244, %s247
    %p253 = scmp.eq.s32.totalorder %s26, 0
    %p254 = por %p252, %p253
    %p255 = scmp.ne.s32.totalorder %s244, %s247
    %p256 = scmp.eq.s32.totalorder %s31, 1
    %p257 = por %p255, %p256
    %p258 = scmp.ne.s32.totalorder %s247, %s248
    %p259 = scmp.eq.s32.totalorder %s31, 0
    %p260 = por %p258, %p259
    %p261 = scmp.ne.s32.totalorder %s247, %s248
    %p262 = scmp.eq.s32.totalorder %s32, 1
    %p263 = por %p261, %p262
    %p265 = scmp.ne.s32.totalorder %s248, %s264
    %p266 = scmp.eq.s32.totalorder %s32, 0
    %p267 = por %p265, %p266
    %s268 = ssub.s32 %s26, %s33
    %p269 = scmp.eq.s32.totalorder %s268, 0
    %s271 = sadd.s32 %s270, 1
    %s272 = scalar_select %p269, %s270, %s271
    %p275 = pneg %p269
    %p276 = scmp.eq.s32.totalorder %s26, 1
    %p277 = por %p275, %p276
    %p278 = scmp.ne.s32.totalorder %s270, %s273
    %p279 = scmp.eq.s32.totalorder %s26, 0
    %p280 = por %p278, %p279
    %p281 = scmp.ne.s32.totalorder %s270, %s273
    %p282 = scmp.eq.s32.totalorder %s31, 1
    %p283 = por %p281, %p282
    %p284 = scmp.ne.s32.totalorder %s273, %s274
    %p285 = scmp.eq.s32.totalorder %s31, 0
    %p286 = por %p284, %p285
    %p287 = scmp.ne.s32.totalorder %s273, %s274
    %p288 = scmp.eq.s32.totalorder %s32, 1
    %p289 = por %p287, %p288
    %p291 = scmp.ne.s32.totalorder %s274, %s290
    %p292 = scmp.eq.s32.totalorder %s32, 0
    %p293 = por %p291, %p292
    %s294 = ssub.s32 %s26, %s33
    %p295 = scmp.eq.s32.totalorder %s294, 0
    %s297 = sadd.s32 %s296, 1
    %s298 = scalar_select %p295, %s296, %s297
    %p301 = pneg %p295
    %p302 = scmp.eq.s32.totalorder %s26, 1
    %p303 = por %p301, %p302
    %p304 = scmp.ne.s32.totalorder %s296, %s299
    %p305 = scmp.eq.s32.totalorder %s26, 0
    %p306 = por %p304, %p305
    %p307 = scmp.ne.s32.totalorder %s296, %s299
    %p308 = scmp.eq.s32.totalorder %s31, 1
    %p309 = por %p307, %p308
    %p310 = scmp.ne.s32.totalorder %s299, %s300
    %p311 = scmp.eq.s32.totalorder %s31, 0
    %p312 = por %p310, %p311
    %p313 = scmp.ne.s32.totalorder %s299, %s300
    %p314 = scmp.eq.s32.totalorder %s32, 1
    %p315 = por %p313, %p314
    %p317 = scmp.ne.s32.totalorder %s300, %s316
    %p318 = scmp.eq.s32.totalorder %s32, 0
    %p319 = por %p317, %p318
    %s321 = sadd.s32 %s320, 1
    %p324 = scmp.eq.s32.totalorder %s26, 1
    %p325 = scmp.ne.s32.totalorder %s320, %s322
    %p326 = scmp.eq.s32.totalorder %s26, 0
    %p327 = por %p325, %p326
    %p328 = scmp.ne.s32.totalorder %s320, %s322
    %p329 = scmp.eq.s32.totalorder %s31, 1
    %p330 = por %p328, %p329
    %p331 = scmp.ne.s32.totalorder %s322, %s323
    %p332 = scmp.eq.s32.totalorder %s31, 0
    %p333 = por %p331, %p332
    %p334 = scmp.ne.s32.totalorder %s322, %s323
    %p335 = scmp.eq.s32.totalorder %s32, 1
    %p336 = por %p334, %p335
    %p338 = scmp.ne.s32.totalorder %s323, %s337
    %p339 = scmp.eq.s32.totalorder %s32, 0
    %p340 = por %p338, %p339
    %s341 = ssub.s32 %s26, %s33
    %p342 = scmp.eq.s32.totalorder %s341, 0
    %s344 = sadd.s32 %s343, 1
    %s345 = scalar_select %p342, %s343, %s344
    %p348 = pneg %p342
    %p349 = scmp.eq.s32.totalorder %s26, 1
    %p350 = por %p348, %p349
    %p351 = scmp.ne.s32.totalorder %s343, %s346
    %p352 = scmp.eq.s32.totalorder %s26, 0
    %p353 = por %p351, %p352
    %p354 = scmp.ne.s32.totalorder %s343, %s346
    %p355 = scmp.eq.s32.totalorder %s31, 1
    %p356 = por %p354, %p355
    %p357 = scmp.ne.s32.totalorder %s346, %s347
    %p358 = scmp.eq.s32.totalorder %s31, 0
    %p359 = por %p357, %p358
    %p360 = scmp.ne.s32.totalorder %s346, %s347
    %p361 = scmp.eq.s32.totalorder %s32, 1
    %p362 = por %p360, %p361
    %p364 = scmp.ne.s32.totalorder %s347, %s363
    %p365 = scmp.eq.s32.totalorder %s32, 0
    %p366 = por %p364, %p365
    %s367 = ssub.s32 %s26, %s33
    %p368 = scmp.eq.s32.totalorder %s367, 0
    %s370 = sadd.s32 %s369, 1
    %s371 = scalar_select %p368, %s369, %s370
    %p374 = pneg %p368
    %p375 = scmp.eq.s32.totalorder %s26, 1
    %p376 = por %p374, %p375
    %p377 = scmp.ne.s32.totalorder %s369, %s372
    %p378 = scmp.eq.s32.totalorder %s26, 0
    %p379 = por %p377, %p378
    %p380 = scmp.ne.s32.totalorder %s369, %s372
    %p381 = scmp.eq.s32.totalorder %s31, 1
    %p382 = por %p380, %p381
    %p383 = scmp.ne.s32.totalorder %s372, %s373
    %p384 = scmp.eq.s32.totalorder %s31, 0
    %p385 = por %p383, %p384
    %p386 = scmp.ne.s32.totalorder %s372, %s373
    %p387 = scmp.eq.s32.totalorder %s32, 1
    %p388 = por %p386, %p387
    %p390 = scmp.ne.s32.totalorder %s373, %s389
    %p391 = scmp.eq.s32.totalorder %s32, 0
    %p392 = por %p390, %p391
    %s393 = ssub.s32 %s26, %s33
    %p394 = scmp.eq.s32.totalorder %s393, 0
    %s396 = sadd.s32 %s395, 1
    %s397 = scalar_select %p394, %s395, %s396
    %p400 = pneg %p394
    %p401 = scmp.eq.s32.totalorder %s26, 1
    %p402 = por %p400, %p401
    %p403 = scmp.ne.s32.totalorder %s395, %s398
    %p404 = scmp.eq.s32.totalorder %s26, 0
    %p405 = por %p403, %p404
    %p406 = scmp.ne.s32.totalorder %s395, %s398
    %p407 = scmp.eq.s32.totalorder %s31, 1
    %p408 = por %p406, %p407
    %p409 = scmp.ne.s32.totalorder %s398, %s399
    %p410 = scmp.eq.s32.totalorder %s31, 0
    %p411 = por %p409, %p410
    %p412 = scmp.ne.s32.totalorder %s398, %s399
    %p413 = scmp.eq.s32.totalorder %s32, 1
    %p414 = por %p412, %p413
    %p416 = scmp.ne.s32.totalorder %s399, %s415
    %p417 = scmp.eq.s32.totalorder %s32, 0
    %p418 = por %p416, %p417
    %s419 = ssub.s32 %s26, %s33
    %p420 = scmp.eq.s32.totalorder %s419, 0
    %s422 = sadd.s32 %s421, 1
    %s423 = scalar_select %p420, %s421, %s422
    %p426 = pneg %p420
    %p427 = scmp.eq.s32.totalorder %s26, 1
    %p428 = por %p426, %p427
    %p429 = scmp.ne.s32.totalorder %s421, %s424
    %p430 = scmp.eq.s32.totalorder %s26, 0
    %p431 = por %p429, %p430
    %p432 = scmp.ne.s32.totalorder %s421, %s424
    %p433 = scmp.eq.s32.totalorder %s31, 1
    %p434 = por %p432, %p433
    %p435 = scmp.ne.s32.totalorder %s424, %s425
    %p436 = scmp.eq.s32.totalorder %s31, 0
    %p437 = por %p435, %p436
    %p438 = scmp.ne.s32.totalorder %s424, %s425
    %p439 = scmp.eq.s32.totalorder %s32, 1
    %p440 = por %p438, %p439
    %p442 = scmp.ne.s32.totalorder %s425, %s441
    %p443 = scmp.eq.s32.totalorder %s32, 0
    %p444 = por %p442, %p443
    %s445 = ssub.s32 %s26, %s33
    %p446 = scmp.eq.s32.totalorder %s445, 0
    %s448 = sadd.s32 %s447, 1
    %s449 = scalar_select %p446, %s447, %s448
    %p452 = pneg %p446
    %p453 = scmp.eq.s32.totalorder %s26, 1
    %p454 = por %p452, %p453
    %p455 = scmp.ne.s32.totalorder %s447, %s450
    %p456 = scmp.eq.s32.totalorder %s26, 0
    %p457 = por %p455, %p456
    %p458 = scmp.ne.s32.totalorder %s447, %s450
    %p459 = scmp.eq.s32.totalorder %s31, 1
    %p460 = por %p458, %p459
    %p461 = scmp.ne.s32.totalorder %s450, %s451
    %p462 = scmp.eq.s32.totalorder %s31, 0
    %p463 = por %p461, %p462
    %p464 = scmp.ne.s32.totalorder %s450, %s451
    %p465 = scmp.eq.s32.totalorder %s32, 1
    %p466 = por %p464, %p465
    %p468 = scmp.ne.s32.totalorder %s451, %s467
    %p469 = scmp.eq.s32.totalorder %s32, 0
    %p470 = por %p468, %p469
    %s471 = ssub.s32 %s26, %s33
    %p472 = scmp.eq.s32.totalorder %s471, 0
    %s474 = sadd.s32 %s473, 1
    %s475 = scalar_select %p472, %s473, %s474
    %p478 = pneg %p472
    %p479 = scmp.eq.s32.totalorder %s26, 1
    %p480 = por %p478, %p479
    %p481 = scmp.ne.s32.totalorder %s473, %s476
    %p482 = scmp.eq.s32.totalorder %s26, 0
    %p483 = por %p481, %p482
    %p484 = scmp.ne.s32.totalorder %s473, %s476
    %p485 = scmp.eq.s32.totalorder %s31, 1
    %p486 = por %p484, %p485
    %p487 = scmp.ne.s32.totalorder %s476, %s477
    %p488 = scmp.eq.s32.totalorder %s31, 0
    %p489 = por %p487, %p488
    %p490 = scmp.ne.s32.totalorder %s476, %s477
    %p491 = scmp.eq.s32.totalorder %s32, 1
    %p492 = por %p490, %p491
    %p494 = scmp.ne.s32.totalorder %s477, %s493
    %p495 = scmp.eq.s32.totalorder %s32, 0
    %p496 = por %p494, %p495
    %s497 = ssub.s32 %s26, %s33
    %p498 = scmp.eq.s32.totalorder %s497, 0
    %s500 = sadd.s32 %s499, 1
    %s501 = scalar_select %p498, %s499, %s500
    %p504 = pneg %p498
    %p505 = scmp.eq.s32.totalorder %s26, 1
    %p506 = por %p504, %p505
    %p507 = scmp.ne.s32.totalorder %s499, %s502
    %p508 = scmp.eq.s32.totalorder %s26, 0
    %p509 = por %p507, %p508
    %p510 = scmp.ne.s32.totalorder %s499, %s502
    %p511 = scmp.eq.s32.totalorder %s31, 1
    %p512 = por %p510, %p511
    %p513 = scmp.ne.s32.totalorder %s502, %s503
    %p514 = scmp.eq.s32.totalorder %s31, 0
    %p515 = por %p513, %p514
    %p516 = scmp.ne.s32.totalorder %s502, %s503
    %p517 = scmp.eq.s32.totalorder %s32, 1
    %p518 = por %p516, %p517
    %p520 = scmp.ne.s32.totalorder %s503, %s519
    %p521 = scmp.eq.s32.totalorder %s32, 0
    %p522 = por %p520, %p521
    %p523 = scmp.le.s32.totalorder 1, %s26
    %p524 = scmp.lt.s32.totalorder %s26, 3
    %p525 = pnand %p523, %p524
    %p526 = pneg %p525
    // Predicated region
    $region9: #{conjugated_grad_forward.34} parent=5 // pred_check
      _
    $region10: #{conjugated_grad_forward.34} parent=5 // pred_check_branch
      %528 = sbr.rel (%p525) target = $region12
    $region11: #{conjugated_grad_forward.34} parent=5 // pred_region
      %s529 = ssub.s32 %s26, 1
      // Predicated region
      $region13: #{conjugated_grad_forward.34} parent=11 // pred_check
        %p530 = pneg %p333
      $region14: #{conjugated_grad_forward.34} parent=11 // pred_check_branch
        %532 = sbr.rel (%p530) target = $region16
      $region15: #{conjugated_grad_forward.34} parent=11 // pred_region
        _
      $region16: #{conjugated_grad_forward.34} parent=11 // pred_fallthru
        _
    $region12: #{conjugated_grad_forward.34} parent=5 // pred_fallthru
      _
    %p533 = scmp.lt.s32.totalorder %s26, 2
    // Predicated region
    $region17: #{conjugated_grad_forward.34} parent=5 // pred_check
      %p534 = pneg %p533
    $region18: #{conjugated_grad_forward.34} parent=5 // pred_check_branch
      %536 = sbr.rel (%p534) target = $region20
    $region19: #{conjugated_grad_forward.34} parent=5 // pred_region
      // Predicated region
      $region21: #{conjugated_grad_forward.34} parent=19 // pred_check
        %p537 = pneg %p46
      $region22: #{conjugated_grad_forward.34} parent=19 // pred_check_branch
        %539 = sbr.rel (%p537) target = $region24
      $region23: #{conjugated_grad_forward.34} parent=19 // pred_region
        %p540 = scmp.lt.s32.totalorder %s26, 1
        %s541 = scalar_select %p540, %s26, 1
        %s542 = smul.addr %s541, 8
        %s543 = smul.addr %s542, 8
        %s544 = scalar_lea.vmem %s0, %s543
      $region24: #{conjugated_grad_forward.34} parent=19 // pred_fallthru
        _
      // Predicated region
      $region25: #{conjugated_grad_forward.34} parent=19 // pred_check
        %p545 = pneg %p72
      $region26: #{conjugated_grad_forward.34} parent=19 // pred_check_branch
        %547 = sbr.rel (%p545) target = $region28
      $region27: #{conjugated_grad_forward.34} parent=19 // pred_region
        %p548 = scmp.lt.s32.totalorder %s26, 1
        %s549 = scalar_select %p548, %s26, 1
        %s550 = smul.addr %s549, 8
        %s551 = smul.addr %s550, 8
        %s552 = scalar_lea.vmem %s1, %s551
      $region28: #{conjugated_grad_forward.34} parent=19 // pred_fallthru
        _
      // Predicated region
      $region29: #{conjugated_grad_forward.34} parent=19 // pred_check
        %p553 = pneg %p98
      $region30: #{conjugated_grad_forward.34} parent=19 // pred_check_branch
        %555 = sbr.rel (%p553) target = $region32
      $region31: #{conjugated_grad_forward.34} parent=19 // pred_region
        %p556 = scmp.lt.s32.totalorder %s26, 1
        %s557 = scalar_select %p556, %s26, 1
        %s558 = smul.addr %s557, 8
        %s559 = smul.addr %s558, 8
        %s560 = scalar_lea.vmem %s2, %s559
      $region32: #{conjugated_grad_forward.34} parent=19 // pred_fallthru
        _
      // Predicated region
      $region33: #{conjugated_grad_forward.34} parent=19 // pred_check
        %p561 = pneg %p124
      $region34: #{conjugated_grad_forward.34} parent=19 // pred_check_branch
        %563 = sbr.rel (%p561) target = $region36
      $region35: #{conjugated_grad_forward.34} parent=19 // pred_region
        %p564 = scmp.lt.s32.totalorder %s26, 1
        %s565 = scalar_select %p564, %s26, 1
        %s566 = smul.addr %s565, 8
        %s567 = smul.addr %s566, 8
        %s568 = scalar_lea.vmem %s3, %s567
      $region36: #{conjugated_grad_forward.34} parent=19 // pred_fallthru
        _
      // Predicated region
      $region37: #{conjugated_grad_forward.34} parent=19 // pred_check
        %p569 = pneg %p150
      $region38: #{conjugated_grad_forward.34} parent=19 // pred_check_branch
        %571 = sbr.rel (%p569) target = $region40
      $region39: #{conjugated_grad_forward.34} parent=19 // pred_region
        %p572 = scmp.lt.s32.totalorder %s26, 1
        %s573 = scalar_select %p572, %s26, 1
        %s574 = smul.addr %s573, 2
        %s575 = smul.addr %s574, 8
        %s576 = scalar_lea.vmem %s4, %s575
      $region40: #{conjugated_grad_forward.34} parent=19 // pred_fallthru
        _
      // Predicated region
      $region41: #{conjugated_grad_forward.34} parent=19 // pred_check
        %p577 = pneg %p176
      $region42: #{conjugated_grad_forward.34} parent=19 // pred_check_branch
        %579 = sbr.rel (%p577) target = $region44
      $region43: #{conjugated_grad_forward.34} parent=19 // pred_region
        %p580 = scmp.lt.s32.totalorder %s26, 1
        %s581 = scalar_select %p580, %s26, 1
        %s582 = smul.addr %s581, 2
        %s583 = smul.addr %s582, 8
        %s584 = scalar_lea.vmem %s5, %s583
      $region44: #{conjugated_grad_forward.34} parent=19 // pred_fallthru
        _
      // Predicated region
      $region45: #{conjugated_grad_forward.34} parent=19 // pred_check
        %p585 = pneg %p202
      $region46: #{conjugated_grad_forward.34} parent=19 // pred_check_branch
        %587 = sbr.rel (%p585) target = $region48
      $region47: #{conjugated_grad_forward.34} parent=19 // pred_region
        %p588 = scmp.lt.s32.totalorder %s26, 1
        %s589 = scalar_select %p588, %s26, 1
        %s590 = smul.addr %s589, 2
        %s591 = smul.addr %s590, 8
        %s592 = scalar_lea.vmem %s6, %s591
      $region48: #{conjugated_grad_forward.34} parent=19 // pred_fallthru
        _
      // Predicated region
      $region49: #{conjugated_grad_forward.34} parent=19 // pred_check
        %p593 = pneg %p228
      $region50: #{conjugated_grad_forward.34} parent=19 // pred_check_branch
        %595 = sbr.rel (%p593) target = $region52
      $region51: #{conjugated_grad_forward.34} parent=19 // pred_region
        %p596 = scmp.lt.s32.totalorder %s26, 1
        %s597 = scalar_select %p596, %s26, 1
        %s598 = smul.addr %s597, 2
        %s599 = smul.addr %s598, 8
        %s600 = scalar_lea.vmem %s7, %s599
      $region52: #{conjugated_grad_forward.34} parent=19 // pred_fallthru
        _
      // Predicated region
      $region53: #{conjugated_grad_forward.34} parent=19 // pred_check
        %p601 = pneg %p254
      $region54: #{conjugated_grad_forward.34} parent=19 // pred_check_branch
        %603 = sbr.rel (%p601) target = $region56
      $region55: #{conjugated_grad_forward.34} parent=19 // pred_region
        %p604 = scmp.lt.s32.totalorder %s26, 1
        %s605 = scalar_select %p604, %s26, 1
        %s606 = smul.addr %s605, 2
        %s607 = smul.addr %s606, 8
        %s608 = scalar_lea.vmem %s8, %s607
      $region56: #{conjugated_grad_forward.34} parent=19 // pred_fallthru
        _
      // Predicated region
      $region57: #{conjugated_grad_forward.34} parent=19 // pred_check
        %p609 = pneg %p280
      $region58: #{conjugated_grad_forward.34} parent=19 // pred_check_branch
        %611 = sbr.rel (%p609) target = $region60
      $region59: #{conjugated_grad_forward.34} parent=19 // pred_region
        %p612 = scmp.lt.s32.totalorder %s26, 1
        %s613 = scalar_select %p612, %s26, 1
        %s614 = smul.addr %s613, 2
        %s615 = smul.addr %s614, 8
        %s616 = scalar_lea.vmem %s9, %s615
      $region60: #{conjugated_grad_forward.34} parent=19 // pred_fallthru
        _
      // Predicated region
      $region61: #{conjugated_grad_forward.34} parent=19 // pred_check
        %p617 = pneg %p306
      $region62: #{conjugated_grad_forward.34} parent=19 // pred_check_branch
        %619 = sbr.rel (%p617) target = $region64
      $region63: #{conjugated_grad_forward.34} parent=19 // pred_region
        %p620 = scmp.lt.s32.totalorder %s26, 1
        %s621 = scalar_select %p620, %s26, 1
        %s622 = scalar_lea.vmem %s10, %s621
      $region64: #{conjugated_grad_forward.34} parent=19 // pred_fallthru
        _
    $region20: #{conjugated_grad_forward.34} parent=5 // pred_fallthru
      _
    %p623 = scmp.le.s32.totalorder 1, %s26
    %p624 = scmp.lt.s32.totalorder %s26, 3
    %p625 = pnand %p623, %p624
    %p626 = pneg %p625
    // Predicated region
    $region65: #{conjugated_grad_forward.34} parent=5 // pred_check
      _
    $region66: #{conjugated_grad_forward.34} parent=5 // pred_check_branch
      %628 = sbr.rel (%p625) target = $region68
    $region67: #{conjugated_grad_forward.34} parent=5 // pred_region
      %s629 = ssub.s32 %s26, 1
      %p630 = scmp.lt.s32.totalorder %s31, 1
      %s631 = scalar_select %p630, %s31, 1
      %s632 = smul.addr %s631, 8
      %s633 = smul.addr %s632, 8
      %s634 = scalar_lea.vmem %s0, %s633
      %p635 = pneg %p52
      %p636 = pneg %p49
      %p637 = scmp.lt.s32.totalorder %s31, 1
      %s638 = scalar_select %p637, %s31, 1
      %s639 = smul.addr %s638, 8
      %s640 = smul.addr %s639, 8
      %s641 = scalar_lea.vmem %s1, %s640
      %p642 = pneg %p78
      %p643 = pneg %p75
      %p644 = scmp.lt.s32.totalorder %s31, 1
      %s645 = scalar_select %p644, %s31, 1
      %s646 = smul.addr %s645, 8
      %s647 = smul.addr %s646, 8
      %s648 = scalar_lea.vmem %s2, %s647
      %p649 = pneg %p104
      %p650 = pneg %p101
      %p651 = scmp.lt.s32.totalorder %s31, 1
      %s652 = scalar_select %p651, %s31, 1
      %s653 = smul.addr %s652, 8
      %s654 = smul.addr %s653, 8
      %s655 = scalar_lea.vmem %s3, %s654
      %p656 = pneg %p130
      %p657 = pneg %p127
      %p658 = scmp.lt.s32.totalorder %s31, 1
      %s659 = scalar_select %p658, %s31, 1
      %s660 = smul.addr %s659, 2
      %s661 = smul.addr %s660, 8
      %s662 = scalar_lea.vmem %s4, %s661
      %p663 = pneg %p156
      %p664 = pneg %p153
      %p665 = scmp.lt.s32.totalorder %s31, 1
      %s666 = scalar_select %p665, %s31, 1
      %s667 = smul.addr %s666, 2
      %s668 = smul.addr %s667, 8
      %s669 = scalar_lea.vmem %s5, %s668
      %p670 = pneg %p182
      %p671 = pneg %p179
      %p672 = scmp.lt.s32.totalorder %s31, 1
      %s673 = scalar_select %p672, %s31, 1
      %s674 = smul.addr %s673, 2
      %s675 = smul.addr %s674, 8
      %s676 = scalar_lea.vmem %s6, %s675
      %p677 = pneg %p208
      %p678 = pneg %p205
      %p679 = scmp.lt.s32.totalorder %s31, 1
      %s680 = scalar_select %p679, %s31, 1
      %s681 = smul.addr %s680, 2
      %s682 = smul.addr %s681, 8
      %s683 = scalar_lea.vmem %s7, %s682
      %p684 = pneg %p234
      %p685 = pneg %p231
      %p686 = scmp.lt.s32.totalorder %s31, 1
      %s687 = scalar_select %p686, %s31, 1
      %s688 = smul.addr %s687, 2
      %s689 = smul.addr %s688, 8
      %s690 = scalar_lea.vmem %s8, %s689
      %p691 = pneg %p260
      %p692 = pneg %p257
      %p693 = scmp.lt.s32.totalorder %s31, 1
      %s694 = scalar_select %p693, %s31, 1
      %s695 = smul.addr %s694, 2
      %s696 = smul.addr %s695, 8
      %s697 = scalar_lea.vmem %s9, %s696
      %p698 = pneg %p286
      %p699 = pneg %p283
      %p700 = scmp.lt.s32.totalorder %s31, 1
      %s701 = scalar_select %p700, %s31, 1
      %s702 = scalar_lea.vmem %s10, %s701
      %p703 = pneg %p312
      %p704 = pneg %p309
      %p705 = pneg %p333
      %p706 = pneg %p330
      %p707 = pneg %p359
      %p708 = pneg %p356
      %p709 = scmp.lt.s32.totalorder %s31, 1
      %s710 = scalar_select %p709, %s31, 1
      %s711 = smul.addr %s710, 2
      %s712 = smul.addr %s711, 8
      %s713 = scalar_lea.vmem %s12, %s712
      %p714 = pneg %p385
      %p715 = pneg %p382
      %p716 = scmp.lt.s32.totalorder %s31, 1
      %s717 = scalar_select %p716, %s31, 1
      %s718 = smul.addr %s717, 2
      %s719 = smul.addr %s718, 8
      %s720 = scalar_lea.vmem %s13, %s719
      %p721 = pneg %p411
      %p722 = pneg %p408
      %p723 = scmp.lt.s32.totalorder %s31, 1
      %s724 = scalar_select %p723, %s31, 1
      %s725 = smul.addr %s724, 2
      %s726 = smul.addr %s725, 8
      %s727 = scalar_lea.vmem %s14, %s726
      %p728 = pneg %p437
      %p729 = pneg %p434
      %p730 = scmp.lt.s32.totalorder %s31, 1
      %s731 = scalar_select %p730, %s31, 1
      %s732 = smul.addr %s731, 2
      %s733 = smul.addr %s732, 8
      %s734 = scalar_lea.vmem %s15, %s733
      %p735 = pneg %p463
      %p736 = pneg %p460
      %p737 = scmp.lt.s32.totalorder %s31, 1
      %s738 = scalar_select %p737, %s31, 1
      %s739 = smul.addr %s738, 2
      %s740 = smul.addr %s739, 8
      %s741 = scalar_lea.vmem %s16, %s740
      %p742 = pneg %p489
      %p743 = pneg %p486
      %p744 = scmp.lt.s32.totalorder %s31, 1
      %s745 = scalar_select %p744, %s31, 1
      %s746 = smul.addr %s745, 2
      %s747 = smul.addr %s746, 8
      %s748 = scalar_lea.vmem %s17, %s747
      %p749 = pneg %p515
      %p750 = pneg %p512
      %p751 = scmp.lt.s32.totalorder %s31, 1
      %s752 = scalar_select %p751, %s31, 1
      %s753 = scalar_lea.vmem %s18, %s752
      %p754 = scmp.lt.s32.totalorder %s31, 1
      %s755 = scalar_select %p754, %s31, 1
      %s756 = smul.addr %s755, 8
      %s757 = smul.addr %s756, 8
      %s758 = scalar_lea.vmem %s0, %s757
      %p759 = scmp.lt.s32.totalorder %s31, 1
      %s760 = scalar_select %p759, %s31, 1
      %s761 = smul.addr %s760, 8
      %s762 = smul.addr %s761, 8
      %s763 = scalar_lea.vmem %s1, %s762
      %p764 = scmp.lt.s32.totalorder %s31, 1
      %s765 = scalar_select %p764, %s31, 1
      %s766 = smul.addr %s765, 8
      %s767 = smul.addr %s766, 8
      %s768 = scalar_lea.vmem %s2, %s767
      %p769 = scmp.lt.s32.totalorder %s31, 1
      %s770 = scalar_select %p769, %s31, 1
      %s771 = smul.addr %s770, 8
      %s772 = smul.addr %s771, 8
      %s773 = scalar_lea.vmem %s3, %s772
      %p774 = scmp.lt.s32.totalorder %s31, 1
      %s775 = scalar_select %p774, %s31, 1
      %s776 = smul.addr %s775, 2
      %s777 = smul.addr %s776, 8
      %s778 = scalar_lea.vmem %s4, %s777
      %p779 = scmp.lt.s32.totalorder %s31, 1
      %s780 = scalar_select %p779, %s31, 1
      %s781 = smul.addr %s780, 2
      %s782 = smul.addr %s781, 8
      %s783 = scalar_lea.vmem %s5, %s782
      %p784 = scmp.lt.s32.totalorder %s31, 1
      %s785 = scalar_select %p784, %s31, 1
      %s786 = smul.addr %s785, 2
      %s787 = smul.addr %s786, 8
      %s788 = scalar_lea.vmem %s6, %s787
      %p789 = scmp.lt.s32.totalorder %s31, 1
      %s790 = scalar_select %p789, %s31, 1
      %s791 = smul.addr %s790, 2
      %s792 = smul.addr %s791, 8
      %s793 = scalar_lea.vmem %s7, %s792
      %p794 = scmp.lt.s32.totalorder %s31, 1
      %s795 = scalar_select %p794, %s31, 1
      %s796 = smul.addr %s795, 2
      %s797 = smul.addr %s796, 8
      %s798 = scalar_lea.vmem %s8, %s797
      %p799 = scmp.lt.s32.totalorder %s31, 1
      %s800 = scalar_select %p799, %s31, 1
      %s801 = smul.addr %s800, 2
      %s802 = smul.addr %s801, 8
      %s803 = scalar_lea.vmem %s9, %s802
      %p804 = scmp.lt.s32.totalorder %s31, 1
      %s805 = scalar_select %p804, %s31, 1
      %s806 = scalar_lea.vmem %s10, %s805
      %p807 = scmp.lt.s32.totalorder %s31, 1
      %s808 = scalar_select %p807, %s31, 1
      %s809 = smul.addr %s808, 2
      %s810 = smul.addr %s809, 8
      %s811 = scalar_lea.vmem %s12, %s810
      %p812 = scmp.lt.s32.totalorder %s31, 1
      %s813 = scalar_select %p812, %s31, 1
      %s814 = smul.addr %s813, 2
      %s815 = smul.addr %s814, 8
      %s816 = scalar_lea.vmem %s13, %s815
      %p817 = scmp.lt.s32.totalorder %s31, 1
      %s818 = scalar_select %p817, %s31, 1
      %s819 = smul.addr %s818, 2
      %s820 = smul.addr %s819, 8
      %s821 = scalar_lea.vmem %s14, %s820
      %p822 = scmp.lt.s32.totalorder %s31, 1
      %s823 = scalar_select %p822, %s31, 1
      %s824 = smul.addr %s823, 2
      %s825 = smul.addr %s824, 8
      %s826 = scalar_lea.vmem %s15, %s825
      %p827 = scmp.lt.s32.totalorder %s31, 1
      %s828 = scalar_select %p827, %s31, 1
      %s829 = smul.addr %s828, 2
      %s830 = smul.addr %s829, 8
      %s831 = scalar_lea.vmem %s16, %s830
      %p832 = scmp.lt.s32.totalorder %s31, 1
      %s833 = scalar_select %p832, %s31, 1
      %s834 = smul.addr %s833, 2
      %s835 = smul.addr %s834, 8
      %s836 = scalar_lea.vmem %s17, %s835
      %p837 = scmp.lt.s32.totalorder %s31, 1
      %s838 = scalar_select %p837, %s31, 1
      %s839 = scalar_lea.vmem %s18, %s838
      %s840 = sld [smem:[#allocation2]]
      %v841 = vld [vmem:[%s806] sm:$0x1]
      %v842 = vld [vmem:[%s758] sm:$0xff]
      %v843 = vld [vmem:[%s758 + $0x8] sm:$0xff]
      %v844 = vld [vmem:[%s758 + $0x10] sm:$0xff]
      %v845 = vld [vmem:[%s758 + $0x18] sm:$0xff]
      %v846 = vld [vmem:[%s758 + $0x20] sm:$0xff]
      %v847 = vld [vmem:[%s758 + $0x28] sm:$0xff]
      %v848 = vld [vmem:[%s758 + $0x30] sm:$0xff]
      %v849 = vld [vmem:[%s758 + $0x38] sm:$0xff]
      %v850 = vld [vmem:[%s763] sm:$0xff]
      %v851 = vld [vmem:[%s763 + $0x8] sm:$0xff]
      %v852 = vld [vmem:[%s763 + $0x10] sm:$0xff]
      %v853 = vld [vmem:[%s763 + $0x18] sm:$0xff]
      %v854 = vld [vmem:[%s763 + $0x20] sm:$0xff]
      %v855 = vld [vmem:[%s763 + $0x28] sm:$0xff]
      %v856 = vld [vmem:[%s763 + $0x30] sm:$0xff]
      %v857 = vld [vmem:[%s763 + $0x38] sm:$0xff]
      %v858 = vld [vmem:[%s768] sm:$0xff]
      %v859 = vld [vmem:[%s768 + $0x8] sm:$0xff]
      %v860 = vld [vmem:[%s768 + $0x10] sm:$0xff]
      %v861 = vld [vmem:[%s768 + $0x18] sm:$0xff]
      %v862 = vld [vmem:[%s768 + $0x20] sm:$0xff]
      %v863 = vld [vmem:[%s768 + $0x28] sm:$0xff]
      %v864 = vld [vmem:[%s768 + $0x30] sm:$0xff]
      %v865 = vld [vmem:[%s768 + $0x38] sm:$0xff]
      %v866 = vld [vmem:[%s773] sm:$0xff]
      %v867 = vld [vmem:[%s773 + $0x8] sm:$0xff]
      %v868 = vld [vmem:[%s773 + $0x10] sm:$0xff]
      %v869 = vld [vmem:[%s773 + $0x18] sm:$0xff]
      %v870 = vld [vmem:[%s773 + $0x20] sm:$0xff]
      %v871 = vld [vmem:[%s773 + $0x28] sm:$0xff]
      %v872 = vld [vmem:[%s773 + $0x30] sm:$0xff]
      %v873 = vld [vmem:[%s773 + $0x38] sm:$0xff]
      %v874 = vld [vmem:[%s778] sm:$0xff]
      %v875 = vld [vmem:[%s778 + $0x8] sm:$0xff]
      %v876 = vld [vmem:[%s783] sm:$0xff]
      %v877 = vld [vmem:[%s783 + $0x8] sm:$0xff]
      %v878 = vmul.f32 %v842, %v858
      %v879 = vmul.f32 %v843, %v859
      %v880 = vmul.f32 %v844, %v860
      %v881 = vmul.f32 %v845, %v861
      %v882 = vmul.f32 %v846, %v862
      %v883 = vmul.f32 %v847, %v863
      %v884 = vmul.f32 %v848, %v864
      %v885 = vmul.f32 %v849, %v865
      %v886 = vmul.f32 %v850, %v866
      %v887 = vmul.f32 %v851, %v867
      %v888 = vmul.f32 %v852, %v868
      %v889 = vmul.f32 %v853, %v869
      %v890 = vmul.f32 %v854, %v870
      %v891 = vmul.f32 %v855, %v871
      %v892 = vmul.f32 %v856, %v872
      %v893 = vmul.f32 %v857, %v873
      %v894 = vadd.f32 %v878, %v886
      %v895 = vadd.f32 %v879, %v887
      %v896 = vadd.f32 %v880, %v888
      %v897 = vadd.f32 %v881, %v889
      %v898 = vadd.f32 %v882, %v890
      %v899 = vadd.f32 %v883, %v891
      %v900 = vadd.f32 %v884, %v892
      %v901 = vadd.f32 %v885, %v893
      %vm902 = vcmask 130048
      %v903 = vsel %vm902, %v894, 0.0
      %v904 = vsel %vm902, %v896, 0.0
      %v905 = vadd.f32 %v903, %v904
      %v906 = vsel %vm902, %v898, 0.0
      %v907 = vadd.f32 %v905, %v906
      %v908 = vsel %vm902, %v900, 0.0
      %v909 = vadd.f32 %v907, %v908
      %v910 = vsel %vm902, %v895, 0.0
      %v911 = vsel %vm902, %v897, 0.0
      %v912 = vadd.f32 %v910, %v911
      %v913 = vsel %vm902, %v899, 0.0
      %v914 = vadd.f32 %v912, %v913
      %v915 = vsel %vm902, %v901, 0.0
      %v916 = vadd.f32 %v914, %v915
      %v917 = vstv %s840
      %v918 = vmul.f32 %v917, %v874
      %v919 = vmul.f32 %v917, %v875
      %v920 = vadd.f32 %v909, %v918
      %v921 = vadd.f32 %v916, %v919
      %v922 = vmul.f32 %v842, %v866
      %v923 = vmul.f32 %v843, %v867
      %v924 = vmul.f32 %v844, %v868
      %v925 = vmul.f32 %v845, %v869
      %v926 = vmul.f32 %v846, %v870
      %v927 = vmul.f32 %v847, %v871
      %v928 = vmul.f32 %v848, %v872
      %v929 = vmul.f32 %v849, %v873
      %v930 = vmul.f32 %v850, %v858
      %v931 = vmul.f32 %v851, %v859
      %v932 = vmul.f32 %v852, %v860
      %v933 = vmul.f32 %v853, %v861
      %v934 = vmul.f32 %v854, %v862
      %v935 = vmul.f32 %v855, %v863
      %v936 = vmul.f32 %v856, %v864
      %v937 = vmul.f32 %v857, %v865
      %v938 = vsub.f32 %v922, %v930
      %v939 = vsub.f32 %v923, %v931
      %v940 = vsub.f32 %v924, %v932
      %v941 = vsub.f32 %v925, %v933
      %v942 = vsub.f32 %v926, %v934
      %v943 = vsub.f32 %v927, %v935
      %v944 = vsub.f32 %v928, %v936
      %v945 = vsub.f32 %v929, %v937
      %v946 = vsel %vm902, %v938, 0.0
      %v947 = vsel %vm902, %v940, 0.0
      %v948 = vadd.f32 %v946, %v947
      %v949 = vsel %vm902, %v942, 0.0
      %v950 = vadd.f32 %v948, %v949
      %v951 = vsel %vm902, %v944, 0.0
      %v952 = vadd.f32 %v950, %v951
      %v953 = vsel %vm902, %v939, 0.0
      %v954 = vsel %vm902, %v941, 0.0
      %v955 = vadd.f32 %v953, %v954
      %v956 = vsel %vm902, %v943, 0.0
      %v957 = vadd.f32 %v955, %v956
      %v958 = vsel %vm902, %v945, 0.0
      %v959 = vadd.f32 %v957, %v958
      %v960 = vmul.f32 %v917, %v876
      %v961 = vmul.f32 %v917, %v877
      %v962 = vadd.f32 %v952, %v960
      %v963 = vadd.f32 %v959, %v961
      %v964 = vmul.f32 %v874, %v920
      %v965 = vmul.f32 %v875, %v921
      %v966 = vmul.f32 %v876, %v962
      %v967 = vmul.f32 %v877, %v963
      %v968 = vadd.f32 %v964, %v966
      %v969 = vadd.f32 %v965, %v967
      %v970 = vsel %vm902, %v968, 0.0
      %v971 = vsel %vm902, %v969, 0.0
      %v972 = vadd.f32 %v970, %v971
      %973 = vadd.xlane.f32.xlu0 %v972
      %v974 = vpop.xlane.xlu0 %973
      %v975 = vrot.slane %v974, 4
      %v976 = vadd.f32 %v974, %v975
      %v977 = vrot.slane %v976, 2
      %v978 = vadd.f32 %v976, %v977
      %v979 = vrot.slane %v978, 1
      %v980 = vadd.f32 %v978, %v979
      %s981 = vtos %v980
      %v982 = vstv %s981
      %v983 = vrcp.pop %v982
      %v984 = vmul.f32 %v841, %v983
      %v985 = vld [vmem:[%s788] sm:$0xff]
      %v986 = vld [vmem:[%s788 + $0x8] sm:$0xff]
      %v988 = vlaneseq
      %v989 = vshrl.u32 %v988, 7
      %v990 = vsub.s32 0, %v989
      %v991 = vrot.slane %v984, %v990
      %992 = vset.pattern.permute.xlu0 0
      %993 = vperm.xlu0 %992, %v991
      %v994 = vpop.permute.xlu0 %993
      %v996 = vmul.f32 %v994, %v874
      %v997 = vmul.f32 %v994, %v875
      %v998 = vadd.f32 %v985, %v996
      %v999 = vadd.f32 %v986, %v997
      %v1000 = vld [vmem:[%s793] sm:$0xff]
      %v1001 = vld [vmem:[%s793 + $0x8] sm:$0xff]
      %v1002 = vmul.f32 %v994, %v876
      %v1003 = vmul.f32 %v994, %v877
      %v1004 = vadd.f32 %v1000, %v1002
      %v1005 = vadd.f32 %v1001, %v1003
      %v1006 = vld [vmem:[%s798] sm:$0xff]
      %v1007 = vld [vmem:[%s798 + $0x8] sm:$0xff]
      %v1008 = vmul.f32 %v994, %v920
      %v1009 = vmul.f32 %v994, %v921
      %v1010 = vsub.f32 %v1006, %v1008
      %v1011 = vsub.f32 %v1007, %v1009
      %v1012 = vld [vmem:[%s803] sm:$0xff]
      %v1013 = vld [vmem:[%s803 + $0x8] sm:$0xff]
      %v1014 = vmul.f32 %v994, %v962
      %v1015 = vmul.f32 %v994, %v963
      %v1016 = vsub.f32 %v1012, %v1014
      %v1017 = vsub.f32 %v1013, %v1015
      %v1018 = vmul.f32 %v1010, %v1010
      %v1019 = vmul.f32 %v1011, %v1011
      %v1020 = vmul.f32 %v1016, %v1016
      %v1021 = vmul.f32 %v1017, %v1017
      %v1022 = vadd.f32 %v1018, %v1020
      %v1023 = vadd.f32 %v1019, %v1021
      %v1024 = vsel %vm902, %v1022, 0.0
      %v1025 = vsel %vm902, %v1023, 0.0
      %v1026 = vadd.f32 %v1024, %v1025
      %1027 = vadd.xlane.f32.xlu0 %v1026
      %v1028 = vpop.xlane.xlu0 %1027
      %v1029 = vrot.slane %v1028, 4
      %v1030 = vadd.f32 %v1028, %v1029
      %v1031 = vrot.slane %v1030, 2
      %v1032 = vadd.f32 %v1030, %v1031
      %v1033 = vrot.slane %v1032, 1
      %v1034 = vadd.f32 %v1032, %v1033
      %s1035 = vtos %v1034
      %v1036 = vstv %s1035
      %v1037 = vrcp.pop %v841
      %v1038 = vmul.f32 %v1036, %v1037
      %1039 = vst.msk [vmem:[%s811] sm:$0xff] %vm902, %v998
      %1040 = vst.msk [vmem:[%s811 + $0x8] sm:$0xff] %vm902, %v999
      %1041 = vst.msk [vmem:[%s816] sm:$0xff] %vm902, %v1004
      %1042 = vst.msk [vmem:[%s816 + $0x8] sm:$0xff] %vm902, %v1005
      %1043 = vst.msk [vmem:[%s821] sm:$0xff] %vm902, %v1010
      %1044 = vst.msk [vmem:[%s821 + $0x8] sm:$0xff] %vm902, %v1011
      %1045 = vst.msk [vmem:[%s826] sm:$0xff] %vm902, %v1016
      %1046 = vst.msk [vmem:[%s826 + $0x8] sm:$0xff] %vm902, %v1017
      %v1048 = vlaneseq
      %v1049 = vshrl.u32 %v1048, 7
      %v1050 = vsub.s32 0, %v1049
      %v1051 = vrot.slane %v1038, %v1050
      %1052 = vset.pattern.permute.xlu0 0
      %1053 = vperm.xlu0 %1052, %v1051
      %v1054 = vpop.permute.xlu0 %1053
      %v1056 = vmul.f32 %v1054, %v874
      %v1057 = vmul.f32 %v1054, %v875
      %v1058 = vadd.f32 %v1010, %v1056
      %v1059 = vadd.f32 %v1011, %v1057
      %1060 = vst.msk [vmem:[%s831] sm:$0xff] %vm902, %v1058
      %1061 = vst.msk [vmem:[%s831 + $0x8] sm:$0xff] %vm902, %v1059
      %v1062 = vmul.f32 %v1054, %v876
      %v1063 = vmul.f32 %v1054, %v877
      %v1064 = vadd.f32 %v1016, %v1062
      %v1065 = vadd.f32 %v1017, %v1063
      %1066 = vst.msk [vmem:[%s836] sm:$0xff] %vm902, %v1064
      %1067 = vst.msk [vmem:[%s836 + $0x8] sm:$0xff] %vm902, %v1065
      %vm1068 = vcmask 0
      %1069 = vst.msk [vmem:[%s839] sm:$0x1] %vm1068, %v1036
      %p1070 = scmp.lt.s32.totalorder %s31, 1
      %s1071 = scalar_select %p1070, %s31, 1
      %s1072 = smul.addr %s1071, 2
      %s1073 = smul.addr %s1072, 8
      %s1074 = scalar_lea.vmem %s12, %s1073
      %p1075 = scmp.lt.s32.totalorder %s31, 1
      %s1076 = scalar_select %p1075, %s31, 1
      %s1077 = smul.addr %s1076, 2
      %s1078 = smul.addr %s1077, 8
      %s1079 = scalar_lea.vmem %s13, %s1078
      %p1080 = scmp.lt.s32.totalorder %s31, 1
      %s1081 = scalar_select %p1080, %s31, 1
      %s1082 = smul.addr %s1081, 2
      %s1083 = smul.addr %s1082, 8
      %s1084 = scalar_lea.vmem %s14, %s1083
      %p1085 = scmp.lt.s32.totalorder %s31, 1
      %s1086 = scalar_select %p1085, %s31, 1
      %s1087 = smul.addr %s1086, 2
      %s1088 = smul.addr %s1087, 8
      %s1089 = scalar_lea.vmem %s15, %s1088
      %p1090 = scmp.lt.s32.totalorder %s31, 1
      %s1091 = scalar_select %p1090, %s31, 1
      %s1092 = smul.addr %s1091, 2
      %s1093 = smul.addr %s1092, 8
      %s1094 = scalar_lea.vmem %s16, %s1093
      %p1095 = scmp.lt.s32.totalorder %s31, 1
      %s1096 = scalar_select %p1095, %s31, 1
      %s1097 = smul.addr %s1096, 2
      %s1098 = smul.addr %s1097, 8
      %s1099 = scalar_lea.vmem %s17, %s1098
      %p1100 = scmp.lt.s32.totalorder %s31, 1
      %s1101 = scalar_select %p1100, %s31, 1
      %s1102 = scalar_lea.vmem %s18, %s1101
      // Predicated region
      $region69: #{conjugated_grad_forward.34} parent=67 // pred_check
        %p1103 = pneg %p356
      $region70: #{conjugated_grad_forward.34} parent=67 // pred_check_branch
        %1105 = sbr.rel (%p1103) target = $region72
      $region71: #{conjugated_grad_forward.34} parent=67 // pred_region
        _
      $region72: #{conjugated_grad_forward.34} parent=67 // pred_fallthru
        _
      // Predicated region
      $region73: #{conjugated_grad_forward.34} parent=67 // pred_check
        %p1106 = pneg %p382
      $region74: #{conjugated_grad_forward.34} parent=67 // pred_check_branch
        %1108 = sbr.rel (%p1106) target = $region76
      $region75: #{conjugated_grad_forward.34} parent=67 // pred_region
        _
      $region76: #{conjugated_grad_forward.34} parent=67 // pred_fallthru
        _
      // Predicated region
      $region77: #{conjugated_grad_forward.34} parent=67 // pred_check
        %p1109 = pneg %p408
      $region78: #{conjugated_grad_forward.34} parent=67 // pred_check_branch
        %1111 = sbr.rel (%p1109) target = $region80
      $region79: #{conjugated_grad_forward.34} parent=67 // pred_region
        _
      $region80: #{conjugated_grad_forward.34} parent=67 // pred_fallthru
        _
      // Predicated region
      $region81: #{conjugated_grad_forward.34} parent=67 // pred_check
        %p1112 = pneg %p434
      $region82: #{conjugated_grad_forward.34} parent=67 // pred_check_branch
        %1114 = sbr.rel (%p1112) target = $region84
      $region83: #{conjugated_grad_forward.34} parent=67 // pred_region
        _
      $region84: #{conjugated_grad_forward.34} parent=67 // pred_fallthru
        _
      // Predicated region
      $region85: #{conjugated_grad_forward.34} parent=67 // pred_check
        %p1115 = pneg %p460
      $region86: #{conjugated_grad_forward.34} parent=67 // pred_check_branch
        %1117 = sbr.rel (%p1115) target = $region88
      $region87: #{conjugated_grad_forward.34} parent=67 // pred_region
        _
      $region88: #{conjugated_grad_forward.34} parent=67 // pred_fallthru
        _
      // Predicated region
      $region89: #{conjugated_grad_forward.34} parent=67 // pred_check
        %p1118 = pneg %p486
      $region90: #{conjugated_grad_forward.34} parent=67 // pred_check_branch
        %1120 = sbr.rel (%p1118) target = $region92
      $region91: #{conjugated_grad_forward.34} parent=67 // pred_region
        _
      $region92: #{conjugated_grad_forward.34} parent=67 // pred_fallthru
        _
      // Predicated region
      $region93: #{conjugated_grad_forward.34} parent=67 // pred_check
        %p1121 = pneg %p512
      $region94: #{conjugated_grad_forward.34} parent=67 // pred_check_branch
        %1123 = sbr.rel (%p1121) target = $region96
      $region95: #{conjugated_grad_forward.34} parent=67 // pred_region
        _
      $region96: #{conjugated_grad_forward.34} parent=67 // pred_fallthru
        _
    $region68: #{conjugated_grad_forward.34} parent=5 // pred_fallthru
      _
    %p1124 = scmp.le.s32.totalorder 2, %s26
    // Predicated region
    $region97: #{conjugated_grad_forward.34} parent=5 // pred_check
      %p1125 = pneg %p1124
    $region98: #{conjugated_grad_forward.34} parent=5 // pred_check_branch
      %1127 = sbr.rel (%p1125) target = $region100
    $region99: #{conjugated_grad_forward.34} parent=5 // pred_region
      %s1128 = ssub.s32 %s26, 2
      // Predicated region
      $region101: #{conjugated_grad_forward.34} parent=99 // pred_check
        %p1129 = pneg %p362
      $region102: #{conjugated_grad_forward.34} parent=99 // pred_check_branch
        %1131 = sbr.rel (%p1129) target = $region104
      $region103: #{conjugated_grad_forward.34} parent=99 // pred_region
        %p1132 = scmp.lt.s32.totalorder %s32, 1
        %s1133 = scalar_select %p1132, %s32, 1
        %s1134 = smul.addr %s1133, 2
        %s1135 = smul.addr %s1134, 8
        %s1136 = scalar_lea.vmem %s12, %s1135
      $region104: #{conjugated_grad_forward.34} parent=99 // pred_fallthru
        _
      // Predicated region
      $region105: #{conjugated_grad_forward.34} parent=99 // pred_check
        %p1137 = pneg %p388
      $region106: #{conjugated_grad_forward.34} parent=99 // pred_check_branch
        %1139 = sbr.rel (%p1137) target = $region108
      $region107: #{conjugated_grad_forward.34} parent=99 // pred_region
        %p1140 = scmp.lt.s32.totalorder %s32, 1
        %s1141 = scalar_select %p1140, %s32, 1
        %s1142 = smul.addr %s1141, 2
        %s1143 = smul.addr %s1142, 8
        %s1144 = scalar_lea.vmem %s13, %s1143
      $region108: #{conjugated_grad_forward.34} parent=99 // pred_fallthru
        _
      // Predicated region
      $region109: #{conjugated_grad_forward.34} parent=99 // pred_check
        %p1145 = pneg %p414
      $region110: #{conjugated_grad_forward.34} parent=99 // pred_check_branch
        %1147 = sbr.rel (%p1145) target = $region112
      $region111: #{conjugated_grad_forward.34} parent=99 // pred_region
        %p1148 = scmp.lt.s32.totalorder %s32, 1
        %s1149 = scalar_select %p1148, %s32, 1
        %s1150 = smul.addr %s1149, 2
        %s1151 = smul.addr %s1150, 8
        %s1152 = scalar_lea.vmem %s14, %s1151
      $region112: #{conjugated_grad_forward.34} parent=99 // pred_fallthru
        _
      // Predicated region
      $region113: #{conjugated_grad_forward.34} parent=99 // pred_check
        %p1153 = pneg %p440
      $region114: #{conjugated_grad_forward.34} parent=99 // pred_check_branch
        %1155 = sbr.rel (%p1153) target = $region116
      $region115: #{conjugated_grad_forward.34} parent=99 // pred_region
        %p1156 = scmp.lt.s32.totalorder %s32, 1
        %s1157 = scalar_select %p1156, %s32, 1
        %s1158 = smul.addr %s1157, 2
        %s1159 = smul.addr %s1158, 8
        %s1160 = scalar_lea.vmem %s15, %s1159
      $region116: #{conjugated_grad_forward.34} parent=99 // pred_fallthru
        _
      // Predicated region
      $region117: #{conjugated_grad_forward.34} parent=99 // pred_check
        %p1161 = pneg %p466
      $region118: #{conjugated_grad_forward.34} parent=99 // pred_check_branch
        %1163 = sbr.rel (%p1161) target = $region120
      $region119: #{conjugated_grad_forward.34} parent=99 // pred_region
        %p1164 = scmp.lt.s32.totalorder %s32, 1
        %s1165 = scalar_select %p1164, %s32, 1
        %s1166 = smul.addr %s1165, 2
        %s1167 = smul.addr %s1166, 8
        %s1168 = scalar_lea.vmem %s16, %s1167
      $region120: #{conjugated_grad_forward.34} parent=99 // pred_fallthru
        _
      // Predicated region
      $region121: #{conjugated_grad_forward.34} parent=99 // pred_check
        %p1169 = pneg %p492
      $region122: #{conjugated_grad_forward.34} parent=99 // pred_check_branch
        %1171 = sbr.rel (%p1169) target = $region124
      $region123: #{conjugated_grad_forward.34} parent=99 // pred_region
        %p1172 = scmp.lt.s32.totalorder %s32, 1
        %s1173 = scalar_select %p1172, %s32, 1
        %s1174 = smul.addr %s1173, 2
        %s1175 = smul.addr %s1174, 8
        %s1176 = scalar_lea.vmem %s17, %s1175
      $region124: #{conjugated_grad_forward.34} parent=99 // pred_fallthru
        _
      // Predicated region
      $region125: #{conjugated_grad_forward.34} parent=99 // pred_check
        %p1177 = pneg %p518
      $region126: #{conjugated_grad_forward.34} parent=99 // pred_check_branch
        %1179 = sbr.rel (%p1177) target = $region128
      $region127: #{conjugated_grad_forward.34} parent=99 // pred_region
        %p1180 = scmp.lt.s32.totalorder %s32, 1
        %s1181 = scalar_select %p1180, %s32, 1
        %s1182 = scalar_lea.vmem %s18, %s1181
      $region128: #{conjugated_grad_forward.34} parent=99 // pred_fallthru
        _
    $region100: #{conjugated_grad_forward.34} parent=5 // pred_fallthru
      _
  $region6: #{conjugated_grad_forward.34} parent=0 // loop_footer
    %s30 = sadd.s32 1, %s26
  $region7: #{conjugated_grad_forward.34} parent=0 // loop_footer_branch
    %25 = sbr.rel target = $region3
  $region8: #{conjugated_grad_forward.34} parent=0 // loop_exit
    _

// kernel: conjugated_grad_forward.61
$region0: #{conjugated_grad_forward.61}
  #allocation0 [shape = 'u32[]', space=smem, size = 0x4, offset = 0x4, fixed_abs, tag = 'smem constant byte address 0x4 - core index']
  #allocation1 [shape = 'u32[144,128]{1,0:T(1,128)}', space=vmem, size = 0x12000, scoped, tag = 'internal scratch']
  #allocation2 [shape = 'f32[1]{0:T(128)S(6)}', space=smem, size = 0x200, scoped, tag = 'scoped memory for conjugated_grad_forward.61']
  %s0 = inlined_call_operand.vmem [shape: f32[2,4,16,16], index: 0, kind: input, shape index: {}]
  %s1 = inlined_call_operand.vmem [shape: f32[2,4,16,16], index: 1, kind: input, shape index: {}]
  %s2 = inlined_call_operand.vmem [shape: f32[2,4,16,16], index: 2, kind: input, shape index: {}]
  %s3 = inlined_call_operand.vmem [shape: f32[2,4,16,16], index: 3, kind: input, shape index: {}]
  %s4 = inlined_call_operand.vmem [shape: f32[2,16,16], index: 4, kind: input, shape index: {}]
  %s5 = inlined_call_operand.vmem [shape: f32[2,16,16], index: 5, kind: input, shape index: {}]
  %s6 = inlined_call_operand.vmem [shape: f32[2,16,16], index: 6, kind: input, shape index: {}]
  %s7 = inlined_call_operand.vmem [shape: f32[2,16,16], index: 7, kind: input, shape index: {}]
  %s8 = inlined_call_operand.vmem [shape: f32[2,16,16], index: 8, kind: input, shape index: {}]
  %s9 = inlined_call_operand.vmem [shape: f32[2,16,16], index: 9, kind: input, shape index: {}]
  %s10 = inlined_call_operand.vmem [shape: f32[2,1,1], index: 10, kind: input, shape index: {}]
  %s11 = inlined_call_operand.<no memory space> [shape: f32[1], index: 11, kind: input, shape index: {}]
  %s12 = inlined_call_operand.vmem [shape: f32[2,16,16], index: 12, kind: output, shape index: {0}]
  %s13 = inlined_call_operand.vmem [shape: f32[2,16,16], index: 13, kind: output, shape index: {1}]
  %s14 = inlined_call_operand.hbm [shape: f32[2,16,16], index: 14, kind: output, shape index: {2}]
  %s15 = inlined_call_operand.hbm [shape: f32[2,16,16], index: 15, kind: output, shape index: {3}]
  %s16 = inlined_call_operand.hbm [shape: f32[2,16,16], index: 16, kind: output, shape index: {4}]
  %s17 = inlined_call_operand.hbm [shape: f32[2,16,16], index: 17, kind: output, shape index: {5}]
  %s18 = inlined_call_operand.hbm [shape: f32[2,1,1], index: 18, kind: output, shape index: {6}]
  %19 = xla_tuple %s12, %s13, %s14, %s15, %s16, %s17, %s18
  %s20 = sld [smem:[#allocation0]]
  $region129: #{conjugated_grad_forward.61} parent=0
    _
  %s22 = ssub.s32 1, %s20
  %s23 = scalar_select 0, %s22, %s20
  %24 = sst [smem:[#allocation2]] %s11
  $region1: #{conjugated_grad_forward.61} parent=0
    #allocation3 [shape = 'u8[16384]{0}', space=vmem, size = 0x4000, scoped, tag = 'output window, operand 2']
    #allocation4 [shape = 's32[2]{0}', space=sflag, size = 0x8, scoped, tag = 'scoped memory for conjugated_grad_forward.61']
    #allocation5 [shape = 'u8[16384]{0}', space=vmem, size = 0x4000, scoped, tag = 'output window, operand 3']
    #allocation6 [shape = 's32[2]{0}', space=sflag, size = 0x8, scoped, tag = 'scoped memory for conjugated_grad_forward.61']
    #allocation7 [shape = 'u8[16384]{0}', space=vmem, size = 0x4000, scoped, tag = 'output window, operand 4']
    #allocation8 [shape = 'u8[16384]{0}', space=vmem, size = 0x4000, scoped, tag = 'output window, operand 5']
    #allocation9 [shape = 's32[2]{0}', space=sflag, size = 0x8, scoped, tag = 'scoped memory for conjugated_grad_forward.61']
    #allocation10 [shape = 'u8[1024]{0}', space=vmem, size = 0x400, scoped, tag = 'output window, operand 6']
    %25 = vsyncpa [#allocation4], 0
    %s26 = scalar_lea.sflag [#allocation4], 1
    %27 = vsyncpa %s26, 0
    %28 = vsyncpa [#allocation6], 0
    %s29 = scalar_lea.sflag [#allocation6], 1
    %30 = vsyncpa %s29, 0
    %31 = vsyncpa [#allocation9], 0
    %s32 = scalar_lea.sflag [#allocation9], 1
    %33 = vsyncpa %s32, 0
    loop: start=0, step=1, limit=4
    $region2: #{conjugated_grad_forward.61} parent=1 // loop_pre_header
      _
    $region3: #{conjugated_grad_forward.61} parent=1 // loop_header
      %s35 = sphi 0, %s39
      %p36 = scmp.ge.s32.totalorder %s35, 4
      %s45 = sphi 0, %s47
      %s48 = sphi 0, %s45
      %s49 = sphi 0, %s48
      %s65 = sphi 0, %s49
      %s71 = sphi 0, %s73
      %s74 = sphi 0, %s71
      %s75 = sphi 0, %s74
      %s91 = sphi 0, %s75
      %s97 = sphi 0, %s99
      %s100 = sphi 0, %s97
      %s101 = sphi 0, %s100
      %s117 = sphi 0, %s101
      %s123 = sphi 0, %s125
      %s126 = sphi 0, %s123
      %s127 = sphi 0, %s126
      %s143 = sphi 0, %s127
      %s149 = sphi 0, %s151
      %s152 = sphi 0, %s149
      %s153 = sphi 0, %s152
      %s169 = sphi 0, %s153
      %s175 = sphi 0, %s177
      %s178 = sphi 0, %s175
      %s179 = sphi 0, %s178
      %s195 = sphi 0, %s179
      %s201 = sphi 0, %s203
      %s204 = sphi 0, %s201
      %s205 = sphi 0, %s204
      %s221 = sphi 0, %s205
      %s227 = sphi 0, %s229
      %s230 = sphi 0, %s227
      %s231 = sphi 0, %s230
      %s247 = sphi 0, %s231
      %s253 = sphi 0, %s255
      %s256 = sphi 0, %s253
      %s257 = sphi 0, %s256
      %s273 = sphi 0, %s257
      %s279 = sphi 0, %s281
      %s282 = sphi 0, %s279
      %s283 = sphi 0, %s282
      %s299 = sphi 0, %s283
      %s305 = sphi 0, %s307
      %s308 = sphi 0, %s305
      %s309 = sphi 0, %s308
      %s325 = sphi 0, %s309
      %s329 = sphi 0, %s329
      %s331 = sphi 0, %s329
      %s332 = sphi 0, %s331
      %s346 = sphi 0, %s332
      %s352 = sphi 0, %s354
      %s355 = sphi 0, %s352
      %s356 = sphi 0, %s355
      %s372 = sphi 0, %s356
      %s378 = sphi 0, %s380
      %s381 = sphi 0, %s378
      %s382 = sphi 0, %s381
      %s398 = sphi 0, %s382
      %s404 = sphi 0, %s406
      %s407 = sphi 0, %s404
      %s408 = sphi 0, %s407
      %s424 = sphi 0, %s408
      %s430 = sphi 0, %s432
      %s433 = sphi 0, %s430
      %s434 = sphi 0, %s433
      %s450 = sphi 0, %s434
      %s456 = sphi 0, %s458
      %s459 = sphi 0, %s456
      %s460 = sphi 0, %s459
      %s476 = sphi 0, %s460
      %s482 = sphi 0, %s484
      %s485 = sphi 0, %s482
      %s486 = sphi 0, %s485
      %s502 = sphi 0, %s486
      %s508 = sphi 0, %s510
      %s511 = sphi 0, %s508
      %s512 = sphi 0, %s511
      %s528 = sphi 0, %s512
    $region4: #{conjugated_grad_forward.61} parent=1 // loop_header_branch
      %38 = sbr.rel (%p36) target = $region8
    $region5: #{conjugated_grad_forward.61} parent=1 // loop_body
      %s40 = ssub.s32 %s35, 1
      %s41 = ssub.s32 %s35, 2
      %s42 = sadd.s32 %s35, 1
      %s43 = ssub.s32 %s35, %s42
      %p44 = scmp.eq.s32.totalorder %s43, 0
      %s46 = sadd.s32 %s45, 1
      %s47 = scalar_select %p44, %s45, %s46
      %p50 = pneg %p44
      %p51 = scmp.eq.s32.totalorder %s35, 1
      %p52 = por %p50, %p51
      %p53 = scmp.ne.s32.totalorder %s45, %s48
      %p54 = scmp.eq.s32.totalorder %s35, 0
      %p55 = por %p53, %p54
      %p56 = scmp.ne.s32.totalorder %s45, %s48
      %p57 = scmp.eq.s32.totalorder %s40, 1
      %p58 = por %p56, %p57
      %p59 = scmp.ne.s32.totalorder %s48, %s49
      %p60 = scmp.eq.s32.totalorder %s40, 0
      %p61 = por %p59, %p60
      %p62 = scmp.ne.s32.totalorder %s48, %s49
      %p63 = scmp.eq.s32.totalorder %s41, 1
      %p64 = por %p62, %p63
      %p66 = scmp.ne.s32.totalorder %s49, %s65
      %p67 = scmp.eq.s32.totalorder %s41, 0
      %p68 = por %p66, %p67
      %s69 = ssub.s32 %s35, %s42
      %p70 = scmp.eq.s32.totalorder %s69, 0
      %s72 = sadd.s32 %s71, 1
      %s73 = scalar_select %p70, %s71, %s72
      %p76 = pneg %p70
      %p77 = scmp.eq.s32.totalorder %s35, 1
      %p78 = por %p76, %p77
      %p79 = scmp.ne.s32.totalorder %s71, %s74
      %p80 = scmp.eq.s32.totalorder %s35, 0
      %p81 = por %p79, %p80
      %p82 = scmp.ne.s32.totalorder %s71, %s74
      %p83 = scmp.eq.s32.totalorder %s40, 1
      %p84 = por %p82, %p83
      %p85 = scmp.ne.s32.totalorder %s74, %s75
      %p86 = scmp.eq.s32.totalorder %s40, 0
      %p87 = por %p85, %p86
      %p88 = scmp.ne.s32.totalorder %s74, %s75
      %p89 = scmp.eq.s32.totalorder %s41, 1
      %p90 = por %p88, %p89
      %p92 = scmp.ne.s32.totalorder %s75, %s91
      %p93 = scmp.eq.s32.totalorder %s41, 0
      %p94 = por %p92, %p93
      %s95 = ssub.s32 %s35, %s42
      %p96 = scmp.eq.s32.totalorder %s95, 0
      %s98 = sadd.s32 %s97, 1
      %s99 = scalar_select %p96, %s97, %s98
      %p102 = pneg %p96
      %p103 = scmp.eq.s32.totalorder %s35, 1
      %p104 = por %p102, %p103
      %p105 = scmp.ne.s32.totalorder %s97, %s100
      %p106 = scmp.eq.s32.totalorder %s35, 0
      %p107 = por %p105, %p106
      %p108 = scmp.ne.s32.totalorder %s97, %s100
      %p109 = scmp.eq.s32.totalorder %s40, 1
      %p110 = por %p108, %p109
      %p111 = scmp.ne.s32.totalorder %s100, %s101
      %p112 = scmp.eq.s32.totalorder %s40, 0
      %p113 = por %p111, %p112
      %p114 = scmp.ne.s32.totalorder %s100, %s101
      %p115 = scmp.eq.s32.totalorder %s41, 1
      %p116 = por %p114, %p115
      %p118 = scmp.ne.s32.totalorder %s101, %s117
      %p119 = scmp.eq.s32.totalorder %s41, 0
      %p120 = por %p118, %p119
      %s121 = ssub.s32 %s35, %s42
      %p122 = scmp.eq.s32.totalorder %s121, 0
      %s124 = sadd.s32 %s123, 1
      %s125 = scalar_select %p122, %s123, %s124
      %p128 = pneg %p122
      %p129 = scmp.eq.s32.totalorder %s35, 1
      %p130 = por %p128, %p129
      %p131 = scmp.ne.s32.totalorder %s123, %s126
      %p132 = scmp.eq.s32.totalorder %s35, 0
      %p133 = por %p131, %p132
      %p134 = scmp.ne.s32.totalorder %s123, %s126
      %p135 = scmp.eq.s32.totalorder %s40, 1
      %p136 = por %p134, %p135
      %p137 = scmp.ne.s32.totalorder %s126, %s127
      %p138 = scmp.eq.s32.totalorder %s40, 0
      %p139 = por %p137, %p138
      %p140 = scmp.ne.s32.totalorder %s126, %s127
      %p141 = scmp.eq.s32.totalorder %s41, 1
      %p142 = por %p140, %p141
      %p144 = scmp.ne.s32.totalorder %s127, %s143
      %p145 = scmp.eq.s32.totalorder %s41, 0
      %p146 = por %p144, %p145
      %s147 = ssub.s32 %s35, %s42
      %p148 = scmp.eq.s32.totalorder %s147, 0
      %s150 = sadd.s32 %s149, 1
      %s151 = scalar_select %p148, %s149, %s150
      %p154 = pneg %p148
      %p155 = scmp.eq.s32.totalorder %s35, 1
      %p156 = por %p154, %p155
      %p157 = scmp.ne.s32.totalorder %s149, %s152
      %p158 = scmp.eq.s32.totalorder %s35, 0
      %p159 = por %p157, %p158
      %p160 = scmp.ne.s32.totalorder %s149, %s152
      %p161 = scmp.eq.s32.totalorder %s40, 1
      %p162 = por %p160, %p161
      %p163 = scmp.ne.s32.totalorder %s152, %s153
      %p164 = scmp.eq.s32.totalorder %s40, 0
      %p165 = por %p163, %p164
      %p166 = scmp.ne.s32.totalorder %s152, %s153
      %p167 = scmp.eq.s32.totalorder %s41, 1
      %p168 = por %p166, %p167
      %p170 = scmp.ne.s32.totalorder %s153, %s169
      %p171 = scmp.eq.s32.totalorder %s41, 0
      %p172 = por %p170, %p171
      %s173 = ssub.s32 %s35, %s42
      %p174 = scmp.eq.s32.totalorder %s173, 0
      %s176 = sadd.s32 %s175, 1
      %s177 = scalar_select %p174, %s175, %s176
      %p180 = pneg %p174
      %p181 = scmp.eq.s32.totalorder %s35, 1
      %p182 = por %p180, %p181
      %p183 = scmp.ne.s32.totalorder %s175, %s178
      %p184 = scmp.eq.s32.totalorder %s35, 0
      %p185 = por %p183, %p184
      %p186 = scmp.ne.s32.totalorder %s175, %s178
      %p187 = scmp.eq.s32.totalorder %s40, 1
      %p188 = por %p186, %p187
      %p189 = scmp.ne.s32.totalorder %s178, %s179
      %p190 = scmp.eq.s32.totalorder %s40, 0
      %p191 = por %p189, %p190
      %p192 = scmp.ne.s32.totalorder %s178, %s179
      %p193 = scmp.eq.s32.totalorder %s41, 1
      %p194 = por %p192, %p193
      %p196 = scmp.ne.s32.totalorder %s179, %s195
      %p197 = scmp.eq.s32.totalorder %s41, 0
      %p198 = por %p196, %p197
      %s199 = ssub.s32 %s35, %s42
      %p200 = scmp.eq.s32.totalorder %s199, 0
      %s202 = sadd.s32 %s201, 1
      %s203 = scalar_select %p200, %s201, %s202
      %p206 = pneg %p200
      %p207 = scmp.eq.s32.totalorder %s35, 1
      %p208 = por %p206, %p207
      %p209 = scmp.ne.s32.totalorder %s201, %s204
      %p210 = scmp.eq.s32.totalorder %s35, 0
      %p211 = por %p209, %p210
      %p212 = scmp.ne.s32.totalorder %s201, %s204
      %p213 = scmp.eq.s32.totalorder %s40, 1
      %p214 = por %p212, %p213
      %p215 = scmp.ne.s32.totalorder %s204, %s205
      %p216 = scmp.eq.s32.totalorder %s40, 0
      %p217 = por %p215, %p216
      %p218 = scmp.ne.s32.totalorder %s204, %s205
      %p219 = scmp.eq.s32.totalorder %s41, 1
      %p220 = por %p218, %p219
      %p222 = scmp.ne.s32.totalorder %s205, %s221
      %p223 = scmp.eq.s32.totalorder %s41, 0
      %p224 = por %p222, %p223
      %s225 = ssub.s32 %s35, %s42
      %p226 = scmp.eq.s32.totalorder %s225, 0
      %s228 = sadd.s32 %s227, 1
      %s229 = scalar_select %p226, %s227, %s228
      %p232 = pneg %p226
      %p233 = scmp.eq.s32.totalorder %s35, 1
      %p234 = por %p232, %p233
      %p235 = scmp.ne.s32.totalorder %s227, %s230
      %p236 = scmp.eq.s32.totalorder %s35, 0
      %p237 = por %p235, %p236
      %p238 = scmp.ne.s32.totalorder %s227, %s230
      %p239 = scmp.eq.s32.totalorder %s40, 1
      %p240 = por %p238, %p239
      %p241 = scmp.ne.s32.totalorder %s230, %s231
      %p242 = scmp.eq.s32.totalorder %s40, 0
      %p243 = por %p241, %p242
      %p244 = scmp.ne.s32.totalorder %s230, %s231
      %p245 = scmp.eq.s32.totalorder %s41, 1
      %p246 = por %p244, %p245
      %p248 = scmp.ne.s32.totalorder %s231, %s247
      %p249 = scmp.eq.s32.totalorder %s41, 0
      %p250 = por %p248, %p249
      %s251 = ssub.s32 %s35, %s42
      %p252 = scmp.eq.s32.totalorder %s251, 0
      %s254 = sadd.s32 %s253, 1
      %s255 = scalar_select %p252, %s253, %s254
      %p258 = pneg %p252
      %p259 = scmp.eq.s32.totalorder %s35, 1
      %p260 = por %p258, %p259
      %p261 = scmp.ne.s32.totalorder %s253, %s256
      %p262 = scmp.eq.s32.totalorder %s35, 0
      %p263 = por %p261, %p262
      %p264 = scmp.ne.s32.totalorder %s253, %s256
      %p265 = scmp.eq.s32.totalorder %s40, 1
      %p266 = por %p264, %p265
      %p267 = scmp.ne.s32.totalorder %s256, %s257
      %p268 = scmp.eq.s32.totalorder %s40, 0
      %p269 = por %p267, %p268
      %p270 = scmp.ne.s32.totalorder %s256, %s257
      %p271 = scmp.eq.s32.totalorder %s41, 1
      %p272 = por %p270, %p271
      %p274 = scmp.ne.s32.totalorder %s257, %s273
      %p275 = scmp.eq.s32.totalorder %s41, 0
      %p276 = por %p274, %p275
      %s277 = ssub.s32 %s35, %s42
      %p278 = scmp.eq.s32.totalorder %s277, 0
      %s280 = sadd.s32 %s279, 1
      %s281 = scalar_select %p278, %s279, %s280
      %p284 = pneg %p278
      %p285 = scmp.eq.s32.totalorder %s35, 1
      %p286 = por %p284, %p285
      %p287 = scmp.ne.s32.totalorder %s279, %s282
      %p288 = scmp.eq.s32.totalorder %s35, 0
      %p289 = por %p287, %p288
      %p290 = scmp.ne.s32.totalorder %s279, %s282
      %p291 = scmp.eq.s32.totalorder %s40, 1
      %p292 = por %p290, %p291
      %p293 = scmp.ne.s32.totalorder %s282, %s283
      %p294 = scmp.eq.s32.totalorder %s40, 0
      %p295 = por %p293, %p294
      %p296 = scmp.ne.s32.totalorder %s282, %s283
      %p297 = scmp.eq.s32.totalorder %s41, 1
      %p298 = por %p296, %p297
      %p300 = scmp.ne.s32.totalorder %s283, %s299
      %p301 = scmp.eq.s32.totalorder %s41, 0
      %p302 = por %p300, %p301
      %s303 = ssub.s32 %s35, %s42
      %p304 = scmp.eq.s32.totalorder %s303, 0
      %s306 = sadd.s32 %s305, 1
      %s307 = scalar_select %p304, %s305, %s306
      %p310 = pneg %p304
      %p311 = scmp.eq.s32.totalorder %s35, 1
      %p312 = por %p310, %p311
      %p313 = scmp.ne.s32.totalorder %s305, %s308
      %p314 = scmp.eq.s32.totalorder %s35, 0
      %p315 = por %p313, %p314
      %p316 = scmp.ne.s32.totalorder %s305, %s308
      %p317 = scmp.eq.s32.totalorder %s40, 1
      %p318 = por %p316, %p317
      %p319 = scmp.ne.s32.totalorder %s308, %s309
      %p320 = scmp.eq.s32.totalorder %s40, 0
      %p321 = por %p319, %p320
      %p322 = scmp.ne.s32.totalorder %s308, %s309
      %p323 = scmp.eq.s32.totalorder %s41, 1
      %p324 = por %p322, %p323
      %p326 = scmp.ne.s32.totalorder %s309, %s325
      %p327 = scmp.eq.s32.totalorder %s41, 0
      %p328 = por %p326, %p327
      %s330 = sadd.s32 %s329, 1
      %p333 = scmp.eq.s32.totalorder %s35, 1
      %p334 = scmp.ne.s32.totalorder %s329, %s331
      %p335 = scmp.eq.s32.totalorder %s35, 0
      %p336 = por %p334, %p335
      %p337 = scmp.ne.s32.totalorder %s329, %s331
      %p338 = scmp.eq.s32.totalorder %s40, 1
      %p339 = por %p337, %p338
      %p340 = scmp.ne.s32.totalorder %s331, %s332
      %p341 = scmp.eq.s32.totalorder %s40, 0
      %p342 = por %p340, %p341
      %p343 = scmp.ne.s32.totalorder %s331, %s332
      %p344 = scmp.eq.s32.totalorder %s41, 1
      %p345 = por %p343, %p344
      %p347 = scmp.ne.s32.totalorder %s332, %s346
      %p348 = scmp.eq.s32.totalorder %s41, 0
      %p349 = por %p347, %p348
      %s350 = ssub.s32 %s35, %s42
      %p351 = scmp.eq.s32.totalorder %s350, 0
      %s353 = sadd.s32 %s352, 1
      %s354 = scalar_select %p351, %s352, %s353
      %p357 = pneg %p351
      %p358 = scmp.eq.s32.totalorder %s35, 1
      %p359 = por %p357, %p358
      %p360 = scmp.ne.s32.totalorder %s352, %s355
      %p361 = scmp.eq.s32.totalorder %s35, 0
      %p362 = por %p360, %p361
      %p363 = scmp.ne.s32.totalorder %s352, %s355
      %p364 = scmp.eq.s32.totalorder %s40, 1
      %p365 = por %p363, %p364
      %p366 = scmp.ne.s32.totalorder %s355, %s356
      %p367 = scmp.eq.s32.totalorder %s40, 0
      %p368 = por %p366, %p367
      %p369 = scmp.ne.s32.totalorder %s355, %s356
      %p370 = scmp.eq.s32.totalorder %s41, 1
      %p371 = por %p369, %p370
      %p373 = scmp.ne.s32.totalorder %s356, %s372
      %p374 = scmp.eq.s32.totalorder %s41, 0
      %p375 = por %p373, %p374
      %s376 = ssub.s32 %s35, %s42
      %p377 = scmp.eq.s32.totalorder %s376, 0
      %s379 = sadd.s32 %s378, 1
      %s380 = scalar_select %p377, %s378, %s379
      %p383 = pneg %p377
      %p384 = scmp.eq.s32.totalorder %s35, 1
      %p385 = por %p383, %p384
      %p386 = scmp.ne.s32.totalorder %s378, %s381
      %p387 = scmp.eq.s32.totalorder %s35, 0
      %p388 = por %p386, %p387
      %p389 = scmp.ne.s32.totalorder %s378, %s381
      %p390 = scmp.eq.s32.totalorder %s40, 1
      %p391 = por %p389, %p390
      %p392 = scmp.ne.s32.totalorder %s381, %s382
      %p393 = scmp.eq.s32.totalorder %s40, 0
      %p394 = por %p392, %p393
      %p395 = scmp.ne.s32.totalorder %s381, %s382
      %p396 = scmp.eq.s32.totalorder %s41, 1
      %p397 = por %p395, %p396
      %p399 = scmp.ne.s32.totalorder %s382, %s398
      %p400 = scmp.eq.s32.totalorder %s41, 0
      %p401 = por %p399, %p400
      %s402 = ssub.s32 %s35, %s42
      %p403 = scmp.eq.s32.totalorder %s402, 0
      %s405 = sadd.s32 %s404, 1
      %s406 = scalar_select %p403, %s404, %s405
      %p409 = pneg %p403
      %p410 = scmp.eq.s32.totalorder %s35, 1
      %p411 = por %p409, %p410
      %p412 = scmp.ne.s32.totalorder %s404, %s407
      %p413 = scmp.eq.s32.totalorder %s35, 0
      %p414 = por %p412, %p413
      %p415 = scmp.ne.s32.totalorder %s404, %s407
      %p416 = scmp.eq.s32.totalorder %s40, 1
      %p417 = por %p415, %p416
      %p418 = scmp.ne.s32.totalorder %s407, %s408
      %p419 = scmp.eq.s32.totalorder %s40, 0
      %p420 = por %p418, %p419
      %p421 = scmp.ne.s32.totalorder %s407, %s408
      %p422 = scmp.eq.s32.totalorder %s41, 1
      %p423 = por %p421, %p422
      %p425 = scmp.ne.s32.totalorder %s408, %s424
      %p426 = scmp.eq.s32.totalorder %s41, 0
      %p427 = por %p425, %p426
      %s428 = ssub.s32 %s35, %s42
      %p429 = scmp.eq.s32.totalorder %s428, 0
      %s431 = sadd.s32 %s430, 1
      %s432 = scalar_select %p429, %s430, %s431
      %p435 = pneg %p429
      %p436 = scmp.eq.s32.totalorder %s35, 1
      %p437 = por %p435, %p436
      %p438 = scmp.ne.s32.totalorder %s430, %s433
      %p439 = scmp.eq.s32.totalorder %s35, 0
      %p440 = por %p438, %p439
      %p441 = scmp.ne.s32.totalorder %s430, %s433
      %p442 = scmp.eq.s32.totalorder %s40, 1
      %p443 = por %p441, %p442
      %p444 = scmp.ne.s32.totalorder %s433, %s434
      %p445 = scmp.eq.s32.totalorder %s40, 0
      %p446 = por %p444, %p445
      %p447 = scmp.ne.s32.totalorder %s433, %s434
      %p448 = scmp.eq.s32.totalorder %s41, 1
      %p449 = por %p447, %p448
      %p451 = scmp.ne.s32.totalorder %s434, %s450
      %p452 = scmp.eq.s32.totalorder %s41, 0
      %p453 = por %p451, %p452
      %s454 = ssub.s32 %s35, %s42
      %p455 = scmp.eq.s32.totalorder %s454, 0
      %s457 = sadd.s32 %s456, 1
      %s458 = scalar_select %p455, %s456, %s457
      %p461 = pneg %p455
      %p462 = scmp.eq.s32.totalorder %s35, 1
      %p463 = por %p461, %p462
      %p464 = scmp.ne.s32.totalorder %s456, %s459
      %p465 = scmp.eq.s32.totalorder %s35, 0
      %p466 = por %p464, %p465
      %p467 = scmp.ne.s32.totalorder %s456, %s459
      %p468 = scmp.eq.s32.totalorder %s40, 1
      %p469 = por %p467, %p468
      %p470 = scmp.ne.s32.totalorder %s459, %s460
      %p471 = scmp.eq.s32.totalorder %s40, 0
      %p472 = por %p470, %p471
      %p473 = scmp.ne.s32.totalorder %s459, %s460
      %p474 = scmp.eq.s32.totalorder %s41, 1
      %p475 = por %p473, %p474
      %p477 = scmp.ne.s32.totalorder %s460, %s476
      %p478 = scmp.eq.s32.totalorder %s41, 0
      %p479 = por %p477, %p478
      %s480 = ssub.s32 %s35, %s42
      %p481 = scmp.eq.s32.totalorder %s480, 0
      %s483 = sadd.s32 %s482, 1
      %s484 = scalar_select %p481, %s482, %s483
      %p487 = pneg %p481
      %p488 = scmp.eq.s32.totalorder %s35, 1
      %p489 = por %p487, %p488
      %p490 = scmp.ne.s32.totalorder %s482, %s485
      %p491 = scmp.eq.s32.totalorder %s35, 0
      %p492 = por %p490, %p491
      %p493 = scmp.ne.s32.totalorder %s482, %s485
      %p494 = scmp.eq.s32.totalorder %s40, 1
      %p495 = por %p493, %p494
      %p496 = scmp.ne.s32.totalorder %s485, %s486
      %p497 = scmp.eq.s32.totalorder %s40, 0
      %p498 = por %p496, %p497
      %p499 = scmp.ne.s32.totalorder %s485, %s486
      %p500 = scmp.eq.s32.totalorder %s41, 1
      %p501 = por %p499, %p500
      %p503 = scmp.ne.s32.totalorder %s486, %s502
      %p504 = scmp.eq.s32.totalorder %s41, 0
      %p505 = por %p503, %p504
      %s506 = ssub.s32 %s35, %s42
      %p507 = scmp.eq.s32.totalorder %s506, 0
      %s509 = sadd.s32 %s508, 1
      %s510 = scalar_select %p507, %s508, %s509
      %p513 = pneg %p507
      %p514 = scmp.eq.s32.totalorder %s35, 1
      %p515 = por %p513, %p514
      %p516 = scmp.ne.s32.totalorder %s508, %s511
      %p517 = scmp.eq.s32.totalorder %s35, 0
      %p518 = por %p516, %p517
      %p519 = scmp.ne.s32.totalorder %s508, %s511
      %p520 = scmp.eq.s32.totalorder %s40, 1
      %p521 = por %p519, %p520
      %p522 = scmp.ne.s32.totalorder %s511, %s512
      %p523 = scmp.eq.s32.totalorder %s40, 0
      %p524 = por %p522, %p523
      %p525 = scmp.ne.s32.totalorder %s511, %s512
      %p526 = scmp.eq.s32.totalorder %s41, 1
      %p527 = por %p525, %p526
      %p529 = scmp.ne.s32.totalorder %s512, %s528
      %p530 = scmp.eq.s32.totalorder %s41, 0
      %p531 = por %p529, %p530
      %p532 = scmp.le.s32.totalorder 1, %s35
      %p533 = scmp.lt.s32.totalorder %s35, 3
      %p534 = pnand %p532, %p533
      %p535 = pneg %p534
      // Predicated region
      $region9: #{conjugated_grad_forward.61} parent=5 // pred_check
        _
      $region10: #{conjugated_grad_forward.61} parent=5 // pred_check_branch
        %537 = sbr.rel (%p534) target = $region12
      $region11: #{conjugated_grad_forward.61} parent=5 // pred_region
        %s538 = ssub.s32 %s35, 1
        // Predicated region
        $region13: #{conjugated_grad_forward.61} parent=11 // pred_check
          %p539 = pneg %p342
        $region14: #{conjugated_grad_forward.61} parent=11 // pred_check_branch
          %541 = sbr.rel (%p539) target = $region16
        $region15: #{conjugated_grad_forward.61} parent=11 // pred_region
          _
        $region16: #{conjugated_grad_forward.61} parent=11 // pred_fallthru
          _
      $region12: #{conjugated_grad_forward.61} parent=5 // pred_fallthru
        _
      %p542 = scmp.lt.s32.totalorder %s35, 2
      // Predicated region
      $region17: #{conjugated_grad_forward.61} parent=5 // pred_check
        %p543 = pneg %p542
      $region18: #{conjugated_grad_forward.61} parent=5 // pred_check_branch
        %545 = sbr.rel (%p543) target = $region20
      $region19: #{conjugated_grad_forward.61} parent=5 // pred_region
        // Predicated region
        $region21: #{conjugated_grad_forward.61} parent=19 // pred_check
          %p546 = pneg %p55
        $region22: #{conjugated_grad_forward.61} parent=19 // pred_check_branch
          %548 = sbr.rel (%p546) target = $region24
        $region23: #{conjugated_grad_forward.61} parent=19 // pred_region
          %p549 = scmp.lt.s32.totalorder %s35, 1
          %s550 = scalar_select %p549, %s35, 1
          %s551 = smul.addr %s550, 8
          %s552 = smul.addr %s551, 8
          %s553 = scalar_lea.vmem %s0, %s552
        $region24: #{conjugated_grad_forward.61} parent=19 // pred_fallthru
          _
        // Predicated region
        $region25: #{conjugated_grad_forward.61} parent=19 // pred_check
          %p554 = pneg %p81
        $region26: #{conjugated_grad_forward.61} parent=19 // pred_check_branch
          %556 = sbr.rel (%p554) target = $region28
        $region27: #{conjugated_grad_forward.61} parent=19 // pred_region
          %p557 = scmp.lt.s32.totalorder %s35, 1
          %s558 = scalar_select %p557, %s35, 1
          %s559 = smul.addr %s558, 8
          %s560 = smul.addr %s559, 8
          %s561 = scalar_lea.vmem %s1, %s560
        $region28: #{conjugated_grad_forward.61} parent=19 // pred_fallthru
          _
        // Predicated region
        $region29: #{conjugated_grad_forward.61} parent=19 // pred_check
          %p562 = pneg %p107
        $region30: #{conjugated_grad_forward.61} parent=19 // pred_check_branch
          %564 = sbr.rel (%p562) target = $region32
        $region31: #{conjugated_grad_forward.61} parent=19 // pred_region
          %p565 = scmp.lt.s32.totalorder %s35, 1
          %s566 = scalar_select %p565, %s35, 1
          %s567 = smul.addr %s566, 8
          %s568 = smul.addr %s567, 8
          %s569 = scalar_lea.vmem %s2, %s568
        $region32: #{conjugated_grad_forward.61} parent=19 // pred_fallthru
          _
        // Predicated region
        $region33: #{conjugated_grad_forward.61} parent=19 // pred_check
          %p570 = pneg %p133
        $region34: #{conjugated_grad_forward.61} parent=19 // pred_check_branch
          %572 = sbr.rel (%p570) target = $region36
        $region35: #{conjugated_grad_forward.61} parent=19 // pred_region
          %p573 = scmp.lt.s32.totalorder %s35, 1
          %s574 = scalar_select %p573, %s35, 1
          %s575 = smul.addr %s574, 8
          %s576 = smul.addr %s575, 8
          %s577 = scalar_lea.vmem %s3, %s576
        $region36: #{conjugated_grad_forward.61} parent=19 // pred_fallthru
          _
        // Predicated region
        $region37: #{conjugated_grad_forward.61} parent=19 // pred_check
          %p578 = pneg %p159
        $region38: #{conjugated_grad_forward.61} parent=19 // pred_check_branch
          %580 = sbr.rel (%p578) target = $region40
        $region39: #{conjugated_grad_forward.61} parent=19 // pred_region
          %p581 = scmp.lt.s32.totalorder %s35, 1
          %s582 = scalar_select %p581, %s35, 1
          %s583 = smul.addr %s582, 2
          %s584 = smul.addr %s583, 8
          %s585 = scalar_lea.vmem %s4, %s584
        $region40: #{conjugated_grad_forward.61} parent=19 // pred_fallthru
          _
        // Predicated region
        $region41: #{conjugated_grad_forward.61} parent=19 // pred_check
          %p586 = pneg %p185
        $region42: #{conjugated_grad_forward.61} parent=19 // pred_check_branch
          %588 = sbr.rel (%p586) target = $region44
        $region43: #{conjugated_grad_forward.61} parent=19 // pred_region
          %p589 = scmp.lt.s32.totalorder %s35, 1
          %s590 = scalar_select %p589, %s35, 1
          %s591 = smul.addr %s590, 2
          %s592 = smul.addr %s591, 8
          %s593 = scalar_lea.vmem %s5, %s592
        $region44: #{conjugated_grad_forward.61} parent=19 // pred_fallthru
          _
        // Predicated region
        $region45: #{conjugated_grad_forward.61} parent=19 // pred_check
          %p594 = pneg %p211
        $region46: #{conjugated_grad_forward.61} parent=19 // pred_check_branch
          %596 = sbr.rel (%p594) target = $region48
        $region47: #{conjugated_grad_forward.61} parent=19 // pred_region
          %p597 = scmp.lt.s32.totalorder %s35, 1
          %s598 = scalar_select %p597, %s35, 1
          %s599 = smul.addr %s598, 2
          %s600 = smul.addr %s599, 8
          %s601 = scalar_lea.vmem %s6, %s600
        $region48: #{conjugated_grad_forward.61} parent=19 // pred_fallthru
          _
        // Predicated region
        $region49: #{conjugated_grad_forward.61} parent=19 // pred_check
          %p602 = pneg %p237
        $region50: #{conjugated_grad_forward.61} parent=19 // pred_check_branch
          %604 = sbr.rel (%p602) target = $region52
        $region51: #{conjugated_grad_forward.61} parent=19 // pred_region
          %p605 = scmp.lt.s32.totalorder %s35, 1
          %s606 = scalar_select %p605, %s35, 1
          %s607 = smul.addr %s606, 2
          %s608 = smul.addr %s607, 8
          %s609 = scalar_lea.vmem %s7, %s608
        $region52: #{conjugated_grad_forward.61} parent=19 // pred_fallthru
          _
        // Predicated region
        $region53: #{conjugated_grad_forward.61} parent=19 // pred_check
          %p610 = pneg %p263
        $region54: #{conjugated_grad_forward.61} parent=19 // pred_check_branch
          %612 = sbr.rel (%p610) target = $region56
        $region55: #{conjugated_grad_forward.61} parent=19 // pred_region
          %p613 = scmp.lt.s32.totalorder %s35, 1
          %s614 = scalar_select %p613, %s35, 1
          %s615 = smul.addr %s614, 2
          %s616 = smul.addr %s615, 8
          %s617 = scalar_lea.vmem %s8, %s616
        $region56: #{conjugated_grad_forward.61} parent=19 // pred_fallthru
          _
        // Predicated region
        $region57: #{conjugated_grad_forward.61} parent=19 // pred_check
          %p618 = pneg %p289
        $region58: #{conjugated_grad_forward.61} parent=19 // pred_check_branch
          %620 = sbr.rel (%p618) target = $region60
        $region59: #{conjugated_grad_forward.61} parent=19 // pred_region
          %p621 = scmp.lt.s32.totalorder %s35, 1
          %s622 = scalar_select %p621, %s35, 1
          %s623 = smul.addr %s622, 2
          %s624 = smul.addr %s623, 8
          %s625 = scalar_lea.vmem %s9, %s624
        $region60: #{conjugated_grad_forward.61} parent=19 // pred_fallthru
          _
        // Predicated region
        $region61: #{conjugated_grad_forward.61} parent=19 // pred_check
          %p626 = pneg %p315
        $region62: #{conjugated_grad_forward.61} parent=19 // pred_check_branch
          %628 = sbr.rel (%p626) target = $region64
        $region63: #{conjugated_grad_forward.61} parent=19 // pred_region
          %p629 = scmp.lt.s32.totalorder %s35, 1
          %s630 = scalar_select %p629, %s35, 1
          %s631 = scalar_lea.vmem %s10, %s630
        $region64: #{conjugated_grad_forward.61} parent=19 // pred_fallthru
          _
      $region20: #{conjugated_grad_forward.61} parent=5 // pred_fallthru
        _
      %p632 = scmp.le.s32.totalorder 1, %s35
      %p633 = scmp.lt.s32.totalorder %s35, 3
      %p634 = pnand %p632, %p633
      %p635 = pneg %p634
      // Predicated region
      $region65: #{conjugated_grad_forward.61} parent=5 // pred_check
        _
      $region66: #{conjugated_grad_forward.61} parent=5 // pred_check_branch
        %637 = sbr.rel (%p634) target = $region68
      $region67: #{conjugated_grad_forward.61} parent=5 // pred_region
        %s638 = ssub.s32 %s35, 1
        %p639 = scmp.lt.s32.totalorder %s40, 1
        %s640 = scalar_select %p639, %s40, 1
        %s641 = smul.addr %s640, 8
        %s642 = smul.addr %s641, 8
        %s643 = scalar_lea.vmem %s0, %s642
        %p644 = pneg %p61
        %p645 = pneg %p58
        %p646 = scmp.lt.s32.totalorder %s40, 1
        %s647 = scalar_select %p646, %s40, 1
        %s648 = smul.addr %s647, 8
        %s649 = smul.addr %s648, 8
        %s650 = scalar_lea.vmem %s1, %s649
        %p651 = pneg %p87
        %p652 = pneg %p84
        %p653 = scmp.lt.s32.totalorder %s40, 1
        %s654 = scalar_select %p653, %s40, 1
        %s655 = smul.addr %s654, 8
        %s656 = smul.addr %s655, 8
        %s657 = scalar_lea.vmem %s2, %s656
        %p658 = pneg %p113
        %p659 = pneg %p110
        %p660 = scmp.lt.s32.totalorder %s40, 1
        %s661 = scalar_select %p660, %s40, 1
        %s662 = smul.addr %s661, 8
        %s663 = smul.addr %s662, 8
        %s664 = scalar_lea.vmem %s3, %s663
        %p665 = pneg %p139
        %p666 = pneg %p136
        %p667 = scmp.lt.s32.totalorder %s40, 1
        %s668 = scalar_select %p667, %s40, 1
        %s669 = smul.addr %s668, 2
        %s670 = smul.addr %s669, 8
        %s671 = scalar_lea.vmem %s4, %s670
        %p672 = pneg %p165
        %p673 = pneg %p162
        %p674 = scmp.lt.s32.totalorder %s40, 1
        %s675 = scalar_select %p674, %s40, 1
        %s676 = smul.addr %s675, 2
        %s677 = smul.addr %s676, 8
        %s678 = scalar_lea.vmem %s5, %s677
        %p679 = pneg %p191
        %p680 = pneg %p188
        %p681 = scmp.lt.s32.totalorder %s40, 1
        %s682 = scalar_select %p681, %s40, 1
        %s683 = smul.addr %s682, 2
        %s684 = smul.addr %s683, 8
        %s685 = scalar_lea.vmem %s6, %s684
        %p686 = pneg %p217
        %p687 = pneg %p214
        %p688 = scmp.lt.s32.totalorder %s40, 1
        %s689 = scalar_select %p688, %s40, 1
        %s690 = smul.addr %s689, 2
        %s691 = smul.addr %s690, 8
        %s692 = scalar_lea.vmem %s7, %s691
        %p693 = pneg %p243
        %p694 = pneg %p240
        %p695 = scmp.lt.s32.totalorder %s40, 1
        %s696 = scalar_select %p695, %s40, 1
        %s697 = smul.addr %s696, 2
        %s698 = smul.addr %s697, 8
        %s699 = scalar_lea.vmem %s8, %s698
        %p700 = pneg %p269
        %p701 = pneg %p266
        %p702 = scmp.lt.s32.totalorder %s40, 1
        %s703 = scalar_select %p702, %s40, 1
        %s704 = smul.addr %s703, 2
        %s705 = smul.addr %s704, 8
        %s706 = scalar_lea.vmem %s9, %s705
        %p707 = pneg %p295
        %p708 = pneg %p292
        %p709 = scmp.lt.s32.totalorder %s40, 1
        %s710 = scalar_select %p709, %s40, 1
        %s711 = scalar_lea.vmem %s10, %s710
        %p712 = pneg %p321
        %p713 = pneg %p318
        %p714 = pneg %p342
        %p715 = pneg %p339
        %p716 = pneg %p368
        %p717 = pneg %p365
        %p718 = scmp.lt.s32.totalorder %s40, 1
        %s719 = scalar_select %p718, %s40, 1
        %s720 = smul.addr %s719, 2
        %s721 = smul.addr %s720, 8
        %s722 = scalar_lea.vmem %s12, %s721
        %p723 = pneg %p394
        %p724 = pneg %p391
        %p725 = scmp.lt.s32.totalorder %s40, 1
        %s726 = scalar_select %p725, %s40, 1
        %s727 = smul.addr %s726, 2
        %s728 = smul.addr %s727, 8
        %s729 = scalar_lea.vmem %s13, %s728
        %p730 = pneg %p420
        %p731 = pneg %p417
        %s732 = sand.u32 %s407, 1
        %s733 = scalar_lea.sflag [#allocation4], %s732
        %s734 = sand.u32 %s407, 1
        %s735 = smul.addr %s734, 16
        %s736 = scalar_lea.vmem [#allocation3], %s735
        %p737 = pneg %p446
        %p738 = pneg %p443
        %s739 = sand.u32 %s40, 1
        %s740 = scalar_lea.sflag [#allocation6], %s739
        %s741 = sand.u32 %s433, 1
        %s742 = smul.addr %s741, 16
        %s743 = scalar_lea.vmem [#allocation5], %s742
        %p744 = pneg %p472
        %p745 = pneg %p469
        %s746 = sand.u32 %s40, 1
        %s747 = scalar_lea.sflag [#allocation6], %s746
        %s748 = sand.u32 %s459, 1
        %s749 = smul.addr %s748, 16
        %s750 = scalar_lea.vmem [#allocation7], %s749
        %p751 = pneg %p498
        %p752 = pneg %p495
        %s753 = sand.u32 %s40, 1
        %s754 = scalar_lea.sflag [#allocation9], %s753
        %s755 = sand.u32 %s485, 1
        %s756 = smul.addr %s755, 16
        %s757 = scalar_lea.vmem [#allocation8], %s756
        %p758 = pneg %p524
        %p759 = pneg %p521
        %s760 = sand.u32 %s40, 1
        %s761 = scalar_lea.sflag [#allocation9], %s760
        %s762 = sand.u32 %s511, 1
        %s763 = scalar_lea.vmem [#allocation10], %s762
        %p764 = scmp.lt.s32.totalorder %s40, 1
        %s765 = scalar_select %p764, %s40, 1
        %s766 = smul.addr %s765, 8
        %s767 = smul.addr %s766, 8
        %s768 = scalar_lea.vmem %s0, %s767
        %p769 = scmp.lt.s32.totalorder %s40, 1
        %s770 = scalar_select %p769, %s40, 1
        %s771 = smul.addr %s770, 8
        %s772 = smul.addr %s771, 8
        %s773 = scalar_lea.vmem %s1, %s772
        %p774 = scmp.lt.s32.totalorder %s40, 1
        %s775 = scalar_select %p774, %s40, 1
        %s776 = smul.addr %s775, 8
        %s777 = smul.addr %s776, 8
        %s778 = scalar_lea.vmem %s2, %s777
        %p779 = scmp.lt.s32.totalorder %s40, 1
        %s780 = scalar_select %p779, %s40, 1
        %s781 = smul.addr %s780, 8
        %s782 = smul.addr %s781, 8
        %s783 = scalar_lea.vmem %s3, %s782
        %p784 = scmp.lt.s32.totalorder %s40, 1
        %s785 = scalar_select %p784, %s40, 1
        %s786 = smul.addr %s785, 2
        %s787 = smul.addr %s786, 8
        %s788 = scalar_lea.vmem %s4, %s787
        %p789 = scmp.lt.s32.totalorder %s40, 1
        %s790 = scalar_select %p789, %s40, 1
        %s791 = smul.addr %s790, 2
        %s792 = smul.addr %s791, 8
        %s793 = scalar_lea.vmem %s5, %s792
        %p794 = scmp.lt.s32.totalorder %s40, 1
        %s795 = scalar_select %p794, %s40, 1
        %s796 = smul.addr %s795, 2
        %s797 = smul.addr %s796, 8
        %s798 = scalar_lea.vmem %s6, %s797
        %p799 = scmp.lt.s32.totalorder %s40, 1
        %s800 = scalar_select %p799, %s40, 1
        %s801 = smul.addr %s800, 2
        %s802 = smul.addr %s801, 8
        %s803 = scalar_lea.vmem %s7, %s802
        %p804 = scmp.lt.s32.totalorder %s40, 1
        %s805 = scalar_select %p804, %s40, 1
        %s806 = smul.addr %s805, 2
        %s807 = smul.addr %s806, 8
        %s808 = scalar_lea.vmem %s8, %s807
        %p809 = scmp.lt.s32.totalorder %s40, 1
        %s810 = scalar_select %p809, %s40, 1
        %s811 = smul.addr %s810, 2
        %s812 = smul.addr %s811, 8
        %s813 = scalar_lea.vmem %s9, %s812
        %p814 = scmp.lt.s32.totalorder %s40, 1
        %s815 = scalar_select %p814, %s40, 1
        %s816 = scalar_lea.vmem %s10, %s815
        %p817 = scmp.lt.s32.totalorder %s40, 1
        %s818 = scalar_select %p817, %s40, 1
        %s819 = smul.addr %s818, 2
        %s820 = smul.addr %s819, 8
        %s821 = scalar_lea.vmem %s12, %s820
        %p822 = scmp.lt.s32.totalorder %s40, 1
        %s823 = scalar_select %p822, %s40, 1
        %s824 = smul.addr %s823, 2
        %s825 = smul.addr %s824, 8
        %s826 = scalar_lea.vmem %s13, %s825
        %s827 = sld [smem:[#allocation2]]
        %v828 = vld [vmem:[%s816] sm:$0x1]
        %v829 = vld [vmem:[%s768] sm:$0xff]
        %v830 = vld [vmem:[%s768 + $0x8] sm:$0xff]
        %v831 = vld [vmem:[%s768 + $0x10] sm:$0xff]
        %v832 = vld [vmem:[%s768 + $0x18] sm:$0xff]
        %v833 = vld [vmem:[%s768 + $0x20] sm:$0xff]
        %v834 = vld [vmem:[%s768 + $0x28] sm:$0xff]
        %v835 = vld [vmem:[%s768 + $0x30] sm:$0xff]
        %v836 = vld [vmem:[%s768 + $0x38] sm:$0xff]
        %v837 = vld [vmem:[%s773] sm:$0xff]
        %v838 = vld [vmem:[%s773 + $0x8] sm:$0xff]
        %v839 = vld [vmem:[%s773 + $0x10] sm:$0xff]
        %v840 = vld [vmem:[%s773 + $0x18] sm:$0xff]
        %v841 = vld [vmem:[%s773 + $0x20] sm:$0xff]
        %v842 = vld [vmem:[%s773 + $0x28] sm:$0xff]
        %v843 = vld [vmem:[%s773 + $0x30] sm:$0xff]
        %v844 = vld [vmem:[%s773 + $0x38] sm:$0xff]
        %v845 = vld [vmem:[%s778] sm:$0xff]
        %v846 = vld [vmem:[%s778 + $0x8] sm:$0xff]
        %v847 = vld [vmem:[%s778 + $0x10] sm:$0xff]
        %v848 = vld [vmem:[%s778 + $0x18] sm:$0xff]
        %v849 = vld [vmem:[%s778 + $0x20] sm:$0xff]
        %v850 = vld [vmem:[%s778 + $0x28] sm:$0xff]
        %v851 = vld [vmem:[%s778 + $0x30] sm:$0xff]
        %v852 = vld [vmem:[%s778 + $0x38] sm:$0xff]
        %v853 = vld [vmem:[%s783] sm:$0xff]
        %v854 = vld [vmem:[%s783 + $0x8] sm:$0xff]
        %v855 = vld [vmem:[%s783 + $0x10] sm:$0xff]
        %v856 = vld [vmem:[%s783 + $0x18] sm:$0xff]
        %v857 = vld [vmem:[%s783 + $0x20] sm:$0xff]
        %v858 = vld [vmem:[%s783 + $0x28] sm:$0xff]
        %v859 = vld [vmem:[%s783 + $0x30] sm:$0xff]
        %v860 = vld [vmem:[%s783 + $0x38] sm:$0xff]
        %v861 = vld [vmem:[%s788] sm:$0xff]
        %v862 = vld [vmem:[%s788 + $0x8] sm:$0xff]
        %v863 = vld [vmem:[%s793] sm:$0xff]
        %v864 = vld [vmem:[%s793 + $0x8] sm:$0xff]
        %v865 = vmul.f32 %v829, %v845
        %v866 = vmul.f32 %v830, %v846
        %v867 = vmul.f32 %v831, %v847
        %v868 = vmul.f32 %v832, %v848
        %v869 = vmul.f32 %v833, %v849
        %v870 = vmul.f32 %v834, %v850
        %v871 = vmul.f32 %v835, %v851
        %v872 = vmul.f32 %v836, %v852
        %v873 = vmul.f32 %v837, %v853
        %v874 = vmul.f32 %v838, %v854
        %v875 = vmul.f32 %v839, %v855
        %v876 = vmul.f32 %v840, %v856
        %v877 = vmul.f32 %v841, %v857
        %v878 = vmul.f32 %v842, %v858
        %v879 = vmul.f32 %v843, %v859
        %v880 = vmul.f32 %v844, %v860
        %v881 = vadd.f32 %v865, %v873
        %v882 = vadd.f32 %v866, %v874
        %v883 = vadd.f32 %v867, %v875
        %v884 = vadd.f32 %v868, %v876
        %v885 = vadd.f32 %v869, %v877
        %v886 = vadd.f32 %v870, %v878
        %v887 = vadd.f32 %v871, %v879
        %v888 = vadd.f32 %v872, %v880
        %vm889 = vcmask 130048
        %v890 = vsel %vm889, %v881, 0.0
        %v891 = vsel %vm889, %v883, 0.0
        %v892 = vadd.f32 %v890, %v891
        %v893 = vsel %vm889, %v885, 0.0
        %v894 = vadd.f32 %v892, %v893
        %v895 = vsel %vm889, %v887, 0.0
        %v896 = vadd.f32 %v894, %v895
        %v897 = vsel %vm889, %v882, 0.0
        %v898 = vsel %vm889, %v884, 0.0
        %v899 = vadd.f32 %v897, %v898
        %v900 = vsel %vm889, %v886, 0.0
        %v901 = vadd.f32 %v899, %v900
        %v902 = vsel %vm889, %v888, 0.0
        %v903 = vadd.f32 %v901, %v902
        %v904 = vstv %s827
        %v905 = vmul.f32 %v904, %v861
        %v906 = vmul.f32 %v904, %v862
        %v907 = vadd.f32 %v896, %v905
        %v908 = vadd.f32 %v903, %v906
        %v909 = vmul.f32 %v829, %v853
        %v910 = vmul.f32 %v830, %v854
        %v911 = vmul.f32 %v831, %v855
        %v912 = vmul.f32 %v832, %v856
        %v913 = vmul.f32 %v833, %v857
        %v914 = vmul.f32 %v834, %v858
        %v915 = vmul.f32 %v835, %v859
        %v916 = vmul.f32 %v836, %v860
        %v917 = vmul.f32 %v837, %v845
        %v918 = vmul.f32 %v838, %v846
        %v919 = vmul.f32 %v839, %v847
        %v920 = vmul.f32 %v840, %v848
        %v921 = vmul.f32 %v841, %v849
        %v922 = vmul.f32 %v842, %v850
        %v923 = vmul.f32 %v843, %v851
        %v924 = vmul.f32 %v844, %v852
        %v925 = vsub.f32 %v909, %v917
        %v926 = vsub.f32 %v910, %v918
        %v927 = vsub.f32 %v911, %v919
        %v928 = vsub.f32 %v912, %v920
        %v929 = vsub.f32 %v913, %v921
        %v930 = vsub.f32 %v914, %v922
        %v931 = vsub.f32 %v915, %v923
        %v932 = vsub.f32 %v916, %v924
        %v933 = vsel %vm889, %v925, 0.0
        %v934 = vsel %vm889, %v927, 0.0
        %v935 = vadd.f32 %v933, %v934
        %v936 = vsel %vm889, %v929, 0.0
        %v937 = vadd.f32 %v935, %v936
        %v938 = vsel %vm889, %v931, 0.0
        %v939 = vadd.f32 %v937, %v938
        %v940 = vsel %vm889, %v926, 0.0
        %v941 = vsel %vm889, %v928, 0.0
        %v942 = vadd.f32 %v940, %v941
        %v943 = vsel %vm889, %v930, 0.0
        %v944 = vadd.f32 %v942, %v943
        %v945 = vsel %vm889, %v932, 0.0
        %v946 = vadd.f32 %v944, %v945
        %v947 = vmul.f32 %v904, %v863
        %v948 = vmul.f32 %v904, %v864
        %v949 = vadd.f32 %v939, %v947
        %v950 = vadd.f32 %v946, %v948
        %v951 = vmul.f32 %v861, %v907
        %v952 = vmul.f32 %v862, %v908
        %v953 = vmul.f32 %v863, %v949
        %v954 = vmul.f32 %v864, %v950
        %v955 = vadd.f32 %v951, %v953
        %v956 = vadd.f32 %v952, %v954
        %v957 = vsel %vm889, %v955, 0.0
        %v958 = vsel %vm889, %v956, 0.0
        %v959 = vadd.f32 %v957, %v958
        %960 = vadd.xlane.f32.xlu0 %v959
        %v961 = vpop.xlane.xlu0 %960
        %v962 = vrot.slane %v961, 4
        %v963 = vadd.f32 %v961, %v962
        %v964 = vrot.slane %v963, 2
        %v965 = vadd.f32 %v963, %v964
        %v966 = vrot.slane %v965, 1
        %v967 = vadd.f32 %v965, %v966
        %s968 = vtos %v967
        %v969 = vstv %s968
        %v970 = vrcp.pop %v969
        %v971 = vmul.f32 %v828, %v970
        %v972 = vld [vmem:[%s798] sm:$0xff]
        %v973 = vld [vmem:[%s798 + $0x8] sm:$0xff]
        %v975 = vlaneseq
        %v976 = vshrl.u32 %v975, 7
        %v977 = vsub.s32 0, %v976
        %v978 = vrot.slane %v971, %v977
        %979 = vset.pattern.permute.xlu0 0
        %980 = vperm.xlu0 %979, %v978
        %v981 = vpop.permute.xlu0 %980
        %v983 = vmul.f32 %v981, %v861
        %v984 = vmul.f32 %v981, %v862
        %v985 = vadd.f32 %v972, %v983
        %v986 = vadd.f32 %v973, %v984
        %v987 = vld [vmem:[%s803] sm:$0xff]
        %v988 = vld [vmem:[%s803 + $0x8] sm:$0xff]
        %v989 = vmul.f32 %v981, %v863
        %v990 = vmul.f32 %v981, %v864
        %v991 = vadd.f32 %v987, %v989
        %v992 = vadd.f32 %v988, %v990
        %v993 = vld [vmem:[%s808] sm:$0xff]
        %v994 = vld [vmem:[%s808 + $0x8] sm:$0xff]
        %v995 = vmul.f32 %v981, %v907
        %v996 = vmul.f32 %v981, %v908
        %v997 = vsub.f32 %v993, %v995
        %v998 = vsub.f32 %v994, %v996
        %v999 = vld [vmem:[%s813] sm:$0xff]
        %v1000 = vld [vmem:[%s813 + $0x8] sm:$0xff]
        %v1001 = vmul.f32 %v981, %v949
        %v1002 = vmul.f32 %v981, %v950
        %v1003 = vsub.f32 %v999, %v1001
        %v1004 = vsub.f32 %v1000, %v1002
        %v1005 = vmul.f32 %v997, %v997
        %v1006 = vmul.f32 %v998, %v998
        %v1007 = vmul.f32 %v1003, %v1003
        %v1008 = vmul.f32 %v1004, %v1004
        %v1009 = vadd.f32 %v1005, %v1007
        %v1010 = vadd.f32 %v1006, %v1008
        %v1011 = vsel %vm889, %v1009, 0.0
        %v1012 = vsel %vm889, %v1010, 0.0
        %v1013 = vadd.f32 %v1011, %v1012
        %1014 = vadd.xlane.f32.xlu0 %v1013
        %v1015 = vpop.xlane.xlu0 %1014
        %v1016 = vrot.slane %v1015, 4
        %v1017 = vadd.f32 %v1015, %v1016
        %v1018 = vrot.slane %v1017, 2
        %v1019 = vadd.f32 %v1017, %v1018
        %v1020 = vrot.slane %v1019, 1
        %v1021 = vadd.f32 %v1019, %v1020
        %s1022 = vtos %v1021
        %v1023 = vstv %s1022
        %v1024 = vrcp.pop %v828
        %v1025 = vmul.f32 %v1023, %v1024
        %1026 = vst.msk [vmem:[%s821] sm:$0xff] %vm889, %v985
        %1027 = vst.msk [vmem:[%s821 + $0x8] sm:$0xff] %vm889, %v986
        %1028 = vst.msk [vmem:[%s826] sm:$0xff] %vm889, %v991
        %1029 = vst.msk [vmem:[%s826 + $0x8] sm:$0xff] %vm889, %v992
        %1030 = vst.msk [vmem:[%s736] sm:$0xff] %vm889, %v997
        %1031 = vst.msk [vmem:[%s736 + $0x8] sm:$0xff] %vm889, %v998
        %1032 = vst.msk [vmem:[%s743] sm:$0xff] %vm889, %v1003
        %1033 = vst.msk [vmem:[%s743 + $0x8] sm:$0xff] %vm889, %v1004
        %v1035 = vlaneseq
        %v1036 = vshrl.u32 %v1035, 7
        %v1037 = vsub.s32 0, %v1036
        %v1038 = vrot.slane %v1025, %v1037
        %1039 = vset.pattern.permute.xlu0 0
        %1040 = vperm.xlu0 %1039, %v1038
        %v1041 = vpop.permute.xlu0 %1040
        %v1043 = vmul.f32 %v1041, %v861
        %v1044 = vmul.f32 %v1041, %v862
        %v1045 = vadd.f32 %v997, %v1043
        %v1046 = vadd.f32 %v998, %v1044
        %1047 = vst.msk [vmem:[%s750] sm:$0xff] %vm889, %v1045
        %1048 = vst.msk [vmem:[%s750 + $0x8] sm:$0xff] %vm889, %v1046
        %v1049 = vmul.f32 %v1041, %v863
        %v1050 = vmul.f32 %v1041, %v864
        %v1051 = vadd.f32 %v1003, %v1049
        %v1052 = vadd.f32 %v1004, %v1050
        %1053 = vst.msk [vmem:[%s757] sm:$0xff] %vm889, %v1051
        %1054 = vst.msk [vmem:[%s757 + $0x8] sm:$0xff] %vm889, %v1052
        %vm1055 = vcmask 0
        %1056 = vst.msk [vmem:[%s763] sm:$0x1] %vm1055, %v1023
        %p1057 = scmp.lt.s32.totalorder %s40, 1
        %s1058 = scalar_select %p1057, %s40, 1
        %s1059 = smul.addr %s1058, 2
        %s1060 = smul.addr %s1059, 8
        %s1061 = scalar_lea.vmem %s12, %s1060
        %p1062 = scmp.lt.s32.totalorder %s40, 1
        %s1063 = scalar_select %p1062, %s40, 1
        %s1064 = smul.addr %s1063, 2
        %s1065 = smul.addr %s1064, 8
        %s1066 = scalar_lea.vmem %s13, %s1065
        %s1067 = sand.u32 %s407, 1
        %s1068 = scalar_lea.sflag [#allocation4], %s1067
        %s1069 = sand.u32 %s407, 1
        %s1070 = smul.addr %s1069, 16
        %s1071 = scalar_lea.vmem [#allocation3], %s1070
        %s1072 = sand.u32 %s40, 1
        %s1073 = scalar_lea.sflag [#allocation6], %s1072
        %s1074 = sand.u32 %s433, 1
        %s1075 = smul.addr %s1074, 16
        %s1076 = scalar_lea.vmem [#allocation5], %s1075
        %s1077 = sand.u32 %s40, 1
        %s1078 = scalar_lea.sflag [#allocation6], %s1077
        %s1079 = sand.u32 %s459, 1
        %s1080 = smul.addr %s1079, 16
        %s1081 = scalar_lea.vmem [#allocation7], %s1080
        %s1082 = sand.u32 %s40, 1
        %s1083 = scalar_lea.sflag [#allocation9], %s1082
        %s1084 = sand.u32 %s485, 1
        %s1085 = smul.addr %s1084, 16
        %s1086 = scalar_lea.vmem [#allocation8], %s1085
        %s1087 = sand.u32 %s40, 1
        %s1088 = scalar_lea.sflag [#allocation9], %s1087
        %s1089 = sand.u32 %s511, 1
        %s1090 = scalar_lea.vmem [#allocation10], %s1089
        // Predicated region
        $region69: #{conjugated_grad_forward.61} parent=67 // pred_check
          %p1091 = pneg %p365
        $region70: #{conjugated_grad_forward.61} parent=67 // pred_check_branch
          %1093 = sbr.rel (%p1091) target = $region72
        $region71: #{conjugated_grad_forward.61} parent=67 // pred_region
          _
        $region72: #{conjugated_grad_forward.61} parent=67 // pred_fallthru
          _
        // Predicated region
        $region73: #{conjugated_grad_forward.61} parent=67 // pred_check
          %p1094 = pneg %p391
        $region74: #{conjugated_grad_forward.61} parent=67 // pred_check_branch
          %1096 = sbr.rel (%p1094) target = $region76
        $region75: #{conjugated_grad_forward.61} parent=67 // pred_region
          _
        $region76: #{conjugated_grad_forward.61} parent=67 // pred_fallthru
          _
        // Predicated region
        $region77: #{conjugated_grad_forward.61} parent=67 // pred_check
          %p1097 = pneg %p417
        $region78: #{conjugated_grad_forward.61} parent=67 // pred_check_branch
          %1099 = sbr.rel (%p1097) target = $region80
        $region79: #{conjugated_grad_forward.61} parent=67 // pred_region
          %s1101 = ssub.s32 256, 256
          %1102 = vsyncadd %s1068, %s1101
          %s1103 = smul.addr %s40, 2
          %s1104 = smul.addr %s1103, 128
          %s1105 = scalar_lea.hbm %s14, %s1104
          %s1106 = sshll.u32 %s1071, 4
          %s1107 = int_to_ptr.vmem [resolvable:$true] %s1106
          %1112 = dma.vmem_to_hbm [thread:$0]  %s1107, 256, %s1105, %s1068, 128, 128, 8
        $region80: #{conjugated_grad_forward.61} parent=67 // pred_fallthru
          _
        // Predicated region
        $region81: #{conjugated_grad_forward.61} parent=67 // pred_check
          %p1113 = pneg %p443
        $region82: #{conjugated_grad_forward.61} parent=67 // pred_check_branch
          %1115 = sbr.rel (%p1113) target = $region84
        $region83: #{conjugated_grad_forward.61} parent=67 // pred_region
          %s1117 = ssub.s32 256, 256
          %1118 = vsyncadd %s1073, %s1117
          %s1119 = smul.addr %s40, 2
          %s1120 = smul.addr %s1119, 128
          %s1121 = scalar_lea.hbm %s15, %s1120
          %s1122 = sshll.u32 %s1076, 4
          %s1123 = int_to_ptr.vmem [resolvable:$true] %s1122
          %1128 = dma.vmem_to_hbm [thread:$0]  %s1123, 256, %s1121, %s1073, 128, 128, 8
        $region84: #{conjugated_grad_forward.61} parent=67 // pred_fallthru
          _
        // Predicated region
        $region85: #{conjugated_grad_forward.61} parent=67 // pred_check
          %p1129 = pneg %p469
        $region86: #{conjugated_grad_forward.61} parent=67 // pred_check_branch
          %1131 = sbr.rel (%p1129) target = $region88
        $region87: #{conjugated_grad_forward.61} parent=67 // pred_region
          %s1133 = ssub.s32 256, 256
          %1134 = vsyncadd %s1078, %s1133
          %s1135 = smul.addr %s40, 2
          %s1136 = smul.addr %s1135, 128
          %s1137 = scalar_lea.hbm %s16, %s1136
          %s1138 = sshll.u32 %s1081, 4
          %s1139 = int_to_ptr.vmem [resolvable:$true] %s1138
          %1144 = dma.vmem_to_hbm [thread:$0]  %s1139, 256, %s1137, %s1078, 128, 128, 8
        $region88: #{conjugated_grad_forward.61} parent=67 // pred_fallthru
          _
        // Predicated region
        $region89: #{conjugated_grad_forward.61} parent=67 // pred_check
          %p1145 = pneg %p495
        $region90: #{conjugated_grad_forward.61} parent=67 // pred_check_branch
          %1147 = sbr.rel (%p1145) target = $region92
        $region91: #{conjugated_grad_forward.61} parent=67 // pred_region
          %s1149 = ssub.s32 256, 256
          %1150 = vsyncadd %s1083, %s1149
          %s1151 = smul.addr %s40, 2
          %s1152 = smul.addr %s1151, 128
          %s1153 = scalar_lea.hbm %s17, %s1152
          %s1154 = sshll.u32 %s1086, 4
          %s1155 = int_to_ptr.vmem [resolvable:$true] %s1154
          %1160 = dma.vmem_to_hbm [thread:$0]  %s1155, 256, %s1153, %s1083, 128, 128, 8
        $region92: #{conjugated_grad_forward.61} parent=67 // pred_fallthru
          _
        // Predicated region
        $region93: #{conjugated_grad_forward.61} parent=67 // pred_check
          %p1161 = pneg %p521
        $region94: #{conjugated_grad_forward.61} parent=67 // pred_check_branch
          %1163 = sbr.rel (%p1161) target = $region96
        $region95: #{conjugated_grad_forward.61} parent=67 // pred_region
          %s1165 = ssub.s32 16, 16
          %1166 = vsyncadd %s1088, %s1165
          %s1167 = smul.addr %s40, 16
          %s1168 = scalar_lea.hbm %s18, %s1167
          %s1170 = sshll.u32 %s1090, 4
          %s1171 = int_to_ptr.vmem [resolvable:$true] %s1170
          %1173 = dma.vmem_to_hbm [thread:$0]  %s1171, 16, %s1168, %s1088
        $region96: #{conjugated_grad_forward.61} parent=67 // pred_fallthru
          _
      $region68: #{conjugated_grad_forward.61} parent=5 // pred_fallthru
        _
      %p1174 = scmp.le.s32.totalorder 2, %s35
      // Predicated region
      $region97: #{conjugated_grad_forward.61} parent=5 // pred_check
        %p1175 = pneg %p1174
      $region98: #{conjugated_grad_forward.61} parent=5 // pred_check_branch
        %1177 = sbr.rel (%p1175) target = $region100
      $region99: #{conjugated_grad_forward.61} parent=5 // pred_region
        %s1178 = ssub.s32 %s35, 2
        // Predicated region
        $region101: #{conjugated_grad_forward.61} parent=99 // pred_check
          %p1179 = pneg %p371
        $region102: #{conjugated_grad_forward.61} parent=99 // pred_check_branch
          %1181 = sbr.rel (%p1179) target = $region104
        $region103: #{conjugated_grad_forward.61} parent=99 // pred_region
          %p1182 = scmp.lt.s32.totalorder %s41, 1
          %s1183 = scalar_select %p1182, %s41, 1
          %s1184 = smul.addr %s1183, 2
          %s1185 = smul.addr %s1184, 8
          %s1186 = scalar_lea.vmem %s12, %s1185
        $region104: #{conjugated_grad_forward.61} parent=99 // pred_fallthru
          _
        // Predicated region
        $region105: #{conjugated_grad_forward.61} parent=99 // pred_check
          %p1187 = pneg %p397
        $region106: #{conjugated_grad_forward.61} parent=99 // pred_check_branch
          %1189 = sbr.rel (%p1187) target = $region108
        $region107: #{conjugated_grad_forward.61} parent=99 // pred_region
          %p1190 = scmp.lt.s32.totalorder %s41, 1
          %s1191 = scalar_select %p1190, %s41, 1
          %s1192 = smul.addr %s1191, 2
          %s1193 = smul.addr %s1192, 8
          %s1194 = scalar_lea.vmem %s13, %s1193
        $region108: #{conjugated_grad_forward.61} parent=99 // pred_fallthru
          _
        // Predicated region
        $region109: #{conjugated_grad_forward.61} parent=99 // pred_check
          %p1195 = pneg %p423
        $region110: #{conjugated_grad_forward.61} parent=99 // pred_check_branch
          %1197 = sbr.rel (%p1195) target = $region112
        $region111: #{conjugated_grad_forward.61} parent=99 // pred_region
          %s1198 = sand.u32 %s408, 1
          %s1199 = scalar_lea.sflag [#allocation4], %s1198
          %s1200 = sand.u32 %s408, 1
          %s1201 = smul.addr %s1200, 16
          %s1202 = scalar_lea.vmem [#allocation3], %s1201
          %1203 = dma.done %s1199, 256
        $region112: #{conjugated_grad_forward.61} parent=99 // pred_fallthru
          _
        // Predicated region
        $region113: #{conjugated_grad_forward.61} parent=99 // pred_check
          %p1204 = pneg %p449
        $region114: #{conjugated_grad_forward.61} parent=99 // pred_check_branch
          %1206 = sbr.rel (%p1204) target = $region116
        $region115: #{conjugated_grad_forward.61} parent=99 // pred_region
          %s1207 = sand.u32 %s41, 1
          %s1208 = scalar_lea.sflag [#allocation6], %s1207
          %s1209 = sand.u32 %s434, 1
          %s1210 = smul.addr %s1209, 16
          %s1211 = scalar_lea.vmem [#allocation5], %s1210
          %1212 = dma.done %s1208, 256
        $region116: #{conjugated_grad_forward.61} parent=99 // pred_fallthru
          _
        // Predicated region
        $region117: #{conjugated_grad_forward.61} parent=99 // pred_check
          %p1213 = pneg %p475
        $region118: #{conjugated_grad_forward.61} parent=99 // pred_check_branch
          %1215 = sbr.rel (%p1213) target = $region120
        $region119: #{conjugated_grad_forward.61} parent=99 // pred_region
          %s1216 = sand.u32 %s41, 1
          %s1217 = scalar_lea.sflag [#allocation6], %s1216
          %s1218 = sand.u32 %s460, 1
          %s1219 = smul.addr %s1218, 16
          %s1220 = scalar_lea.vmem [#allocation7], %s1219
          %1221 = dma.done %s1217, 256
        $region120: #{conjugated_grad_forward.61} parent=99 // pred_fallthru
          _
        // Predicated region
        $region121: #{conjugated_grad_forward.61} parent=99 // pred_check
          %p1222 = pneg %p501
        $region122: #{conjugated_grad_forward.61} parent=99 // pred_check_branch
          %1224 = sbr.rel (%p1222) target = $region124
        $region123: #{conjugated_grad_forward.61} parent=99 // pred_region
          %s1225 = sand.u32 %s41, 1
          %s1226 = scalar_lea.sflag [#allocation9], %s1225
          %s1227 = sand.u32 %s486, 1
          %s1228 = smul.addr %s1227, 16
          %s1229 = scalar_lea.vmem [#allocation8], %s1228
          %1230 = dma.done %s1226, 256
        $region124: #{conjugated_grad_forward.61} parent=99 // pred_fallthru
          _
        // Predicated region
        $region125: #{conjugated_grad_forward.61} parent=99 // pred_check
          %p1231 = pneg %p527
        $region126: #{conjugated_grad_forward.61} parent=99 // pred_check_branch
          %1233 = sbr.rel (%p1231) target = $region128
        $region127: #{conjugated_grad_forward.61} parent=99 // pred_region
          %s1234 = sand.u32 %s41, 1
          %s1235 = scalar_lea.sflag [#allocation9], %s1234
          %s1236 = sand.u32 %s512, 1
          %s1237 = scalar_lea.vmem [#allocation10], %s1236
          %1238 = dma.done %s1235, 16
        $region128: #{conjugated_grad_forward.61} parent=99 // pred_fallthru
          _
      $region100: #{conjugated_grad_forward.61} parent=5 // pred_fallthru
        _
    $region6: #{conjugated_grad_forward.61} parent=1 // loop_footer
      %s39 = sadd.s32 1, %s35
    $region7: #{conjugated_grad_forward.61} parent=1 // loop_footer_branch
      %34 = sbr.rel target = $region3
    $region8: #{conjugated_grad_forward.61} parent=1 // loop_exit
      _
    %1239 = vsyncpa [#allocation4], 1
    %s1240 = scalar_lea.sflag [#allocation4], 1
    %1241 = vsyncpa %s1240, 1
    %1242 = vsyncpa [#allocation6], 1
    %s1243 = scalar_lea.sflag [#allocation6], 1
    %1244 = vsyncpa %s1243, 1
    %1245 = vsyncpa [#allocation9], 1
    %s1246 = scalar_lea.sflag [#allocation9], 1
    %1247 = vsyncpa %s1246, 1

</llo_original>
